<compile_context>
chip_gen: v7x
topology: tpu7x:2x2x1
jax: 0.10.0
libtpu: 0.0.40
codegen_flags: <defaults>
</compile_context>

<pallas_src>
import functools

import jax
import jax.numpy as jnp
from jax.experimental import pallas as pl
from jax.experimental.pallas import tpu as pltpu

_EPS = 1e-5


def _round_up(x, m):
    return (x + m - 1) // m * m


def _pick_tile(total, max_tile):
    """Largest 128-multiple divisor of `total` that is <= max_tile, else `total`."""
    if total <= max_tile:
        return total
    t = (max_tile // 128) * 128
    while t >= 128:
        if total % t == 0:
            return t
        t -= 128
    return total


def _tpu_budget():
    """(vmem_limit_bytes, max spatial tile) derived from the chip's VMEM capacity."""
    try:
        cap = int(pltpu.get_tpu_info().vmem_capacity_bytes)
    except Exception:
        cap = 64 * 1024 * 1024                     # conservative (v7x-sized) fallback
    vmem_limit = min(96 * 1024 * 1024, (cap * 3) // 4)   # 48 MiB v7x, 96 MiB v5e/v6e
    max_tp = 4096 if cap >= 100 * 1024 * 1024 else 2048
    return int(vmem_limit), int(max_tp)


_VMEM_LIMIT, _MAX_TP = _tpu_budget()


# ------------------------------------------------------------------ kernels

def _conv_moments_kernel(w_ref, cols_ref, y_ref, pm_ref, *, tk):
    """Conv matmul tile; accumulates into f32 output block across K; at k==last
    emits per-tile (sum, sumsq) moments for InstanceNorm.  No bias (norm='in')."""
    k = pl.program_id(2)

    @pl.when(k == 0)
    def _():
        y_ref[...] = jnp.zeros_like(y_ref)

    off = pl.multiple_of(k * tk, tk)
    y_ref[...] += jnp.dot(w_ref[:, pl.ds(off, tk)], cols_ref[...],
                          preferred_element_type=jnp.float32)

    @pl.when(k == pl.num_programs(2) - 1)
    def _():
        y = y_ref[...]
        pm_ref[:, 0:1] = jnp.sum(y, axis=-1, keepdims=True)
        pm_ref[:, 1:2] = jnp.sum(y * y, axis=-1, keepdims=True)


def _conv_bias_act_kernel(w_ref, b_ref, cols_ref, *rest, tk, activation, n_add):
    """Conv matmul tile for norm='none': bias + activation (+adds) fused at k==last."""
    add_refs = rest[:n_add]
    out_ref = rest[n_add]
    k = pl.program_id(2)

    @pl.when(k == 0)
    def _():
        out_ref[...] = jnp.zeros_like(out_ref)

    off = pl.multiple_of(k * tk, tk)
    out_ref[...] += jnp.dot(w_ref[:, pl.ds(off, tk)], cols_ref[...],
                            preferred_element_type=jnp.float32)

    @pl.when(k == pl.num_programs(2) - 1)
    def _():
        y = out_ref[...] + b_ref[...]
        if activation == "relu":
            y = jnp.maximum(y, 0.0)
        elif activation == "tanh":
            y = jnp.tanh(y)
        for a in add_refs:
            y = y + a[...].astype(jnp.float32)
        out_ref[...] = y.astype(out_ref.dtype)


def _in_act_add_kernel(y_ref, mom_ref, *rest, inv_p, activation, n_add, eps):
    """InstanceNorm (global-P moments) + activation + fused residual/noise adds."""
    add_refs = rest[:n_add]
    out_ref = rest[n_add]

    mean = mom_ref[:, 0:1] * inv_p
    var = jnp.maximum(mom_ref[:, 1:2] * inv_p - mean * mean, 0.0)  # clamp: E[x^2]-E[x]^2
    y = (y_ref[...] - mean) * jax.lax.rsqrt(var + eps)
    if activation == "relu":
        y = jnp.maximum(y, 0.0)
    elif activation == "tanh":
        y = jnp.tanh(y)
    for a in add_refs:
        y = y + a[...].astype(jnp.float32)
    out_ref[...] = y.astype(out_ref.dtype)


# ------------------------------------------------------------------ pallas_call wrappers

def _conv_matmul_in(w2, cols):
    """w2: (Cout, K_pad) bf16, cols: (N, K_pad, P) bf16.
    Returns y_raw (N, Cout, P) f32 and moments (N, Cout, 2) f32 (sum, sumsq over P)."""
    N, K_pad, P = cols.shape
    Cout = w2.shape[0]
    tk = _pick_tile(K_pad, 512)
    tp = _pick_tile(P, _MAX_TP)
    nk = K_pad // tk
    npt = P // tp

    kern = functools.partial(_conv_moments_kernel, tk=tk)
    flops = 2 * N * Cout * K_pad * P
    bytes_accessed = (Cout * K_pad * 2 + N * K_pad * P * 2
                      + N * Cout * P * 4 + N * npt * Cout * 2 * 4)

    grid_spec = pltpu.PrefetchScalarGridSpec(
        num_scalar_prefetch=0,
        grid=(N, npt, nk),
        in_specs=[
            pl.BlockSpec((Cout, K_pad), lambda n, p, k: (0, 0)),       # weight resident
            pl.BlockSpec((None, tk, tp), lambda n, p, k: (n, k, p)),
        ],
        out_specs=[
            pl.BlockSpec((None, Cout, tp), lambda n, p, k: (n, 0, p)),
            pl.BlockSpec((None, None, Cout, 2), lambda n, p, k: (n, p, 0, 0)),
        ],
    )
    y_raw, pm = pl.pallas_call(
        kern,
        out_shape=(jax.ShapeDtypeStruct((N, Cout, P), jnp.float32),
                   jax.ShapeDtypeStruct((N, npt, Cout, 2), jnp.float32)),
        grid_spec=grid_spec,
        compiler_params=pltpu.CompilerParams(
            dimension_semantics=("parallel", "parallel", "arbitrary"),
            vmem_limit_bytes=_VMEM_LIMIT),
        cost_estimate=pl.CostEstimate(flops=flops, transcendentals=0,
                                      bytes_accessed=bytes_accessed),
    )(w2, cols)
    moments = jnp.sum(pm, axis=1)          # tiny (N, Cout, 2) cross-P-tile reduction
    return y_raw, moments


def _in_epilogue(y_raw, moments, adds, activation):
    """InstanceNorm + activation (+adds) over the f32 conv result; bf16 out."""
    N, Cout, P = y_raw.shape
    tp = _pick_tile(P, _MAX_TP)
    npt = P // tp

    kern = functools.partial(_in_act_add_kernel, inv_p=1.0 / P,
                             activation=activation, n_add=len(adds), eps=_EPS)
    transcendentals = N * Cout * P if activation == "tanh" else N * npt * Cout
    bytes_accessed = (N * Cout * P * 4 + N * Cout * 2 * 4 + N * Cout * P * 2
                      + sum(int(a.size) * a.dtype.itemsize for a in adds))

    grid_spec = pltpu.PrefetchScalarGridSpec(
        num_scalar_prefetch=0,
        grid=(N, npt),
        in_specs=[pl.BlockSpec((None, Cout, tp), lambda n, p: (n, 0, p)),
                  pl.BlockSpec((None, Cout, 2), lambda n, p: (n, 0, 0))]
                 + [pl.BlockSpec((None, Cout, tp), lambda n, p: (n, 0, p))
                    for _ in adds],
        out_specs=pl.BlockSpec((None, Cout, tp), lambda n, p: (n, 0, p)),
    )
    return pl.pallas_call(
        kern,
        out_shape=jax.ShapeDtypeStruct((N, Cout, P), jnp.bfloat16),
        grid_spec=grid_spec,
        compiler_params=pltpu.CompilerParams(
            dimension_semantics=("parallel", "parallel"),
            vmem_limit_bytes=_VMEM_LIMIT),
        cost_estimate=pl.CostEstimate(flops=5 * N * Cout * P,
                                      transcendentals=transcendentals,
                                      bytes_accessed=bytes_accessed),
    )(y_raw, moments, *adds)


def _conv_bias_act(w2, bias, cols, adds, activation):
    """norm='none' path: conv + bias + activation (+adds) fully fused; f32 out."""
    N, K_pad, P = cols.shape
    Cout = w2.shape[0]
    tk = _pick_tile(K_pad, 512)
    tp = _pick_tile(P, _MAX_TP)
    nk = K_pad // tk
    npt = P // tp

    kern = functools.partial(_conv_bias_act_kernel, tk=tk, activation=activation,
                             n_add=len(adds))
    flops = 2 * N * Cout * K_pad * P
    transcendentals = N * Cout * P if activation == "tanh" else 0
    bytes_accessed = (Cout * K_pad * 2 + Cout * 4 + N * K_pad * P * 2
                      + N * Cout * P * 4
                      + sum(int(a.size) * a.dtype.itemsize for a in adds))

    grid_spec = pltpu.PrefetchScalarGridSpec(
        num_scalar_prefetch=0,
        grid=(N, npt, nk),
        in_specs=[pl.BlockSpec((Cout, K_pad), lambda n, p, k: (0, 0)),
                  pl.BlockSpec((Cout, 1), lambda n, p, k: (0, 0)),
                  pl.BlockSpec((None, tk, tp), lambda n, p, k: (n, k, p))]
                 + [pl.BlockSpec((None, Cout, tp), lambda n, p, k: (n, 0, p))
                    for _ in adds],
        out_specs=pl.BlockSpec((None, Cout, tp), lambda n, p, k: (n, 0, p)),
    )
    return pl.pallas_call(
        kern,
        out_shape=jax.ShapeDtypeStruct((N, Cout, P), jnp.float32),
        grid_spec=grid_spec,
        compiler_params=pltpu.CompilerParams(
            dimension_semantics=("parallel", "parallel", "arbitrary"),
            vmem_limit_bytes=_VMEM_LIMIT),
        cost_estimate=pl.CostEstimate(flops=flops, transcendentals=transcendentals,
                                      bytes_accessed=bytes_accessed),
    )(w2, bias, cols, *adds)


# ------------------------------------------------------------------ conv block (im2col + fused Pallas conv)

def conv2d_block(x, w, b, *, stride, pad, pad_type, norm, activation, adds=()):
    """Conv2dBlock: pad -> conv -> norm -> activation (+ fused adds).
    x: NCHW (f32/bf16), w: (Cout, Cin, KH, KW).  Returns bf16 for 'in' layers,
    f32 for the final norm='none' layer."""
    Cout, Cin, KH, KW = w.shape
    if pad > 0:
        mode = "reflect" if pad_type == "reflect" else "constant"
        x = jnp.pad(x, ((0, 0), (0, 0), (pad, pad), (pad, pad)), mode=mode)
    N, C, Hp, Wp = x.shape
    Ho = (Hp - KH) // stride + 1
    Wo = (Wp - KW) // stride + 1
    P = Ho * Wo
    K = C * KH * KW

    # im2col glue (layout only); K ordering (c, kh, kw) matches w.reshape below.
    # TODO(synk): move this into the kernel read path via manual DMA (pl.ANY).
    patches = []
    for i in range(KH):
        for j in range(KW):
            patches.append(x[:, :, i:i + stride * (Ho - 1) + 1:stride,
                                   j:j + stride * (Wo - 1) + 1:stride])
    cols = jnp.stack(patches, axis=2).reshape(N, K, P)

    K_pad = _round_up(K, 128)               # pad to 128 only (no 512-rounding waste)
    w2 = w.reshape(Cout, K)
    if K_pad != K:
        cols = jnp.pad(cols, ((0, 0), (0, K_pad - K), (0, 0)))
        w2 = jnp.pad(w2, ((0, 0), (0, K_pad - K)))

    cols = cols.astype(jnp.bfloat16)         # bf16 MXU inputs, f32 accumulation
    w2 = w2.astype(jnp.bfloat16)
    adds3 = tuple(a.reshape(a.shape[0], Cout, P) for a in adds)   # keep bf16/f32 as-is

    if norm == "in":
        # bias skipped: affine=False InstanceNorm's mean subtraction cancels it exactly.
        y_raw, moments = _conv_matmul_in(w2, cols)
        y = _in_epilogue(y_raw, moments, adds3, activation)       # bf16
    else:
        y = _conv_bias_act(w2, b.astype(jnp.float32).reshape(Cout, 1),
                           cols, adds3, activation)               # f32
    return y.reshape(N, Cout, Ho, Wo)


def res_block(x, p, pad_type, extra_adds=()):
    y = conv2d_block(x, p["w1"], p["b1"], stride=1, pad=1, pad_type=pad_type,
                     norm="in", activation="relu")
    # residual add (and optional noise add) fused into the second conv's IN epilogue
    return conv2d_block(y, p["w2"], p["b2"], stride=1, pad=1, pad_type=pad_type,
                        norm="in", activation="none",
                        adds=(x,) + tuple(extra_adds))


def upsample_nearest2x(x):
    # TODO(synk): fold the 2x nearest upsample into the next conv's im2col read path.
    return jnp.repeat(jnp.repeat(x, 2, axis=2), 2, axis=3)


# ------------------------------------------------------------------ parameter init

def conv_params(key, cin, cout, k):
    k1, k2 = jax.random.split(key)
    fan_in = cin * k * k
    w = jax.random.normal(k1, (cout, cin, k, k), jnp.float32) / jnp.sqrt(float(fan_in))
    b = 0.01 * jax.random.normal(k2, (cout,), jnp.float32)
    return w, b


def init_vae_params(key, input_dim, dim, n_downsample, n_res):
    keys = iter(jax.random.split(key, 64))
    params = {"enc": {}, "dec": {}}

    # ---- encoder
    d = dim
    params["enc"]["in"] = conv_params(next(keys), input_dim, d, 7)
    params["enc"]["down"] = []
    for _ in range(n_downsample):
        params["enc"]["down"].append(conv_params(next(keys), d, 2 * d, 4))
        d *= 2
    params["enc"]["res"] = []
    for _ in range(n_res):
        w1, b1 = conv_params(next(keys), d, d, 3)
        w2, b2 = conv_params(next(keys), d, d, 3)
        params["enc"]["res"].append({"w1": w1, "b1": b1, "w2": w2, "b2": b2})
    enc_output_dim = d

    # ---- decoder
    params["dec"]["res"] = []
    for _ in range(n_res):
        w1, b1 = conv_params(next(keys), d, d, 3)
        w2, b2 = conv_params(next(keys), d, d, 3)
        params["dec"]["res"].append({"w1": w1, "b1": b1, "w2": w2, "b2": b2})
    params["dec"]["up"] = []
    for _ in range(n_downsample):
        params["dec"]["up"].append(conv_params(next(keys), d, d // 2, 5))
        d //= 2
    params["dec"]["out"] = conv_params(next(keys), d, input_dim, 7)
    return params, enc_output_dim


# ------------------------------------------------------------------ VAE forward

def vae_forward(params, images, noise, pad_type="reflect"):
    # ---- encoder
    enc = params["enc"]
    w, b = enc["in"]
    h = conv2d_block(images, w, b, stride=1, pad=3, pad_type=pad_type,
                     norm="in", activation="relu")
    for (w, b) in enc["down"]:
        h = conv2d_block(h, w, b, stride=2, pad=1, pad_type=pad_type,
                         norm="in", activation="relu")
    n_res = len(enc["res"])
    for idx, rp in enumerate(enc["res"]):
        # fuse the `hiddens + noise` of encode() into the last resblock's epilogue
        extra = (noise,) if idx == n_res - 1 else ()
        h = res_block(h, rp, pad_type, extra_adds=extra)
    if n_res == 0:
        h = h + noise   # fallback when there is no resblock epilogue to fuse into

    # ---- decoder
    dec = params["dec"]
    for rp in dec["res"]:
        h = res_block(h, rp, pad_type)
    for (w, b) in dec["up"]:
        h = upsample_nearest2x(h)
        h = conv2d_block(h, w, b, stride=1, pad=2, pad_type=pad_type,
                         norm="in", activation="relu")
    w, b = dec["out"]
    return conv2d_block(h, w, b, stride=1, pad=3, pad_type=pad_type,
                        norm="none", activation="tanh")


# ------------------------------------------------------------------ main

if __name__ == "__main__":
    # config: dim=8, n_downsample=1, n_res=1, activ='relu', pad_type='reflect'
    batch, input_dim, spatial = 2, 3, 16
    dim, n_downsample, n_res = 8, 1, 1
    pad_type = "reflect"

    key = jax.random.PRNGKey(0)
    k_params, k_img, k_noise = jax.random.split(key, 3)

    params, enc_output_dim = init_vae_params(k_params, input_dim, dim, n_downsample, n_res)

    images = jax.random.normal(k_img, (batch, input_dim, spatial, spatial), jnp.float32)
    latent_spatial = spatial // (2 ** n_downsample)
    noise = jax.random.normal(
        k_noise, (batch, enc_output_dim, latent_spatial, latent_spatial), jnp.float32)

    fwd = jax.jit(functools.partial(vae_forward, pad_type=pad_type))
    recon = fwd(params, images, noise)
    recon = jax.block_until_ready(recon)

    assert recon.shape == images.shape, (recon.shape, images.shape)
    assert bool(jnp.all(jnp.isfinite(recon)))
    print("KERNEL_OK")
</pallas_src>

<mosaic_0001>
module attributes {stable_mosaic.version = 11 : i64} {
  func.func @_in_act_add_kernel(%arg0: i32, %arg1: i32, %arg2: memref<1x8x256xf32, #tpu.memory_space<vmem>>, %arg3: memref<1x8x2xf32, #tpu.memory_space<vmem>>, %arg4: memref<1x8x256xbf16, #tpu.memory_space<vmem>>) attributes {dimension_semantics = [#tpu.dimension_semantics<parallel>, #tpu.dimension_semantics<parallel>], iteration_bounds = array<i64: 2, 1>, scalar_prefetch = 0 : i64, scratch_operands = 0 : i64, tpu.core_type = #tpu.core_type<tc>, window_params = [{transform_indices = @transform_0, window_bounds = array<i64: 1, 8, 256>}, {transform_indices = @transform_1, window_bounds = array<i64: 1, 8, 2>}, {transform_indices = @transform_2, window_bounds = array<i64: 1, 8, 256>}]} {
    %c0 = arith.constant 0 : index
    %c0_0 = arith.constant 0 : index
    %c0_1 = arith.constant 0 : index
    %0 = vector.load %arg3[%c0, %c0_0, %c0_1] : memref<1x8x2xf32, #tpu.memory_space<vmem>>, vector<1x8x1xf32>
    %1 = vector.shape_cast %0 : vector<1x8x1xf32> to vector<8x1xf32>
    %cst = arith.constant 3.906250e-03 : f32
    %2 = vector.broadcast %cst : f32 to vector<8x1xf32>
    %3 = arith.mulf %1, %2 : vector<8x1xf32>
    %c0_2 = arith.constant 0 : index
    %c0_3 = arith.constant 0 : index
    %c1 = arith.constant 1 : index
    %4 = vector.load %arg3[%c0_2, %c0_3, %c1] : memref<1x8x2xf32, #tpu.memory_space<vmem>>, vector<1x8x1xf32>
    %5 = vector.shape_cast %4 : vector<1x8x1xf32> to vector<8x1xf32>
    %cst_4 = arith.constant 3.906250e-03 : f32
    %6 = vector.broadcast %cst_4 : f32 to vector<8x1xf32>
    %7 = arith.mulf %5, %6 : vector<8x1xf32>
    %8 = arith.mulf %3, %3 : vector<8x1xf32>
    %9 = arith.subf %7, %8 : vector<8x1xf32>
    %cst_5 = arith.constant 0.000000e+00 : f32
    %10 = vector.broadcast %cst_5 : f32 to vector<8x1xf32>
    %11 = arith.maximumf %9, %10 : vector<8x1xf32>
    %c0_6 = arith.constant 0 : index
    %c0_7 = arith.constant 0 : index
    %c0_8 = arith.constant 0 : index
    %12 = vector.load %arg2[%c0_6, %c0_7, %c0_8] : memref<1x8x256xf32, #tpu.memory_space<vmem>>, vector<1x8x256xf32>
    %13 = vector.shape_cast %12 : vector<1x8x256xf32> to vector<8x256xf32>
    %14 = vector.broadcast %3 : vector<8x1xf32> to vector<8x256xf32>
    %15 = arith.subf %13, %14 : vector<8x256xf32>
    %cst_9 = arith.constant 9.99999974E-6 : f32
    %16 = vector.broadcast %cst_9 : f32 to vector<8x1xf32>
    %17 = arith.addf %11, %16 : vector<8x1xf32>
    %18 = math.rsqrt %17 : vector<8x1xf32>
    %19 = vector.broadcast %18 : vector<8x1xf32> to vector<8x256xf32>
    %20 = arith.mulf %15, %19 : vector<8x256xf32>
    %cst_10 = arith.constant 0.000000e+00 : f32
    %21 = vector.broadcast %cst_10 : f32 to vector<8x256xf32>
    %22 = arith.maximumf %20, %21 : vector<8x256xf32>
    %23 = arith.truncf %22 : vector<8x256xf32> to vector<8x256xbf16>
    %c0_11 = arith.constant 0 : index
    %c0_12 = arith.constant 0 : index
    %c0_13 = arith.constant 0 : index
    %24 = vector.load %arg4[%c0_11, %c0_12, %c0_13] : memref<1x8x256xbf16, #tpu.memory_space<vmem>>, vector<1x8x256xbf16>
    %25 = vector.shape_cast %24 : vector<1x8x256xbf16> to vector<8x256xbf16>
    %26 = vector.shape_cast %23 : vector<8x256xbf16> to vector<1x8x256xbf16>
    tpu.vector_store %arg4[%c0_11, %c0_12, %c0_13], %26 {strides = array<i32>} : memref<1x8x256xbf16, #tpu.memory_space<vmem>>, vector<1x8x256xbf16>,
    return
  }
  func.func @transform_0(%arg0: i32, %arg1: i32) -> (i32, i32, i32) {
    %c0_i32 = arith.constant 0 : i32
    %c0_i32_0 = arith.constant 0 : i32
    return %arg0, %c0_i32, %arg1 : i32, i32, i32
  }
  func.func @transform_1(%arg0: i32, %arg1: i32) -> (i32, i32, i32) {
    %c0_i32 = arith.constant 0 : i32
    %c0_i32_0 = arith.constant 0 : i32
    %c0_i32_1 = arith.constant 0 : i32
    return %arg0, %c0_i32, %c0_i32_0 : i32, i32, i32
  }
  func.func @transform_2(%arg0: i32, %arg1: i32) -> (i32, i32, i32) {
    %c0_i32 = arith.constant 0 : i32
    %c0_i32_0 = arith.constant 0 : i32
    return %arg0, %c0_i32, %arg1 : i32, i32, i32
  }
}

module attributes {stable_mosaic.version = 11 : i64} {
  func.func @_conv_moments_kernel(%arg0: i32, %arg1: i32, %arg2: i32, %arg3: memref<8x256xbf16, #tpu.memory_space<vmem>>, %arg4: memref<1x256x256xbf16, #tpu.memory_space<vmem>>, %arg5: memref<1x8x256xf32, #tpu.memory_space<vmem>>, %arg6: memref<1x1x8x2xf32, #tpu.memory_space<vmem>>) attributes {dimension_semantics = [#tpu.dimension_semantics<parallel>, #tpu.dimension_semantics<parallel>, #tpu.dimension_semantics<arbitrary>], iteration_bounds = array<i64: 2, 1, 1>, scalar_prefetch = 0 : i64, scratch_operands = 0 : i64, tpu.core_type = #tpu.core_type<tc>, window_params = [{pipeline_mode = #tpu.pipeline_mode<synchronous>, transform_indices = @transform_0, window_bounds = array<i64: 8, 256>}, {transform_indices = @transform_1, window_bounds = array<i64: 1, 256, 256>}, {transform_indices = @transform_2, window_bounds = array<i64: 1, 8, 256>}, {transform_indices = @transform_3, window_bounds = array<i64: 1, 1, 8, 2>}]} {
    %c0_i32 = arith.constant 0 : i32
    %0 = arith.cmpi eq, %arg2, %c0_i32 : i32
    %1 = arith.extui %0 : i1 to i32
    %c0_i32_0 = arith.constant 0 : i32
    %2 = arith.cmpi ne, %1, %c0_i32_0 : i32
    scf.if %2 {
      %cst_12 = arith.constant 0.000000e+00 : f32
      %19 = vector.broadcast %cst_12 : f32 to vector<8x256xf32>
      %c0_13 = arith.constant 0 : index
      %c0_14 = arith.constant 0 : index
      %c0_15 = arith.constant 0 : index
      %20 = vector.load %arg5[%c0_13, %c0_14, %c0_15] : memref<1x8x256xf32, #tpu.memory_space<vmem>>, vector<1x8x256xf32>
      %21 = vector.shape_cast %20 : vector<1x8x256xf32> to vector<8x256xf32>
      %22 = vector.shape_cast %19 : vector<8x256xf32> to vector<1x8x256xf32>
      tpu.vector_store %arg5[%c0_13, %c0_14, %c0_15], %22 {strides = array<i32>} : memref<1x8x256xf32, #tpu.memory_space<vmem>>, vector<1x8x256xf32>,
    } else {
    }
    %c256_i32 = arith.constant 256 : i32
    %3 = arith.muli %arg2, %c256_i32 : i32
    %4 = tpu.assume_multiple %3, 256 : i32
    %c0 = arith.constant 0 : index
    %c0_1 = arith.constant 0 : index
    %c0_2 = arith.constant 0 : index
    %5 = vector.load %arg5[%c0, %c0_1, %c0_2] : memref<1x8x256xf32, #tpu.memory_space<vmem>>, vector<1x8x256xf32>
    %6 = vector.shape_cast %5 : vector<1x8x256xf32> to vector<8x256xf32>
    %c0_3 = arith.constant 0 : index
    %7 = arith.index_cast %4 : i32 to index
    %8 = vector.load %arg3[%c0_3, %7] : memref<8x256xbf16, #tpu.memory_space<vmem>>, vector<8x256xbf16>
    %c0_4 = arith.constant 0 : index
    %c0_5 = arith.constant 0 : index
    %c0_6 = arith.constant 0 : index
    %9 = vector.load %arg4[%c0_4, %c0_5, %c0_6] : memref<1x256x256xbf16, #tpu.memory_space<vmem>>, vector<1x256x256xbf16>
    %10 = vector.shape_cast %9 : vector<1x256x256xbf16> to vector<256x256xbf16>
    %cst = arith.constant dense<0.000000e+00> : vector<8x256xf32>
    %11 = tpu.matmul %8, %10, %cst {dimension_numbers = #tpu.dot_dimension_numbers<[1], [0], [0], [1], [0, 0, 1, 1], [], []>} : vector<8x256xbf16>, vector<256x256xbf16>, vector<8x256xf32> -> vector<8x256xf32>
    %12 = arith.addf %6, %11 : vector<8x256xf32>
    %c0_7 = arith.constant 0 : index
    %c0_8 = arith.constant 0 : index
    %c0_9 = arith.constant 0 : index
    %13 = vector.load %arg5[%c0_7, %c0_8, %c0_9] : memref<1x8x256xf32, #tpu.memory_space<vmem>>, vector<1x8x256xf32>
    %14 = vector.shape_cast %13 : vector<1x8x256xf32> to vector<8x256xf32>
    %15 = vector.shape_cast %12 : vector<8x256xf32> to vector<1x8x256xf32>
    tpu.vector_store %arg5[%c0_7, %c0_8, %c0_9], %15 {strides = array<i32>} : memref<1x8x256xf32, #tpu.memory_space<vmem>>, vector<1x8x256xf32>,
    %c0_i32_10 = arith.constant 0 : i32
    %16 = arith.cmpi eq, %arg2, %c0_i32_10 : i32
    %17 = arith.extui %16 : i1 to i32
    %c0_i32_11 = arith.constant 0 : i32
    %18 = arith.cmpi ne, %17, %c0_i32_11 : i32
    scf.if %18 {
      %c0_12 = arith.constant 0 : index
      %c0_13 = arith.constant 0 : index
      %c0_14 = arith.constant 0 : index
      %19 = vector.load %arg5[%c0_12, %c0_13, %c0_14] : memref<1x8x256xf32, #tpu.memory_space<vmem>>, vector<1x8x256xf32>
      %20 = vector.shape_cast %19 : vector<1x8x256xf32> to vector<8x256xf32>
      %cst_15 = arith.constant dense<0.000000e+00> : vector<8xf32>
      %21 = vector.multi_reduction <add>, %20, %cst_15 [1] : vector<8x256xf32> to vector<8xf32>
      %22 = vector.shape_cast %21 : vector<8xf32> to vector<8x1xf32>
      %c0_16 = arith.constant 0 : index
      %c0_17 = arith.constant 0 : index
      %c0_18 = arith.constant 0 : index
      %c0_19 = arith.constant 0 : index
      %23 = vector.load %arg6[%c0_16, %c0_17, %c0_18, %c0_19] : memref<1x1x8x2xf32, #tpu.memory_space<vmem>>, vector<1x1x8x1xf32>
      %24 = vector.shape_cast %23 : vector<1x1x8x1xf32> to vector<8x1xf32>
      %25 = vector.shape_cast %22 : vector<8x1xf32> to vector<1x1x8x1xf32>
      tpu.vector_store %arg6[%c0_16, %c0_17, %c0_18, %c0_19], %25 {strides = array<i32>} : memref<1x1x8x2xf32, #tpu.memory_space<vmem>>, vector<1x1x8x1xf32>,
      %26 = arith.mulf %20, %20 : vector<8x256xf32>
      %cst_20 = arith.constant dense<0.000000e+00> : vector<8xf32>
      %27 = vector.multi_reduction <add>, %26, %cst_20 [1] : vector<8x256xf32> to vector<8xf32>
      %28 = vector.shape_cast %27 : vector<8xf32> to vector<8x1xf32>
      %c0_21 = arith.constant 0 : index
      %c0_22 = arith.constant 0 : index
      %c0_23 = arith.constant 0 : index
      %c1 = arith.constant 1 : index
      %29 = vector.load %arg6[%c0_21, %c0_22, %c0_23, %c1] : memref<1x1x8x2xf32, #tpu.memory_space<vmem>>, vector<1x1x8x1xf32>
      %30 = vector.shape_cast %29 : vector<1x1x8x1xf32> to vector<8x1xf32>
      %31 = vector.shape_cast %28 : vector<8x1xf32> to vector<1x1x8x1xf32>
      tpu.vector_store %arg6[%c0_21, %c0_22, %c0_23, %c1], %31 {strides = array<i32>} : memref<1x1x8x2xf32, #tpu.memory_space<vmem>>, vector<1x1x8x1xf32>,
    } else {
    }
    return
  }
  func.func @transform_0(%arg0: i32, %arg1: i32, %arg2: i32) -> (i32, i32) {
    %c0_i32 = arith.constant 0 : i32
    %c0_i32_0 = arith.constant 0 : i32
    %c0_i32_1 = arith.constant 0 : i32
    return %c0_i32, %c0_i32_0 : i32, i32
  }
  func.func @transform_1(%arg0: i32, %arg1: i32, %arg2: i32) -> (i32, i32, i32) {
    %c0_i32 = arith.constant 0 : i32
    return %arg0, %arg2, %arg1 : i32, i32, i32
  }
  func.func @transform_2(%arg0: i32, %arg1: i32, %arg2: i32) -> (i32, i32, i32) {
    %c0_i32 = arith.constant 0 : i32
    %c0_i32_0 = arith.constant 0 : i32
    return %arg0, %c0_i32, %arg1 : i32, i32, i32
  }
  func.func @transform_3(%arg0: i32, %arg1: i32, %arg2: i32) -> (i32, i32, i32, i32) {
    %c0_i32 = arith.constant 0 : i32
    %c0_i32_0 = arith.constant 0 : i32
    %c0_i32_1 = arith.constant 0 : i32
    return %arg0, %arg1, %c0_i32, %c0_i32_0 : i32, i32, i32, i32
  }
}

module attributes {stable_mosaic.version = 11 : i64} {
  func.func @_conv_moments_kernel(%arg0: i32, %arg1: i32, %arg2: i32, %arg3: memref<16x128xbf16, #tpu.memory_space<vmem>>, %arg4: memref<1x128x64xbf16, #tpu.memory_space<vmem>>, %arg5: memref<1x16x64xf32, #tpu.memory_space<vmem>>, %arg6: memref<1x1x16x2xf32, #tpu.memory_space<vmem>>) attributes {dimension_semantics = [#tpu.dimension_semantics<parallel>, #tpu.dimension_semantics<parallel>, #tpu.dimension_semantics<arbitrary>], iteration_bounds = array<i64: 2, 1, 1>, scalar_prefetch = 0 : i64, scratch_operands = 0 : i64, tpu.core_type = #tpu.core_type<tc>, window_params = [{pipeline_mode = #tpu.pipeline_mode<synchronous>, transform_indices = @transform_0, window_bounds = array<i64: 16, 128>}, {transform_indices = @transform_1, window_bounds = array<i64: 1, 128, 64>}, {transform_indices = @transform_2, window_bounds = array<i64: 1, 16, 64>}, {transform_indices = @transform_3, window_bounds = array<i64: 1, 1, 16, 2>}]} {
    %c0_i32 = arith.constant 0 : i32
    %0 = arith.cmpi eq, %arg2, %c0_i32 : i32
    %1 = arith.extui %0 : i1 to i32
    %c0_i32_0 = arith.constant 0 : i32
    %2 = arith.cmpi ne, %1, %c0_i32_0 : i32
    scf.if %2 {
      %cst_12 = arith.constant 0.000000e+00 : f32
      %19 = vector.broadcast %cst_12 : f32 to vector<16x64xf32>
      %c0_13 = arith.constant 0 : index
      %c0_14 = arith.constant 0 : index
      %c0_15 = arith.constant 0 : index
      %20 = vector.load %arg5[%c0_13, %c0_14, %c0_15] : memref<1x16x64xf32, #tpu.memory_space<vmem>>, vector<1x16x64xf32>
      %21 = vector.shape_cast %20 : vector<1x16x64xf32> to vector<16x64xf32>
      %22 = vector.shape_cast %19 : vector<16x64xf32> to vector<1x16x64xf32>
      tpu.vector_store %arg5[%c0_13, %c0_14, %c0_15], %22 {strides = array<i32>} : memref<1x16x64xf32, #tpu.memory_space<vmem>>, vector<1x16x64xf32>,
    } else {
    }
    %c128_i32 = arith.constant 128 : i32
    %3 = arith.muli %arg2, %c128_i32 : i32
    %4 = tpu.assume_multiple %3, 128 : i32
    %c0 = arith.constant 0 : index
    %c0_1 = arith.constant 0 : index
    %c0_2 = arith.constant 0 : index
    %5 = vector.load %arg5[%c0, %c0_1, %c0_2] : memref<1x16x64xf32, #tpu.memory_space<vmem>>, vector<1x16x64xf32>
    %6 = vector.shape_cast %5 : vector<1x16x64xf32> to vector<16x64xf32>
    %c0_3 = arith.constant 0 : index
    %7 = arith.index_cast %4 : i32 to index
    %8 = vector.load %arg3[%c0_3, %7] : memref<16x128xbf16, #tpu.memory_space<vmem>>, vector<16x128xbf16>
    %c0_4 = arith.constant 0 : index
    %c0_5 = arith.constant 0 : index
    %c0_6 = arith.constant 0 : index
    %9 = vector.load %arg4[%c0_4, %c0_5, %c0_6] : memref<1x128x64xbf16, #tpu.memory_space<vmem>>, vector<1x128x64xbf16>
    %10 = vector.shape_cast %9 : vector<1x128x64xbf16> to vector<128x64xbf16>
    %cst = arith.constant dense<0.000000e+00> : vector<16x64xf32>
    %11 = tpu.matmul %8, %10, %cst {dimension_numbers = #tpu.dot_dimension_numbers<[1], [0], [0], [1], [0, 0, 1, 1], [], []>} : vector<16x128xbf16>, vector<128x64xbf16>, vector<16x64xf32> -> vector<16x64xf32>
    %12 = arith.addf %6, %11 : vector<16x64xf32>
    %c0_7 = arith.constant 0 : index
    %c0_8 = arith.constant 0 : index
    %c0_9 = arith.constant 0 : index
    %13 = vector.load %arg5[%c0_7, %c0_8, %c0_9] : memref<1x16x64xf32, #tpu.memory_space<vmem>>, vector<1x16x64xf32>
    %14 = vector.shape_cast %13 : vector<1x16x64xf32> to vector<16x64xf32>
    %15 = vector.shape_cast %12 : vector<16x64xf32> to vector<1x16x64xf32>
    tpu.vector_store %arg5[%c0_7, %c0_8, %c0_9], %15 {strides = array<i32>} : memref<1x16x64xf32, #tpu.memory_space<vmem>>, vector<1x16x64xf32>,
    %c0_i32_10 = arith.constant 0 : i32
    %16 = arith.cmpi eq, %arg2, %c0_i32_10 : i32
    %17 = arith.extui %16 : i1 to i32
    %c0_i32_11 = arith.constant 0 : i32
    %18 = arith.cmpi ne, %17, %c0_i32_11 : i32
    scf.if %18 {
      %c0_12 = arith.constant 0 : index
      %c0_13 = arith.constant 0 : index
      %c0_14 = arith.constant 0 : index
      %19 = vector.load %arg5[%c0_12, %c0_13, %c0_14] : memref<1x16x64xf32, #tpu.memory_space<vmem>>, vector<1x16x64xf32>
      %20 = vector.shape_cast %19 : vector<1x16x64xf32> to vector<16x64xf32>
      %cst_15 = arith.constant dense<0.000000e+00> : vector<16xf32>
      %21 = vector.multi_reduction <add>, %20, %cst_15 [1] : vector<16x64xf32> to vector<16xf32>
      %22 = vector.shape_cast %21 : vector<16xf32> to vector<16x1xf32>
      %c0_16 = arith.constant 0 : index
      %c0_17 = arith.constant 0 : index
      %c0_18 = arith.constant 0 : index
      %c0_19 = arith.constant 0 : index
      %23 = vector.load %arg6[%c0_16, %c0_17, %c0_18, %c0_19] : memref<1x1x16x2xf32, #tpu.memory_space<vmem>>, vector<1x1x16x1xf32>
      %24 = vector.shape_cast %23 : vector<1x1x16x1xf32> to vector<16x1xf32>
      %25 = vector.shape_cast %22 : vector<16x1xf32> to vector<1x1x16x1xf32>
      tpu.vector_store %arg6[%c0_16, %c0_17, %c0_18, %c0_19], %25 {strides = array<i32>} : memref<1x1x16x2xf32, #tpu.memory_space<vmem>>, vector<1x1x16x1xf32>,
      %26 = arith.mulf %20, %20 : vector<16x64xf32>
      %cst_20 = arith.constant dense<0.000000e+00> : vector<16xf32>
      %27 = vector.multi_reduction <add>, %26, %cst_20 [1] : vector<16x64xf32> to vector<16xf32>
      %28 = vector.shape_cast %27 : vector<16xf32> to vector<16x1xf32>
      %c0_21 = arith.constant 0 : index
      %c0_22 = arith.constant 0 : index
      %c0_23 = arith.constant 0 : index
      %c1 = arith.constant 1 : index
      %29 = vector.load %arg6[%c0_21, %c0_22, %c0_23, %c1] : memref<1x1x16x2xf32, #tpu.memory_space<vmem>>, vector<1x1x16x1xf32>
      %30 = vector.shape_cast %29 : vector<1x1x16x1xf32> to vector<16x1xf32>
      %31 = vector.shape_cast %28 : vector<16x1xf32> to vector<1x1x16x1xf32>
      tpu.vector_store %arg6[%c0_21, %c0_22, %c0_23, %c1], %31 {strides = array<i32>} : memref<1x1x16x2xf32, #tpu.memory_space<vmem>>, vector<1x1x16x1xf32>,
    } else {
    }
    return
  }
  func.func @transform_0(%arg0: i32, %arg1: i32, %arg2: i32) -> (i32, i32) {
    %c0_i32 = arith.constant 0 : i32
    %c0_i32_0 = arith.constant 0 : i32
    %c0_i32_1 = arith.constant 0 : i32
    return %c0_i32, %c0_i32_0 : i32, i32
  }
  func.func @transform_1(%arg0: i32, %arg1: i32, %arg2: i32) -> (i32, i32, i32) {
    %c0_i32 = arith.constant 0 : i32
    return %arg0, %arg2, %arg1 : i32, i32, i32
  }
  func.func @transform_2(%arg0: i32, %arg1: i32, %arg2: i32) -> (i32, i32, i32) {
    %c0_i32 = arith.constant 0 : i32
    %c0_i32_0 = arith.constant 0 : i32
    return %arg0, %c0_i32, %arg1 : i32, i32, i32
  }
  func.func @transform_3(%arg0: i32, %arg1: i32, %arg2: i32) -> (i32, i32, i32, i32) {
    %c0_i32 = arith.constant 0 : i32
    %c0_i32_0 = arith.constant 0 : i32
    %c0_i32_1 = arith.constant 0 : i32
    return %arg0, %arg1, %c0_i32, %c0_i32_0 : i32, i32, i32, i32
  }
}

module attributes {stable_mosaic.version = 11 : i64} {
  func.func @_in_act_add_kernel(%arg0: i32, %arg1: i32, %arg2: memref<1x16x64xf32, #tpu.memory_space<vmem>>, %arg3: memref<1x16x2xf32, #tpu.memory_space<vmem>>, %arg4: memref<1x16x64xbf16, #tpu.memory_space<vmem>>) attributes {dimension_semantics = [#tpu.dimension_semantics<parallel>, #tpu.dimension_semantics<parallel>], iteration_bounds = array<i64: 2, 1>, scalar_prefetch = 0 : i64, scratch_operands = 0 : i64, tpu.core_type = #tpu.core_type<tc>, window_params = [{transform_indices = @transform_0, window_bounds = array<i64: 1, 16, 64>}, {transform_indices = @transform_1, window_bounds = array<i64: 1, 16, 2>}, {transform_indices = @transform_2, window_bounds = array<i64: 1, 16, 64>}]} {
    %c0 = arith.constant 0 : index
    %c0_0 = arith.constant 0 : index
    %c0_1 = arith.constant 0 : index
    %0 = vector.load %arg3[%c0, %c0_0, %c0_1] : memref<1x16x2xf32, #tpu.memory_space<vmem>>, vector<1x16x1xf32>
    %1 = vector.shape_cast %0 : vector<1x16x1xf32> to vector<16x1xf32>
    %cst = arith.constant 1.562500e-02 : f32
    %2 = vector.broadcast %cst : f32 to vector<16x1xf32>
    %3 = arith.mulf %1, %2 : vector<16x1xf32>
    %c0_2 = arith.constant 0 : index
    %c0_3 = arith.constant 0 : index
    %c1 = arith.constant 1 : index
    %4 = vector.load %arg3[%c0_2, %c0_3, %c1] : memref<1x16x2xf32, #tpu.memory_space<vmem>>, vector<1x16x1xf32>
    %5 = vector.shape_cast %4 : vector<1x16x1xf32> to vector<16x1xf32>
    %cst_4 = arith.constant 1.562500e-02 : f32
    %6 = vector.broadcast %cst_4 : f32 to vector<16x1xf32>
    %7 = arith.mulf %5, %6 : vector<16x1xf32>
    %8 = arith.mulf %3, %3 : vector<16x1xf32>
    %9 = arith.subf %7, %8 : vector<16x1xf32>
    %cst_5 = arith.constant 0.000000e+00 : f32
    %10 = vector.broadcast %cst_5 : f32 to vector<16x1xf32>
    %11 = arith.maximumf %9, %10 : vector<16x1xf32>
    %c0_6 = arith.constant 0 : index
    %c0_7 = arith.constant 0 : index
    %c0_8 = arith.constant 0 : index
    %12 = vector.load %arg2[%c0_6, %c0_7, %c0_8] : memref<1x16x64xf32, #tpu.memory_space<vmem>>, vector<1x16x64xf32>
    %13 = vector.shape_cast %12 : vector<1x16x64xf32> to vector<16x64xf32>
    %14 = vector.broadcast %3 : vector<16x1xf32> to vector<16x64xf32>
    %15 = arith.subf %13, %14 : vector<16x64xf32>
    %cst_9 = arith.constant 9.99999974E-6 : f32
    %16 = vector.broadcast %cst_9 : f32 to vector<16x1xf32>
    %17 = arith.addf %11, %16 : vector<16x1xf32>
    %18 = math.rsqrt %17 : vector<16x1xf32>
    %19 = vector.broadcast %18 : vector<16x1xf32> to vector<16x64xf32>
    %20 = arith.mulf %15, %19 : vector<16x64xf32>
    %cst_10 = arith.constant 0.000000e+00 : f32
    %21 = vector.broadcast %cst_10 : f32 to vector<16x64xf32>
    %22 = arith.maximumf %20, %21 : vector<16x64xf32>
    %23 = arith.truncf %22 : vector<16x64xf32> to vector<16x64xbf16>
    %c0_11 = arith.constant 0 : index
    %c0_12 = arith.constant 0 : index
    %c0_13 = arith.constant 0 : index
    %24 = vector.load %arg4[%c0_11, %c0_12, %c0_13] : memref<1x16x64xbf16, #tpu.memory_space<vmem>>, vector<1x16x64xbf16>
    %25 = vector.shape_cast %24 : vector<1x16x64xbf16> to vector<16x64xbf16>
    %26 = vector.shape_cast %23 : vector<16x64xbf16> to vector<1x16x64xbf16>
    tpu.vector_store %arg4[%c0_11, %c0_12, %c0_13], %26 {strides = array<i32>} : memref<1x16x64xbf16, #tpu.memory_space<vmem>>, vector<1x16x64xbf16>,
    return
  }
  func.func @transform_0(%arg0: i32, %arg1: i32) -> (i32, i32, i32) {
    %c0_i32 = arith.constant 0 : i32
    %c0_i32_0 = arith.constant 0 : i32
    return %arg0, %c0_i32, %arg1 : i32, i32, i32
  }
  func.func @transform_1(%arg0: i32, %arg1: i32) -> (i32, i32, i32) {
    %c0_i32 = arith.constant 0 : i32
    %c0_i32_0 = arith.constant 0 : i32
    %c0_i32_1 = arith.constant 0 : i32
    return %arg0, %c0_i32, %c0_i32_0 : i32, i32, i32
  }
  func.func @transform_2(%arg0: i32, %arg1: i32) -> (i32, i32, i32) {
    %c0_i32 = arith.constant 0 : i32
    %c0_i32_0 = arith.constant 0 : i32
    return %arg0, %c0_i32, %arg1 : i32, i32, i32
  }
}

module attributes {stable_mosaic.version = 11 : i64} {
  func.func @_conv_moments_kernel(%arg0: i32, %arg1: i32, %arg2: i32, %arg3: memref<16x256xbf16, #tpu.memory_space<vmem>>, %arg4: memref<1x256x64xbf16, #tpu.memory_space<vmem>>, %arg5: memref<1x16x64xf32, #tpu.memory_space<vmem>>, %arg6: memref<1x1x16x2xf32, #tpu.memory_space<vmem>>) attributes {dimension_semantics = [#tpu.dimension_semantics<parallel>, #tpu.dimension_semantics<parallel>, #tpu.dimension_semantics<arbitrary>], iteration_bounds = array<i64: 2, 1, 1>, scalar_prefetch = 0 : i64, scratch_operands = 0 : i64, tpu.core_type = #tpu.core_type<tc>, window_params = [{pipeline_mode = #tpu.pipeline_mode<synchronous>, transform_indices = @transform_0, window_bounds = array<i64: 16, 256>}, {transform_indices = @transform_1, window_bounds = array<i64: 1, 256, 64>}, {transform_indices = @transform_2, window_bounds = array<i64: 1, 16, 64>}, {transform_indices = @transform_3, window_bounds = array<i64: 1, 1, 16, 2>}]} {
    %c0_i32 = arith.constant 0 : i32
    %0 = arith.cmpi eq, %arg2, %c0_i32 : i32
    %1 = arith.extui %0 : i1 to i32
    %c0_i32_0 = arith.constant 0 : i32
    %2 = arith.cmpi ne, %1, %c0_i32_0 : i32
    scf.if %2 {
      %cst_12 = arith.constant 0.000000e+00 : f32
      %19 = vector.broadcast %cst_12 : f32 to vector<16x64xf32>
      %c0_13 = arith.constant 0 : index
      %c0_14 = arith.constant 0 : index
      %c0_15 = arith.constant 0 : index
      %20 = vector.load %arg5[%c0_13, %c0_14, %c0_15] : memref<1x16x64xf32, #tpu.memory_space<vmem>>, vector<1x16x64xf32>
      %21 = vector.shape_cast %20 : vector<1x16x64xf32> to vector<16x64xf32>
      %22 = vector.shape_cast %19 : vector<16x64xf32> to vector<1x16x64xf32>
      tpu.vector_store %arg5[%c0_13, %c0_14, %c0_15], %22 {strides = array<i32>} : memref<1x16x64xf32, #tpu.memory_space<vmem>>, vector<1x16x64xf32>,
    } else {
    }
    %c256_i32 = arith.constant 256 : i32
    %3 = arith.muli %arg2, %c256_i32 : i32
    %4 = tpu.assume_multiple %3, 256 : i32
    %c0 = arith.constant 0 : index
    %c0_1 = arith.constant 0 : index
    %c0_2 = arith.constant 0 : index
    %5 = vector.load %arg5[%c0, %c0_1, %c0_2] : memref<1x16x64xf32, #tpu.memory_space<vmem>>, vector<1x16x64xf32>
    %6 = vector.shape_cast %5 : vector<1x16x64xf32> to vector<16x64xf32>
    %c0_3 = arith.constant 0 : index
    %7 = arith.index_cast %4 : i32 to index
    %8 = vector.load %arg3[%c0_3, %7] : memref<16x256xbf16, #tpu.memory_space<vmem>>, vector<16x256xbf16>
    %c0_4 = arith.constant 0 : index
    %c0_5 = arith.constant 0 : index
    %c0_6 = arith.constant 0 : index
    %9 = vector.load %arg4[%c0_4, %c0_5, %c0_6] : memref<1x256x64xbf16, #tpu.memory_space<vmem>>, vector<1x256x64xbf16>
    %10 = vector.shape_cast %9 : vector<1x256x64xbf16> to vector<256x64xbf16>
    %cst = arith.constant dense<0.000000e+00> : vector<16x64xf32>
    %11 = tpu.matmul %8, %10, %cst {dimension_numbers = #tpu.dot_dimension_numbers<[1], [0], [0], [1], [0, 0, 1, 1], [], []>} : vector<16x256xbf16>, vector<256x64xbf16>, vector<16x64xf32> -> vector<16x64xf32>
    %12 = arith.addf %6, %11 : vector<16x64xf32>
    %c0_7 = arith.constant 0 : index
    %c0_8 = arith.constant 0 : index
    %c0_9 = arith.constant 0 : index
    %13 = vector.load %arg5[%c0_7, %c0_8, %c0_9] : memref<1x16x64xf32, #tpu.memory_space<vmem>>, vector<1x16x64xf32>
    %14 = vector.shape_cast %13 : vector<1x16x64xf32> to vector<16x64xf32>
    %15 = vector.shape_cast %12 : vector<16x64xf32> to vector<1x16x64xf32>
    tpu.vector_store %arg5[%c0_7, %c0_8, %c0_9], %15 {strides = array<i32>} : memref<1x16x64xf32, #tpu.memory_space<vmem>>, vector<1x16x64xf32>,
    %c0_i32_10 = arith.constant 0 : i32
    %16 = arith.cmpi eq, %arg2, %c0_i32_10 : i32
    %17 = arith.extui %16 : i1 to i32
    %c0_i32_11 = arith.constant 0 : i32
    %18 = arith.cmpi ne, %17, %c0_i32_11 : i32
    scf.if %18 {
      %c0_12 = arith.constant 0 : index
      %c0_13 = arith.constant 0 : index
      %c0_14 = arith.constant 0 : index
      %19 = vector.load %arg5[%c0_12, %c0_13, %c0_14] : memref<1x16x64xf32, #tpu.memory_space<vmem>>, vector<1x16x64xf32>
      %20 = vector.shape_cast %19 : vector<1x16x64xf32> to vector<16x64xf32>
      %cst_15 = arith.constant dense<0.000000e+00> : vector<16xf32>
      %21 = vector.multi_reduction <add>, %20, %cst_15 [1] : vector<16x64xf32> to vector<16xf32>
      %22 = vector.shape_cast %21 : vector<16xf32> to vector<16x1xf32>
      %c0_16 = arith.constant 0 : index
      %c0_17 = arith.constant 0 : index
      %c0_18 = arith.constant 0 : index
      %c0_19 = arith.constant 0 : index
      %23 = vector.load %arg6[%c0_16, %c0_17, %c0_18, %c0_19] : memref<1x1x16x2xf32, #tpu.memory_space<vmem>>, vector<1x1x16x1xf32>
      %24 = vector.shape_cast %23 : vector<1x1x16x1xf32> to vector<16x1xf32>
      %25 = vector.shape_cast %22 : vector<16x1xf32> to vector<1x1x16x1xf32>
      tpu.vector_store %arg6[%c0_16, %c0_17, %c0_18, %c0_19], %25 {strides = array<i32>} : memref<1x1x16x2xf32, #tpu.memory_space<vmem>>, vector<1x1x16x1xf32>,
      %26 = arith.mulf %20, %20 : vector<16x64xf32>
      %cst_20 = arith.constant dense<0.000000e+00> : vector<16xf32>
      %27 = vector.multi_reduction <add>, %26, %cst_20 [1] : vector<16x64xf32> to vector<16xf32>
      %28 = vector.shape_cast %27 : vector<16xf32> to vector<16x1xf32>
      %c0_21 = arith.constant 0 : index
      %c0_22 = arith.constant 0 : index
      %c0_23 = arith.constant 0 : index
      %c1 = arith.constant 1 : index
      %29 = vector.load %arg6[%c0_21, %c0_22, %c0_23, %c1] : memref<1x1x16x2xf32, #tpu.memory_space<vmem>>, vector<1x1x16x1xf32>
      %30 = vector.shape_cast %29 : vector<1x1x16x1xf32> to vector<16x1xf32>
      %31 = vector.shape_cast %28 : vector<16x1xf32> to vector<1x1x16x1xf32>
      tpu.vector_store %arg6[%c0_21, %c0_22, %c0_23, %c1], %31 {strides = array<i32>} : memref<1x1x16x2xf32, #tpu.memory_space<vmem>>, vector<1x1x16x1xf32>,
    } else {
    }
    return
  }
  func.func @transform_0(%arg0: i32, %arg1: i32, %arg2: i32) -> (i32, i32) {
    %c0_i32 = arith.constant 0 : i32
    %c0_i32_0 = arith.constant 0 : i32
    %c0_i32_1 = arith.constant 0 : i32
    return %c0_i32, %c0_i32_0 : i32, i32
  }
  func.func @transform_1(%arg0: i32, %arg1: i32, %arg2: i32) -> (i32, i32, i32) {
    %c0_i32 = arith.constant 0 : i32
    return %arg0, %arg2, %arg1 : i32, i32, i32
  }
  func.func @transform_2(%arg0: i32, %arg1: i32, %arg2: i32) -> (i32, i32, i32) {
    %c0_i32 = arith.constant 0 : i32
    %c0_i32_0 = arith.constant 0 : i32
    return %arg0, %c0_i32, %arg1 : i32, i32, i32
  }
  func.func @transform_3(%arg0: i32, %arg1: i32, %arg2: i32) -> (i32, i32, i32, i32) {
    %c0_i32 = arith.constant 0 : i32
    %c0_i32_0 = arith.constant 0 : i32
    %c0_i32_1 = arith.constant 0 : i32
    return %arg0, %arg1, %c0_i32, %c0_i32_0 : i32, i32, i32, i32
  }
}

module attributes {stable_mosaic.version = 11 : i64} {
  func.func @_in_act_add_kernel(%arg0: i32, %arg1: i32, %arg2: memref<1x16x64xf32, #tpu.memory_space<vmem>>, %arg3: memref<1x16x2xf32, #tpu.memory_space<vmem>>, %arg4: memref<1x16x64xbf16, #tpu.memory_space<vmem>>, %arg5: memref<1x16x64xf32, #tpu.memory_space<vmem>>, %arg6: memref<1x16x64xbf16, #tpu.memory_space<vmem>>) attributes {dimension_semantics = [#tpu.dimension_semantics<parallel>, #tpu.dimension_semantics<parallel>], iteration_bounds = array<i64: 2, 1>, scalar_prefetch = 0 : i64, scratch_operands = 0 : i64, tpu.core_type = #tpu.core_type<tc>, window_params = [{transform_indices = @transform_0, window_bounds = array<i64: 1, 16, 64>}, {transform_indices = @transform_1, window_bounds = array<i64: 1, 16, 2>}, {transform_indices = @transform_2, window_bounds = array<i64: 1, 16, 64>}, {transform_indices = @transform_3, window_bounds = array<i64: 1, 16, 64>}, {transform_indices = @transform_4, window_bounds = array<i64: 1, 16, 64>}]} {
    %c0 = arith.constant 0 : index
    %c0_0 = arith.constant 0 : index
    %c0_1 = arith.constant 0 : index
    %0 = vector.load %arg3[%c0, %c0_0, %c0_1] : memref<1x16x2xf32, #tpu.memory_space<vmem>>, vector<1x16x1xf32>
    %1 = vector.shape_cast %0 : vector<1x16x1xf32> to vector<16x1xf32>
    %cst = arith.constant 1.562500e-02 : f32
    %2 = vector.broadcast %cst : f32 to vector<16x1xf32>
    %3 = arith.mulf %1, %2 : vector<16x1xf32>
    %c0_2 = arith.constant 0 : index
    %c0_3 = arith.constant 0 : index
    %c1 = arith.constant 1 : index
    %4 = vector.load %arg3[%c0_2, %c0_3, %c1] : memref<1x16x2xf32, #tpu.memory_space<vmem>>, vector<1x16x1xf32>
    %5 = vector.shape_cast %4 : vector<1x16x1xf32> to vector<16x1xf32>
    %cst_4 = arith.constant 1.562500e-02 : f32
    %6 = vector.broadcast %cst_4 : f32 to vector<16x1xf32>
    %7 = arith.mulf %5, %6 : vector<16x1xf32>
    %8 = arith.mulf %3, %3 : vector<16x1xf32>
    %9 = arith.subf %7, %8 : vector<16x1xf32>
    %cst_5 = arith.constant 0.000000e+00 : f32
    %10 = vector.broadcast %cst_5 : f32 to vector<16x1xf32>
    %11 = arith.maximumf %9, %10 : vector<16x1xf32>
    %c0_6 = arith.constant 0 : index
    %c0_7 = arith.constant 0 : index
    %c0_8 = arith.constant 0 : index
    %12 = vector.load %arg2[%c0_6, %c0_7, %c0_8] : memref<1x16x64xf32, #tpu.memory_space<vmem>>, vector<1x16x64xf32>
    %13 = vector.shape_cast %12 : vector<1x16x64xf32> to vector<16x64xf32>
    %14 = vector.broadcast %3 : vector<16x1xf32> to vector<16x64xf32>
    %15 = arith.subf %13, %14 : vector<16x64xf32>
    %cst_9 = arith.constant 9.99999974E-6 : f32
    %16 = vector.broadcast %cst_9 : f32 to vector<16x1xf32>
    %17 = arith.addf %11, %16 : vector<16x1xf32>
    %18 = math.rsqrt %17 : vector<16x1xf32>
    %19 = vector.broadcast %18 : vector<16x1xf32> to vector<16x64xf32>
    %20 = arith.mulf %15, %19 : vector<16x64xf32>
    %c0_10 = arith.constant 0 : index
    %c0_11 = arith.constant 0 : index
    %c0_12 = arith.constant 0 : index
    %21 = vector.load %arg4[%c0_10, %c0_11, %c0_12] : memref<1x16x64xbf16, #tpu.memory_space<vmem>>, vector<1x16x64xbf16>
    %22 = vector.shape_cast %21 : vector<1x16x64xbf16> to vector<16x64xbf16>
    %23 = arith.extf %22 : vector<16x64xbf16> to vector<16x64xf32>
    %24 = arith.addf %20, %23 : vector<16x64xf32>
    %c0_13 = arith.constant 0 : index
    %c0_14 = arith.constant 0 : index
    %c0_15 = arith.constant 0 : index
    %25 = vector.load %arg5[%c0_13, %c0_14, %c0_15] : memref<1x16x64xf32, #tpu.memory_space<vmem>>, vector<1x16x64xf32>
    %26 = vector.shape_cast %25 : vector<1x16x64xf32> to vector<16x64xf32>
    %27 = arith.addf %24, %26 : vector<16x64xf32>
    %28 = arith.truncf %27 : vector<16x64xf32> to vector<16x64xbf16>
    %c0_16 = arith.constant 0 : index
    %c0_17 = arith.constant 0 : index
    %c0_18 = arith.constant 0 : index
    %29 = vector.load %arg6[%c0_16, %c0_17, %c0_18] : memref<1x16x64xbf16, #tpu.memory_space<vmem>>, vector<1x16x64xbf16>
    %30 = vector.shape_cast %29 : vector<1x16x64xbf16> to vector<16x64xbf16>
    %31 = vector.shape_cast %28 : vector<16x64xbf16> to vector<1x16x64xbf16>
    tpu.vector_store %arg6[%c0_16, %c0_17, %c0_18], %31 {strides = array<i32>} : memref<1x16x64xbf16, #tpu.memory_space<vmem>>, vector<1x16x64xbf16>,
    return
  }
  func.func @transform_0(%arg0: i32, %arg1: i32) -> (i32, i32, i32) {
    %c0_i32 = arith.constant 0 : i32
    %c0_i32_0 = arith.constant 0 : i32
    return %arg0, %c0_i32, %arg1 : i32, i32, i32
  }
  func.func @transform_1(%arg0: i32, %arg1: i32) -> (i32, i32, i32) {
    %c0_i32 = arith.constant 0 : i32
    %c0_i32_0 = arith.constant 0 : i32
    %c0_i32_1 = arith.constant 0 : i32
    return %arg0, %c0_i32, %c0_i32_0 : i32, i32, i32
  }
  func.func @transform_2(%arg0: i32, %arg1: i32) -> (i32, i32, i32) {
    %c0_i32 = arith.constant 0 : i32
    %c0_i32_0 = arith.constant 0 : i32
    return %arg0, %c0_i32, %arg1 : i32, i32, i32
  }
  func.func @transform_3(%arg0: i32, %arg1: i32) -> (i32, i32, i32) {
    %c0_i32 = arith.constant 0 : i32
    %c0_i32_0 = arith.constant 0 : i32
    return %arg0, %c0_i32, %arg1 : i32, i32, i32
  }
  func.func @transform_4(%arg0: i32, %arg1: i32) -> (i32, i32, i32) {
    %c0_i32 = arith.constant 0 : i32
    %c0_i32_0 = arith.constant 0 : i32
    return %arg0, %c0_i32, %arg1 : i32, i32, i32
  }
}

module attributes {stable_mosaic.version = 11 : i64} {
  func.func @_in_act_add_kernel(%arg0: i32, %arg1: i32, %arg2: memref<1x16x64xf32, #tpu.memory_space<vmem>>, %arg3: memref<1x16x2xf32, #tpu.memory_space<vmem>>, %arg4: memref<1x16x64xbf16, #tpu.memory_space<vmem>>, %arg5: memref<1x16x64xbf16, #tpu.memory_space<vmem>>) attributes {dimension_semantics = [#tpu.dimension_semantics<parallel>, #tpu.dimension_semantics<parallel>], iteration_bounds = array<i64: 2, 1>, scalar_prefetch = 0 : i64, scratch_operands = 0 : i64, tpu.core_type = #tpu.core_type<tc>, window_params = [{transform_indices = @transform_0, window_bounds = array<i64: 1, 16, 64>}, {transform_indices = @transform_1, window_bounds = array<i64: 1, 16, 2>}, {transform_indices = @transform_2, window_bounds = array<i64: 1, 16, 64>}, {transform_indices = @transform_3, window_bounds = array<i64: 1, 16, 64>}]} {
    %c0 = arith.constant 0 : index
    %c0_0 = arith.constant 0 : index
    %c0_1 = arith.constant 0 : index
    %0 = vector.load %arg3[%c0, %c0_0, %c0_1] : memref<1x16x2xf32, #tpu.memory_space<vmem>>, vector<1x16x1xf32>
    %1 = vector.shape_cast %0 : vector<1x16x1xf32> to vector<16x1xf32>
    %cst = arith.constant 1.562500e-02 : f32
    %2 = vector.broadcast %cst : f32 to vector<16x1xf32>
    %3 = arith.mulf %1, %2 : vector<16x1xf32>
    %c0_2 = arith.constant 0 : index
    %c0_3 = arith.constant 0 : index
    %c1 = arith.constant 1 : index
    %4 = vector.load %arg3[%c0_2, %c0_3, %c1] : memref<1x16x2xf32, #tpu.memory_space<vmem>>, vector<1x16x1xf32>
    %5 = vector.shape_cast %4 : vector<1x16x1xf32> to vector<16x1xf32>
    %cst_4 = arith.constant 1.562500e-02 : f32
    %6 = vector.broadcast %cst_4 : f32 to vector<16x1xf32>
    %7 = arith.mulf %5, %6 : vector<16x1xf32>
    %8 = arith.mulf %3, %3 : vector<16x1xf32>
    %9 = arith.subf %7, %8 : vector<16x1xf32>
    %cst_5 = arith.constant 0.000000e+00 : f32
    %10 = vector.broadcast %cst_5 : f32 to vector<16x1xf32>
    %11 = arith.maximumf %9, %10 : vector<16x1xf32>
    %c0_6 = arith.constant 0 : index
    %c0_7 = arith.constant 0 : index
    %c0_8 = arith.constant 0 : index
    %12 = vector.load %arg2[%c0_6, %c0_7, %c0_8] : memref<1x16x64xf32, #tpu.memory_space<vmem>>, vector<1x16x64xf32>
    %13 = vector.shape_cast %12 : vector<1x16x64xf32> to vector<16x64xf32>
    %14 = vector.broadcast %3 : vector<16x1xf32> to vector<16x64xf32>
    %15 = arith.subf %13, %14 : vector<16x64xf32>
    %cst_9 = arith.constant 9.99999974E-6 : f32
    %16 = vector.broadcast %cst_9 : f32 to vector<16x1xf32>
    %17 = arith.addf %11, %16 : vector<16x1xf32>
    %18 = math.rsqrt %17 : vector<16x1xf32>
    %19 = vector.broadcast %18 : vector<16x1xf32> to vector<16x64xf32>
    %20 = arith.mulf %15, %19 : vector<16x64xf32>
    %c0_10 = arith.constant 0 : index
    %c0_11 = arith.constant 0 : index
    %c0_12 = arith.constant 0 : index
    %21 = vector.load %arg4[%c0_10, %c0_11, %c0_12] : memref<1x16x64xbf16, #tpu.memory_space<vmem>>, vector<1x16x64xbf16>
    %22 = vector.shape_cast %21 : vector<1x16x64xbf16> to vector<16x64xbf16>
    %23 = arith.extf %22 : vector<16x64xbf16> to vector<16x64xf32>
    %24 = arith.addf %20, %23 : vector<16x64xf32>
    %25 = arith.truncf %24 : vector<16x64xf32> to vector<16x64xbf16>
    %c0_13 = arith.constant 0 : index
    %c0_14 = arith.constant 0 : index
    %c0_15 = arith.constant 0 : index
    %26 = vector.load %arg5[%c0_13, %c0_14, %c0_15] : memref<1x16x64xbf16, #tpu.memory_space<vmem>>, vector<1x16x64xbf16>
    %27 = vector.shape_cast %26 : vector<1x16x64xbf16> to vector<16x64xbf16>
    %28 = vector.shape_cast %25 : vector<16x64xbf16> to vector<1x16x64xbf16>
    tpu.vector_store %arg5[%c0_13, %c0_14, %c0_15], %28 {strides = array<i32>} : memref<1x16x64xbf16, #tpu.memory_space<vmem>>, vector<1x16x64xbf16>,
    return
  }
  func.func @transform_0(%arg0: i32, %arg1: i32) -> (i32, i32, i32) {
    %c0_i32 = arith.constant 0 : i32
    %c0_i32_0 = arith.constant 0 : i32
    return %arg0, %c0_i32, %arg1 : i32, i32, i32
  }
  func.func @transform_1(%arg0: i32, %arg1: i32) -> (i32, i32, i32) {
    %c0_i32 = arith.constant 0 : i32
    %c0_i32_0 = arith.constant 0 : i32
    %c0_i32_1 = arith.constant 0 : i32
    return %arg0, %c0_i32, %c0_i32_0 : i32, i32, i32
  }
  func.func @transform_2(%arg0: i32, %arg1: i32) -> (i32, i32, i32) {
    %c0_i32 = arith.constant 0 : i32
    %c0_i32_0 = arith.constant 0 : i32
    return %arg0, %c0_i32, %arg1 : i32, i32, i32
  }
  func.func @transform_3(%arg0: i32, %arg1: i32) -> (i32, i32, i32) {
    %c0_i32 = arith.constant 0 : i32
    %c0_i32_0 = arith.constant 0 : i32
    return %arg0, %c0_i32, %arg1 : i32, i32, i32
  }
}

module attributes {stable_mosaic.version = 11 : i64} {
  func.func @_conv_moments_kernel(%arg0: i32, %arg1: i32, %arg2: i32, %arg3: memref<8x512xbf16, #tpu.memory_space<vmem>>, %arg4: memref<1x512x256xbf16, #tpu.memory_space<vmem>>, %arg5: memref<1x8x256xf32, #tpu.memory_space<vmem>>, %arg6: memref<1x1x8x2xf32, #tpu.memory_space<vmem>>) attributes {dimension_semantics = [#tpu.dimension_semantics<parallel>, #tpu.dimension_semantics<parallel>, #tpu.dimension_semantics<arbitrary>], iteration_bounds = array<i64: 2, 1, 1>, scalar_prefetch = 0 : i64, scratch_operands = 0 : i64, tpu.core_type = #tpu.core_type<tc>, window_params = [{pipeline_mode = #tpu.pipeline_mode<synchronous>, transform_indices = @transform_0, window_bounds = array<i64: 8, 512>}, {transform_indices = @transform_1, window_bounds = array<i64: 1, 512, 256>}, {transform_indices = @transform_2, window_bounds = array<i64: 1, 8, 256>}, {transform_indices = @transform_3, window_bounds = array<i64: 1, 1, 8, 2>}]} {
    %c0_i32 = arith.constant 0 : i32
    %0 = arith.cmpi eq, %arg2, %c0_i32 : i32
    %1 = arith.extui %0 : i1 to i32
    %c0_i32_0 = arith.constant 0 : i32
    %2 = arith.cmpi ne, %1, %c0_i32_0 : i32
    scf.if %2 {
      %cst_12 = arith.constant 0.000000e+00 : f32
      %19 = vector.broadcast %cst_12 : f32 to vector<8x256xf32>
      %c0_13 = arith.constant 0 : index
      %c0_14 = arith.constant 0 : index
      %c0_15 = arith.constant 0 : index
      %20 = vector.load %arg5[%c0_13, %c0_14, %c0_15] : memref<1x8x256xf32, #tpu.memory_space<vmem>>, vector<1x8x256xf32>
      %21 = vector.shape_cast %20 : vector<1x8x256xf32> to vector<8x256xf32>
      %22 = vector.shape_cast %19 : vector<8x256xf32> to vector<1x8x256xf32>
      tpu.vector_store %arg5[%c0_13, %c0_14, %c0_15], %22 {strides = array<i32>} : memref<1x8x256xf32, #tpu.memory_space<vmem>>, vector<1x8x256xf32>,
    } else {
    }
    %c512_i32 = arith.constant 512 : i32
    %3 = arith.muli %arg2, %c512_i32 : i32
    %4 = tpu.assume_multiple %3, 512 : i32
    %c0 = arith.constant 0 : index
    %c0_1 = arith.constant 0 : index
    %c0_2 = arith.constant 0 : index
    %5 = vector.load %arg5[%c0, %c0_1, %c0_2] : memref<1x8x256xf32, #tpu.memory_space<vmem>>, vector<1x8x256xf32>
    %6 = vector.shape_cast %5 : vector<1x8x256xf32> to vector<8x256xf32>
    %c0_3 = arith.constant 0 : index
    %7 = arith.index_cast %4 : i32 to index
    %8 = vector.load %arg3[%c0_3, %7] : memref<8x512xbf16, #tpu.memory_space<vmem>>, vector<8x512xbf16>
    %c0_4 = arith.constant 0 : index
    %c0_5 = arith.constant 0 : index
    %c0_6 = arith.constant 0 : index
    %9 = vector.load %arg4[%c0_4, %c0_5, %c0_6] : memref<1x512x256xbf16, #tpu.memory_space<vmem>>, vector<1x512x256xbf16>
    %10 = vector.shape_cast %9 : vector<1x512x256xbf16> to vector<512x256xbf16>
    %cst = arith.constant dense<0.000000e+00> : vector<8x256xf32>
    %11 = tpu.matmul %8, %10, %cst {dimension_numbers = #tpu.dot_dimension_numbers<[1], [0], [0], [1], [0, 0, 1, 1], [], []>} : vector<8x512xbf16>, vector<512x256xbf16>, vector<8x256xf32> -> vector<8x256xf32>
    %12 = arith.addf %6, %11 : vector<8x256xf32>
    %c0_7 = arith.constant 0 : index
    %c0_8 = arith.constant 0 : index
    %c0_9 = arith.constant 0 : index
    %13 = vector.load %arg5[%c0_7, %c0_8, %c0_9] : memref<1x8x256xf32, #tpu.memory_space<vmem>>, vector<1x8x256xf32>
    %14 = vector.shape_cast %13 : vector<1x8x256xf32> to vector<8x256xf32>
    %15 = vector.shape_cast %12 : vector<8x256xf32> to vector<1x8x256xf32>
    tpu.vector_store %arg5[%c0_7, %c0_8, %c0_9], %15 {strides = array<i32>} : memref<1x8x256xf32, #tpu.memory_space<vmem>>, vector<1x8x256xf32>,
    %c0_i32_10 = arith.constant 0 : i32
    %16 = arith.cmpi eq, %arg2, %c0_i32_10 : i32
    %17 = arith.extui %16 : i1 to i32
    %c0_i32_11 = arith.constant 0 : i32
    %18 = arith.cmpi ne, %17, %c0_i32_11 : i32
    scf.if %18 {
      %c0_12 = arith.constant 0 : index
      %c0_13 = arith.constant 0 : index
      %c0_14 = arith.constant 0 : index
      %19 = vector.load %arg5[%c0_12, %c0_13, %c0_14] : memref<1x8x256xf32, #tpu.memory_space<vmem>>, vector<1x8x256xf32>
      %20 = vector.shape_cast %19 : vector<1x8x256xf32> to vector<8x256xf32>
      %cst_15 = arith.constant dense<0.000000e+00> : vector<8xf32>
      %21 = vector.multi_reduction <add>, %20, %cst_15 [1] : vector<8x256xf32> to vector<8xf32>
      %22 = vector.shape_cast %21 : vector<8xf32> to vector<8x1xf32>
      %c0_16 = arith.constant 0 : index
      %c0_17 = arith.constant 0 : index
      %c0_18 = arith.constant 0 : index
      %c0_19 = arith.constant 0 : index
      %23 = vector.load %arg6[%c0_16, %c0_17, %c0_18, %c0_19] : memref<1x1x8x2xf32, #tpu.memory_space<vmem>>, vector<1x1x8x1xf32>
      %24 = vector.shape_cast %23 : vector<1x1x8x1xf32> to vector<8x1xf32>
      %25 = vector.shape_cast %22 : vector<8x1xf32> to vector<1x1x8x1xf32>
      tpu.vector_store %arg6[%c0_16, %c0_17, %c0_18, %c0_19], %25 {strides = array<i32>} : memref<1x1x8x2xf32, #tpu.memory_space<vmem>>, vector<1x1x8x1xf32>,
      %26 = arith.mulf %20, %20 : vector<8x256xf32>
      %cst_20 = arith.constant dense<0.000000e+00> : vector<8xf32>
      %27 = vector.multi_reduction <add>, %26, %cst_20 [1] : vector<8x256xf32> to vector<8xf32>
      %28 = vector.shape_cast %27 : vector<8xf32> to vector<8x1xf32>
      %c0_21 = arith.constant 0 : index
      %c0_22 = arith.constant 0 : index
      %c0_23 = arith.constant 0 : index
      %c1 = arith.constant 1 : index
      %29 = vector.load %arg6[%c0_21, %c0_22, %c0_23, %c1] : memref<1x1x8x2xf32, #tpu.memory_space<vmem>>, vector<1x1x8x1xf32>
      %30 = vector.shape_cast %29 : vector<1x1x8x1xf32> to vector<8x1xf32>
      %31 = vector.shape_cast %28 : vector<8x1xf32> to vector<1x1x8x1xf32>
      tpu.vector_store %arg6[%c0_21, %c0_22, %c0_23, %c1], %31 {strides = array<i32>} : memref<1x1x8x2xf32, #tpu.memory_space<vmem>>, vector<1x1x8x1xf32>,
    } else {
    }
    return
  }
  func.func @transform_0(%arg0: i32, %arg1: i32, %arg2: i32) -> (i32, i32) {
    %c0_i32 = arith.constant 0 : i32
    %c0_i32_0 = arith.constant 0 : i32
    %c0_i32_1 = arith.constant 0 : i32
    return %c0_i32, %c0_i32_0 : i32, i32
  }
  func.func @transform_1(%arg0: i32, %arg1: i32, %arg2: i32) -> (i32, i32, i32) {
    %c0_i32 = arith.constant 0 : i32
    return %arg0, %arg2, %arg1 : i32, i32, i32
  }
  func.func @transform_2(%arg0: i32, %arg1: i32, %arg2: i32) -> (i32, i32, i32) {
    %c0_i32 = arith.constant 0 : i32
    %c0_i32_0 = arith.constant 0 : i32
    return %arg0, %c0_i32, %arg1 : i32, i32, i32
  }
  func.func @transform_3(%arg0: i32, %arg1: i32, %arg2: i32) -> (i32, i32, i32, i32) {
    %c0_i32 = arith.constant 0 : i32
    %c0_i32_0 = arith.constant 0 : i32
    %c0_i32_1 = arith.constant 0 : i32
    return %arg0, %arg1, %c0_i32, %c0_i32_0 : i32, i32, i32, i32
  }
}

module attributes {stable_mosaic.version = 11 : i64} {
  func.func @_conv_bias_act_kernel(%arg0: i32, %arg1: i32, %arg2: i32, %arg3: memref<3x512xbf16, #tpu.memory_space<vmem>>, %arg4: memref<3x1xf32, #tpu.memory_space<vmem>>, %arg5: memref<1x512x256xbf16, #tpu.memory_space<vmem>>, %arg6: memref<1x3x256xf32, #tpu.memory_space<vmem>>) attributes {dimension_semantics = [#tpu.dimension_semantics<parallel>, #tpu.dimension_semantics<parallel>, #tpu.dimension_semantics<arbitrary>], iteration_bounds = array<i64: 2, 1, 1>, scalar_prefetch = 0 : i64, scratch_operands = 0 : i64, tpu.core_type = #tpu.core_type<tc>, window_params = [{pipeline_mode = #tpu.pipeline_mode<synchronous>, transform_indices = @transform_0, window_bounds = array<i64: 3, 512>}, {pipeline_mode = #tpu.pipeline_mode<synchronous>, transform_indices = @transform_1, window_bounds = array<i64: 3, 1>}, {transform_indices = @transform_2, window_bounds = array<i64: 1, 512, 256>}, {transform_indices = @transform_3, window_bounds = array<i64: 1, 3, 256>}]} {
    %c0_i32 = arith.constant 0 : i32
    %0 = arith.cmpi eq, %arg2, %c0_i32 : i32
    %1 = arith.extui %0 : i1 to i32
    %c0_i32_0 = arith.constant 0 : i32
    %2 = arith.cmpi ne, %1, %c0_i32_0 : i32
    scf.if %2 {
      %cst_12 = arith.constant 0.000000e+00 : f32
      %19 = vector.broadcast %cst_12 : f32 to vector<3x256xf32>
      %c0_13 = arith.constant 0 : index
      %c0_14 = arith.constant 0 : index
      %c0_15 = arith.constant 0 : index
      %20 = vector.load %arg6[%c0_13, %c0_14, %c0_15] : memref<1x3x256xf32, #tpu.memory_space<vmem>>, vector<1x3x256xf32>
      %21 = vector.shape_cast %20 : vector<1x3x256xf32> to vector<3x256xf32>
      %22 = vector.shape_cast %19 : vector<3x256xf32> to vector<1x3x256xf32>
      tpu.vector_store %arg6[%c0_13, %c0_14, %c0_15], %22 {strides = array<i32>} : memref<1x3x256xf32, #tpu.memory_space<vmem>>, vector<1x3x256xf32>,
    } else {
    }
    %c512_i32 = arith.constant 512 : i32
    %3 = arith.muli %arg2, %c512_i32 : i32
    %4 = tpu.assume_multiple %3, 512 : i32
    %c0 = arith.constant 0 : index
    %c0_1 = arith.constant 0 : index
    %c0_2 = arith.constant 0 : index
    %5 = vector.load %arg6[%c0, %c0_1, %c0_2] : memref<1x3x256xf32, #tpu.memory_space<vmem>>, vector<1x3x256xf32>
    %6 = vector.shape_cast %5 : vector<1x3x256xf32> to vector<3x256xf32>
    %c0_3 = arith.constant 0 : index
    %7 = arith.index_cast %4 : i32 to index
    %8 = vector.load %arg3[%c0_3, %7] : memref<3x512xbf16, #tpu.memory_space<vmem>>, vector<3x512xbf16>
    %c0_4 = arith.constant 0 : index
    %c0_5 = arith.constant 0 : index
    %c0_6 = arith.constant 0 : index
    %9 = vector.load %arg5[%c0_4, %c0_5, %c0_6] : memref<1x512x256xbf16, #tpu.memory_space<vmem>>, vector<1x512x256xbf16>
    %10 = vector.shape_cast %9 : vector<1x512x256xbf16> to vector<512x256xbf16>
    %cst = arith.constant dense<0.000000e+00> : vector<3x256xf32>
    %11 = tpu.matmul %8, %10, %cst {dimension_numbers = #tpu.dot_dimension_numbers<[1], [0], [0], [1], [0, 0, 1, 1], [], []>} : vector<3x512xbf16>, vector<512x256xbf16>, vector<3x256xf32> -> vector<3x256xf32>
    %12 = arith.addf %6, %11 : vector<3x256xf32>
    %c0_7 = arith.constant 0 : index
    %c0_8 = arith.constant 0 : index
    %c0_9 = arith.constant 0 : index
    %13 = vector.load %arg6[%c0_7, %c0_8, %c0_9] : memref<1x3x256xf32, #tpu.memory_space<vmem>>, vector<1x3x256xf32>
    %14 = vector.shape_cast %13 : vector<1x3x256xf32> to vector<3x256xf32>
    %15 = vector.shape_cast %12 : vector<3x256xf32> to vector<1x3x256xf32>
    tpu.vector_store %arg6[%c0_7, %c0_8, %c0_9], %15 {strides = array<i32>} : memref<1x3x256xf32, #tpu.memory_space<vmem>>, vector<1x3x256xf32>,
    %c0_i32_10 = arith.constant 0 : i32
    %16 = arith.cmpi eq, %arg2, %c0_i32_10 : i32
    %17 = arith.extui %16 : i1 to i32
    %c0_i32_11 = arith.constant 0 : i32
    %18 = arith.cmpi ne, %17, %c0_i32_11 : i32
    scf.if %18 {
      %c0_12 = arith.constant 0 : index
      %c0_13 = arith.constant 0 : index
      %c0_14 = arith.constant 0 : index
      %19 = vector.load %arg6[%c0_12, %c0_13, %c0_14] : memref<1x3x256xf32, #tpu.memory_space<vmem>>, vector<1x3x256xf32>
      %20 = vector.shape_cast %19 : vector<1x3x256xf32> to vector<3x256xf32>
      %c0_15 = arith.constant 0 : index
      %c0_16 = arith.constant 0 : index
      %21 = vector.load %arg4[%c0_15, %c0_16] : memref<3x1xf32, #tpu.memory_space<vmem>>, vector<3x1xf32>
      %22 = vector.broadcast %21 : vector<3x1xf32> to vector<3x256xf32>
      %23 = arith.addf %20, %22 : vector<3x256xf32>
      %24 = math.tanh %23 : vector<3x256xf32>
      %c0_17 = arith.constant 0 : index
      %c0_18 = arith.constant 0 : index
      %c0_19 = arith.constant 0 : index
      %25 = vector.load %arg6[%c0_17, %c0_18, %c0_19] : memref<1x3x256xf32, #tpu.memory_space<vmem>>, vector<1x3x256xf32>
      %26 = vector.shape_cast %25 : vector<1x3x256xf32> to vector<3x256xf32>
      %27 = vector.shape_cast %24 : vector<3x256xf32> to vector<1x3x256xf32>
      tpu.vector_store %arg6[%c0_17, %c0_18, %c0_19], %27 {strides = array<i32>} : memref<1x3x256xf32, #tpu.memory_space<vmem>>, vector<1x3x256xf32>,
    } else {
    }
    return
  }
  func.func @transform_0(%arg0: i32, %arg1: i32, %arg2: i32) -> (i32, i32) {
    %c0_i32 = arith.constant 0 : i32
    %c0_i32_0 = arith.constant 0 : i32
    %c0_i32_1 = arith.constant 0 : i32
    return %c0_i32, %c0_i32_0 : i32, i32
  }
  func.func @transform_1(%arg0: i32, %arg1: i32, %arg2: i32) -> (i32, i32) {
    %c0_i32 = arith.constant 0 : i32
    %c0_i32_0 = arith.constant 0 : i32
    %c0_i32_1 = arith.constant 0 : i32
    return %c0_i32, %c0_i32_0 : i32, i32
  }
  func.func @transform_2(%arg0: i32, %arg1: i32, %arg2: i32) -> (i32, i32, i32) {
    %c0_i32 = arith.constant 0 : i32
    return %arg0, %arg2, %arg1 : i32, i32, i32
  }
  func.func @transform_3(%arg0: i32, %arg1: i32, %arg2: i32) -> (i32, i32, i32) {
    %c0_i32 = arith.constant 0 : i32
    %c0_i32_0 = arith.constant 0 : i32
    return %arg0, %c0_i32, %arg1 : i32, i32, i32
  }
}

</mosaic_0001>

<llo_original>
// kernel: vae_forward.16
$region0: #{vae_forward.16}
  #allocation0 [shape = 'u32[]', space=smem, size = 0x4, offset = 0x4, fixed_abs, tag = 'smem constant byte address 0x4 - core index']
  #allocation1 [shape = 'u32[144,128]{1,0:T(1,128)}', space=vmem, size = 0x12000, scoped, tag = 'internal scratch']
  %s0 = inlined_call_operand.vmem [shape: f32[2,8,256], index: 0, kind: input, shape index: {}]
  %s1 = inlined_call_operand.vmem [shape: f32[2,8,2], index: 1, kind: input, shape index: {}]
  %s2 = inlined_call_operand.vmem [shape: bf16[2,8,256], index: 2, kind: output, shape index: {}]
  %s3 = sld [smem:[#allocation0]]
  $region41: #{vae_forward.16} parent=0
    _
  %s5 = ssub.s32 1, %s3
  %s6 = scalar_select 0, %s5, %s3
  loop: start=0, step=1, limit=4
  $region2: #{vae_forward.16} parent=0 // loop_pre_header
    _
  $region3: #{vae_forward.16} parent=0 // loop_header
    %s8 = sphi 0, %s12
    %p9 = scmp.ge.s32.totalorder %s8, 4
    %s15 = sphi 0, %s27
    %s16 = sphi 0, %s23
    %s17 = sphi 0, %s15
    %s18 = sphi 0, %s16
    %s19 = sphi 0, %s17
    %s20 = sphi 0, %s18
    %s32 = sphi 0, %s34
    %s35 = sphi 0, %s32
    %s36 = sphi 0, %s35
    %s52 = sphi 0, %s36
    %s58 = sphi 0, %s60
    %s61 = sphi 0, %s58
    %s62 = sphi 0, %s61
    %s78 = sphi 0, %s62
    %s86 = sphi 0, %s88
    %s89 = sphi 0, %s86
    %s90 = sphi 0, %s89
    %s106 = sphi 0, %s90
  $region4: #{vae_forward.16} parent=0 // loop_header_branch
    %11 = sbr.rel (%p9) target = $region8
  $region5: #{vae_forward.16} parent=0 // loop_body
    %s13 = ssub.s32 %s8, 1
    %s14 = ssub.s32 %s8, 2
    %s21 = sadd.s32 1, %s16
    %p22 = scmp.ge.s32.totalorder %s21, 1
    %s23 = scalar_select %p22, 0, %s21
    %s24 = sadd.s32 1, %s15
    %s25 = scalar_select %p22, %s24, %s15
    %p26 = scmp.ge.s32.totalorder %s25, 2
    %s27 = scalar_select %p26, 0, %s25
    %s28 = ssub.s32 %s15, %s27
    %s29 = ssub.s32 %s16, %s23
    %s30 = sor.u32 %s28, %s29
    %p31 = scmp.eq.s32.totalorder %s30, 0
    %s33 = sadd.s32 %s32, 1
    %s34 = scalar_select %p31, %s32, %s33
    %p37 = pneg %p31
    %p38 = scmp.eq.s32.totalorder %s8, 1
    %p39 = por %p37, %p38
    %p40 = scmp.ne.s32.totalorder %s32, %s35
    %p41 = scmp.eq.s32.totalorder %s8, 0
    %p42 = por %p40, %p41
    %p43 = scmp.ne.s32.totalorder %s32, %s35
    %p44 = scmp.eq.s32.totalorder %s13, 1
    %p45 = por %p43, %p44
    %p46 = scmp.ne.s32.totalorder %s35, %s36
    %p47 = scmp.eq.s32.totalorder %s13, 0
    %p48 = por %p46, %p47
    %p49 = scmp.ne.s32.totalorder %s35, %s36
    %p50 = scmp.eq.s32.totalorder %s14, 1
    %p51 = por %p49, %p50
    %p53 = scmp.ne.s32.totalorder %s36, %s52
    %p54 = scmp.eq.s32.totalorder %s14, 0
    %p55 = por %p53, %p54
    %s56 = ssub.s32 %s15, %s27
    %p57 = scmp.eq.s32.totalorder %s56, 0
    %s59 = sadd.s32 %s58, 1
    %s60 = scalar_select %p57, %s58, %s59
    %p63 = pneg %p57
    %p64 = scmp.eq.s32.totalorder %s8, 1
    %p65 = por %p63, %p64
    %p66 = scmp.ne.s32.totalorder %s58, %s61
    %p67 = scmp.eq.s32.totalorder %s8, 0
    %p68 = por %p66, %p67
    %p69 = scmp.ne.s32.totalorder %s58, %s61
    %p70 = scmp.eq.s32.totalorder %s13, 1
    %p71 = por %p69, %p70
    %p72 = scmp.ne.s32.totalorder %s61, %s62
    %p73 = scmp.eq.s32.totalorder %s13, 0
    %p74 = por %p72, %p73
    %p75 = scmp.ne.s32.totalorder %s61, %s62
    %p76 = scmp.eq.s32.totalorder %s14, 1
    %p77 = por %p75, %p76
    %p79 = scmp.ne.s32.totalorder %s62, %s78
    %p80 = scmp.eq.s32.totalorder %s14, 0
    %p81 = por %p79, %p80
    %s82 = ssub.s32 %s15, %s27
    %s83 = ssub.s32 %s16, %s23
    %s84 = sor.u32 %s82, %s83
    %p85 = scmp.eq.s32.totalorder %s84, 0
    %s87 = sadd.s32 %s86, 1
    %s88 = scalar_select %p85, %s86, %s87
    %p91 = pneg %p85
    %p92 = scmp.eq.s32.totalorder %s8, 1
    %p93 = por %p91, %p92
    %p94 = scmp.ne.s32.totalorder %s86, %s89
    %p95 = scmp.eq.s32.totalorder %s8, 0
    %p96 = por %p94, %p95
    %p97 = scmp.ne.s32.totalorder %s86, %s89
    %p98 = scmp.eq.s32.totalorder %s13, 1
    %p99 = por %p97, %p98
    %p100 = scmp.ne.s32.totalorder %s89, %s90
    %p101 = scmp.eq.s32.totalorder %s13, 0
    %p102 = por %p100, %p101
    %p103 = scmp.ne.s32.totalorder %s89, %s90
    %p104 = scmp.eq.s32.totalorder %s14, 1
    %p105 = por %p103, %p104
    %p107 = scmp.ne.s32.totalorder %s90, %s106
    %p108 = scmp.eq.s32.totalorder %s14, 0
    %p109 = por %p107, %p108
    %p110 = scmp.le.s32.totalorder 1, %s8
    %p111 = scmp.lt.s32.totalorder %s8, 3
    %p112 = pnand %p110, %p111
    %p113 = pneg %p112
    // Predicated region
    $region9: #{vae_forward.16} parent=5 // pred_check
      _
    $region10: #{vae_forward.16} parent=5 // pred_check_branch
      %115 = sbr.rel (%p112) target = $region12
    $region11: #{vae_forward.16} parent=5 // pred_region
      %s116 = ssub.s32 %s8, 1
    $region12: #{vae_forward.16} parent=5 // pred_fallthru
      _
    %p117 = scmp.lt.s32.totalorder %s8, 2
    // Predicated region
    $region13: #{vae_forward.16} parent=5 // pred_check
      %p118 = pneg %p117
    $region14: #{vae_forward.16} parent=5 // pred_check_branch
      %120 = sbr.rel (%p118) target = $region16
    $region15: #{vae_forward.16} parent=5 // pred_region
      // Predicated region
      $region17: #{vae_forward.16} parent=15 // pred_check
        %p121 = pneg %p42
      $region18: #{vae_forward.16} parent=15 // pred_check_branch
        %123 = sbr.rel (%p121) target = $region20
      $region19: #{vae_forward.16} parent=15 // pred_region
        %s124 = smul.u32 2, %s16
        %p125 = scmp.lt.s32.totalorder %s15, 1
        %s126 = scalar_select %p125, %s15, 1
        %p127 = scmp.lt.s32.totalorder %s124, 1
        %s128 = scalar_select %p127, %s124, 1
        %s129 = smul.addr %s126, 2
        %s130 = sadd.s32 %s128, %s129
        %s131 = smul.addr %s130, 8
        %s132 = scalar_lea.vmem %s0, %s131
        %s133 = smul.u32 2, %s16
      $region20: #{vae_forward.16} parent=15 // pred_fallthru
        _
      // Predicated region
      $region21: #{vae_forward.16} parent=15 // pred_check
        %p134 = pneg %p68
      $region22: #{vae_forward.16} parent=15 // pred_check_branch
        %136 = sbr.rel (%p134) target = $region24
      $region23: #{vae_forward.16} parent=15 // pred_region
        %p137 = scmp.lt.s32.totalorder %s15, 1
        %s138 = scalar_select %p137, %s15, 1
        %s139 = smul.addr %s138, 8
        %s140 = scalar_lea.vmem %s1, %s139
      $region24: #{vae_forward.16} parent=15 // pred_fallthru
        _
    $region16: #{vae_forward.16} parent=5 // pred_fallthru
      _
    %p141 = scmp.le.s32.totalorder 1, %s8
    %p142 = scmp.lt.s32.totalorder %s8, 3
    %p143 = pnand %p141, %p142
    %p144 = pneg %p143
    // Predicated region
    $region25: #{vae_forward.16} parent=5 // pred_check
      _
    $region26: #{vae_forward.16} parent=5 // pred_check_branch
      %146 = sbr.rel (%p143) target = $region28
    $region27: #{vae_forward.16} parent=5 // pred_region
      %s147 = ssub.s32 %s8, 1
      %s148 = smul.u32 2, %s18
      %p149 = scmp.lt.s32.totalorder %s17, 1
      %s150 = scalar_select %p149, %s17, 1
      %p151 = scmp.lt.s32.totalorder %s148, 1
      %s152 = scalar_select %p151, %s148, 1
      %s153 = smul.addr %s150, 2
      %s154 = sadd.s32 %s152, %s153
      %s155 = smul.addr %s154, 8
      %s156 = scalar_lea.vmem %s0, %s155
      %p157 = pneg %p48
      %p158 = pneg %p45
      %p159 = scmp.lt.s32.totalorder %s17, 1
      %s160 = scalar_select %p159, %s17, 1
      %s161 = smul.addr %s160, 8
      %s162 = scalar_lea.vmem %s1, %s161
      %p163 = pneg %p74
      %p164 = pneg %p71
      %p165 = pneg %p102
      %p166 = pneg %p99
      %s167 = smul.u32 2, %s18
      %p168 = scmp.lt.s32.totalorder %s17, 1
      %s169 = scalar_select %p168, %s17, 1
      %p170 = scmp.lt.s32.totalorder %s167, 1
      %s171 = scalar_select %p170, %s167, 1
      %s172 = smul.addr %s169, 2
      %s173 = sadd.s32 %s171, %s172
      %s174 = smul.addr %s173, 4
      %s175 = scalar_lea.vmem %s2, %s174
      %s176 = smul.u32 2, %s18
      %p177 = scmp.lt.s32.totalorder %s17, 1
      %s178 = scalar_select %p177, %s17, 1
      %p179 = scmp.lt.s32.totalorder %s176, 1
      %s180 = scalar_select %p179, %s176, 1
      %s181 = smul.addr %s178, 2
      %s182 = sadd.s32 %s180, %s181
      %s183 = smul.addr %s182, 8
      %s184 = scalar_lea.vmem %s0, %s183
      %s185 = smul.u32 2, %s18
      %p186 = scmp.lt.s32.totalorder %s17, 1
      %s187 = scalar_select %p186, %s17, 1
      %s188 = smul.addr %s187, 8
      %s189 = scalar_lea.vmem %s1, %s188
      %s190 = smul.u32 2, %s18
      %p191 = scmp.lt.s32.totalorder %s17, 1
      %s192 = scalar_select %p191, %s17, 1
      %p193 = scmp.lt.s32.totalorder %s190, 1
      %s194 = scalar_select %p193, %s190, 1
      %s195 = smul.addr %s192, 2
      %s196 = sadd.s32 %s194, %s195
      %s197 = smul.addr %s196, 4
      %s198 = scalar_lea.vmem %s2, %s197
      %s199 = smul.u32 2, %s18
      %v200 = vld [vmem:[%s189] sm:$0xff]
      %v201 = vmul.f32 %v200, 0.00390625
      %v202 = vmul.f32 %v201, %v201
      %204 = vrot.lane.b32.xlu0 %v202, 1
      %v205 = vpop.permute.xlu0 %204
      %v207 = vsub.f32 %v201, %v205
      %v208 = vmax.f32 %v207, 0.0
      %v209 = vld [vmem:[%s184] sm:$0xff]
      %v210 = vld [vmem:[%s184 + $0x8] sm:$0xff]
      %212 = vset.pattern.permute.xlu0 0
      %213 = vperm.xlu0 %212, %v201
      %v214 = vpop.permute.xlu0 %213
      %v216 = vsub.f32 %v209, %v214
      %v217 = vsub.f32 %v210, %v214
      %v218 = vadd.f32 %v208, 1e-05
      %v219 = vrsqrt.pop %v218
      %221 = vset.pattern.permute.xlu0 1
      %222 = vperm.xlu0 %221, %v219
      %v223 = vpop.permute.xlu0 %222
      %v225 = vmul.f32 %v216, %v223
      %v226 = vmul.f32 %v217, %v223
      %v227 = vmax.f32 %v225, 0.0
      %v228 = vmax.f32 %v226, 0.0
      %v229 = vpack.c.bf16 %v227, %v227
      %v230 = vpack.c.bf16 %v228, %v228
      %v233 = vunpack.c.l.b16 %v229
      %v234 = vunpack.c.l.b16 %v230
      %v235 = vpack.c.b16 %v234, %v233
      %237 = vst [vmem:[%s198] sm:$0xff] %v235
      %s238 = smul.u32 2, %s18
      %p239 = scmp.lt.s32.totalorder %s17, 1
      %s240 = scalar_select %p239, %s17, 1
      %p241 = scmp.lt.s32.totalorder %s238, 1
      %s242 = scalar_select %p241, %s238, 1
      %s243 = smul.addr %s240, 2
      %s244 = sadd.s32 %s242, %s243
      %s245 = smul.addr %s244, 4
      %s246 = scalar_lea.vmem %s2, %s245
      // Predicated region
      $region29: #{vae_forward.16} parent=27 // pred_check
        %p247 = pneg %p99
      $region30: #{vae_forward.16} parent=27 // pred_check_branch
        %249 = sbr.rel (%p247) target = $region32
      $region31: #{vae_forward.16} parent=27 // pred_region
        %s250 = smul.u32 2, %s18
      $region32: #{vae_forward.16} parent=27 // pred_fallthru
        _
    $region28: #{vae_forward.16} parent=5 // pred_fallthru
      _
    %p251 = scmp.le.s32.totalorder 2, %s8
    // Predicated region
    $region33: #{vae_forward.16} parent=5 // pred_check
      %p252 = pneg %p251
    $region34: #{vae_forward.16} parent=5 // pred_check_branch
      %254 = sbr.rel (%p252) target = $region36
    $region35: #{vae_forward.16} parent=5 // pred_region
      %s255 = ssub.s32 %s8, 2
      // Predicated region
      $region37: #{vae_forward.16} parent=35 // pred_check
        %p256 = pneg %p105
      $region38: #{vae_forward.16} parent=35 // pred_check_branch
        %258 = sbr.rel (%p256) target = $region40
      $region39: #{vae_forward.16} parent=35 // pred_region
        %s259 = smul.u32 2, %s20
        %p260 = scmp.lt.s32.totalorder %s19, 1
        %s261 = scalar_select %p260, %s19, 1
        %p262 = scmp.lt.s32.totalorder %s259, 1
        %s263 = scalar_select %p262, %s259, 1
        %s264 = smul.addr %s261, 2
        %s265 = sadd.s32 %s263, %s264
        %s266 = smul.addr %s265, 4
        %s267 = scalar_lea.vmem %s2, %s266
      $region40: #{vae_forward.16} parent=35 // pred_fallthru
        _
    $region36: #{vae_forward.16} parent=5 // pred_fallthru
      _
  $region6: #{vae_forward.16} parent=0 // loop_footer
    %s12 = sadd.s32 1, %s8
  $region7: #{vae_forward.16} parent=0 // loop_footer_branch
    %7 = sbr.rel target = $region3
  $region8: #{vae_forward.16} parent=0 // loop_exit
    _

// kernel: vae_forward.15
$region0: #{vae_forward.15}
  #allocation0 [shape = 'u32[]', space=smem, size = 0x4, offset = 0x4, fixed_abs, tag = 'smem constant byte address 0x4 - core index']
  #allocation1 [shape = 'u32[144,128]{1,0:T(1,128)}', space=vmem, size = 0x12000, scoped, tag = 'internal scratch']
  %s0 = inlined_call_operand.vmem [shape: bf16[8,256], index: 0, kind: input, shape index: {}]
  %s1 = inlined_call_operand.vmem [shape: bf16[2,256,256], index: 1, kind: input, shape index: {}]
  %s2 = inlined_call_operand.vmem [shape: f32[2,8,256], index: 2, kind: output, shape index: {0}]
  %s3 = inlined_call_operand.vmem [shape: f32[2,1,8,2], index: 3, kind: output, shape index: {1}]
  %4 = xla_tuple %s2, %s3
  %s5 = sld [smem:[#allocation0]]
  $region57: #{vae_forward.15} parent=0
    _
  %s7 = ssub.s32 1, %s5
  %s8 = scalar_select 0, %s7, %s5
  loop: start=0, step=1, limit=4
  $region2: #{vae_forward.15} parent=0 // loop_pre_header
    _
  $region3: #{vae_forward.15} parent=0 // loop_header
    %s10 = sphi 0, %s14
    %p11 = scmp.ge.s32.totalorder %s10, 4
    %s17 = sphi 0, %s36
    %s18 = sphi 0, %s32
    %s19 = sphi 0, %s28
    %s20 = sphi 0, %s17
    %s21 = sphi 0, %s18
    %s22 = sphi 0, %s19
    %s23 = sphi 0, %s20
    %s24 = sphi 0, %s21
    %s25 = sphi 0, %s22
    %s37 = sphi 0, %s37
    %s39 = sphi 0, %s37
    %s40 = sphi 0, %s39
    %s54 = sphi 0, %s40
    %s64 = sphi 0, %s66
    %s67 = sphi 0, %s64
    %s68 = sphi 0, %s67
    %s84 = sphi 0, %s68
    %s92 = sphi 0, %s94
    %s95 = sphi 0, %s92
    %s96 = sphi 0, %s95
    %s112 = sphi 0, %s96
    %s120 = sphi 0, %s122
    %s123 = sphi 0, %s120
    %s124 = sphi 0, %s123
    %s140 = sphi 0, %s124
  $region4: #{vae_forward.15} parent=0 // loop_header_branch
    %13 = sbr.rel (%p11) target = $region8
  $region5: #{vae_forward.15} parent=0 // loop_body
    %s15 = ssub.s32 %s10, 1
    %s16 = ssub.s32 %s10, 2
    %s26 = sadd.s32 1, %s19
    %p27 = scmp.ge.s32.totalorder %s26, 1
    %s28 = scalar_select %p27, 0, %s26
    %s29 = sadd.s32 1, %s18
    %s30 = scalar_select %p27, %s29, %s18
    %p31 = scmp.ge.s32.totalorder %s30, 1
    %s32 = scalar_select %p31, 0, %s30
    %s33 = sadd.s32 1, %s17
    %s34 = scalar_select %p31, %s33, %s17
    %p35 = scmp.ge.s32.totalorder %s34, 2
    %s36 = scalar_select %p35, 0, %s34
    %s38 = sadd.s32 %s37, 1
    %p41 = scmp.eq.s32.totalorder %s10, 1
    %p42 = scmp.ne.s32.totalorder %s37, %s39
    %p43 = scmp.eq.s32.totalorder %s10, 0
    %p44 = por %p42, %p43
    %p45 = scmp.ne.s32.totalorder %s37, %s39
    %p46 = scmp.eq.s32.totalorder %s15, 1
    %p47 = por %p45, %p46
    %p48 = scmp.ne.s32.totalorder %s39, %s40
    %p49 = scmp.eq.s32.totalorder %s15, 0
    %p50 = por %p48, %p49
    %p51 = scmp.ne.s32.totalorder %s39, %s40
    %p52 = scmp.eq.s32.totalorder %s16, 1
    %p53 = por %p51, %p52
    %p55 = scmp.ne.s32.totalorder %s40, %s54
    %p56 = scmp.eq.s32.totalorder %s16, 0
    %p57 = por %p55, %p56
    %s58 = ssub.s32 %s17, %s36
    %s59 = ssub.s32 %s19, %s28
    %s60 = sor.u32 %s58, %s59
    %s61 = ssub.s32 %s18, %s32
    %s62 = sor.u32 %s60, %s61
    %p63 = scmp.eq.s32.totalorder %s62, 0
    %s65 = sadd.s32 %s64, 1
    %s66 = scalar_select %p63, %s64, %s65
    %p69 = pneg %p63
    %p70 = scmp.eq.s32.totalorder %s10, 1
    %p71 = por %p69, %p70
    %p72 = scmp.ne.s32.totalorder %s64, %s67
    %p73 = scmp.eq.s32.totalorder %s10, 0
    %p74 = por %p72, %p73
    %p75 = scmp.ne.s32.totalorder %s64, %s67
    %p76 = scmp.eq.s32.totalorder %s15, 1
    %p77 = por %p75, %p76
    %p78 = scmp.ne.s32.totalorder %s67, %s68
    %p79 = scmp.eq.s32.totalorder %s15, 0
    %p80 = por %p78, %p79
    %p81 = scmp.ne.s32.totalorder %s67, %s68
    %p82 = scmp.eq.s32.totalorder %s16, 1
    %p83 = por %p81, %p82
    %p85 = scmp.ne.s32.totalorder %s68, %s84
    %p86 = scmp.eq.s32.totalorder %s16, 0
    %p87 = por %p85, %p86
    %s88 = ssub.s32 %s17, %s36
    %s89 = ssub.s32 %s18, %s32
    %s90 = sor.u32 %s88, %s89
    %p91 = scmp.eq.s32.totalorder %s90, 0
    %s93 = sadd.s32 %s92, 1
    %s94 = scalar_select %p91, %s92, %s93
    %p97 = pneg %p91
    %p98 = scmp.eq.s32.totalorder %s10, 1
    %p99 = por %p97, %p98
    %p100 = scmp.ne.s32.totalorder %s92, %s95
    %p101 = scmp.eq.s32.totalorder %s10, 0
    %p102 = por %p100, %p101
    %p103 = scmp.ne.s32.totalorder %s92, %s95
    %p104 = scmp.eq.s32.totalorder %s15, 1
    %p105 = por %p103, %p104
    %p106 = scmp.ne.s32.totalorder %s95, %s96
    %p107 = scmp.eq.s32.totalorder %s15, 0
    %p108 = por %p106, %p107
    %p109 = scmp.ne.s32.totalorder %s95, %s96
    %p110 = scmp.eq.s32.totalorder %s16, 1
    %p111 = por %p109, %p110
    %p113 = scmp.ne.s32.totalorder %s96, %s112
    %p114 = scmp.eq.s32.totalorder %s16, 0
    %p115 = por %p113, %p114
    %s116 = ssub.s32 %s17, %s36
    %s117 = ssub.s32 %s18, %s32
    %s118 = sor.u32 %s116, %s117
    %p119 = scmp.eq.s32.totalorder %s118, 0
    %s121 = sadd.s32 %s120, 1
    %s122 = scalar_select %p119, %s120, %s121
    %p125 = pneg %p119
    %p126 = scmp.eq.s32.totalorder %s10, 1
    %p127 = por %p125, %p126
    %p128 = scmp.ne.s32.totalorder %s120, %s123
    %p129 = scmp.eq.s32.totalorder %s10, 0
    %p130 = por %p128, %p129
    %p131 = scmp.ne.s32.totalorder %s120, %s123
    %p132 = scmp.eq.s32.totalorder %s15, 1
    %p133 = por %p131, %p132
    %p134 = scmp.ne.s32.totalorder %s123, %s124
    %p135 = scmp.eq.s32.totalorder %s15, 0
    %p136 = por %p134, %p135
    %p137 = scmp.ne.s32.totalorder %s123, %s124
    %p138 = scmp.eq.s32.totalorder %s16, 1
    %p139 = por %p137, %p138
    %p141 = scmp.ne.s32.totalorder %s124, %s140
    %p142 = scmp.eq.s32.totalorder %s16, 0
    %p143 = por %p141, %p142
    %p144 = scmp.le.s32.totalorder 1, %s10
    %p145 = scmp.lt.s32.totalorder %s10, 3
    %p146 = pnand %p144, %p145
    %p147 = pneg %p146
    // Predicated region
    $region9: #{vae_forward.15} parent=5 // pred_check
      _
    $region10: #{vae_forward.15} parent=5 // pred_check_branch
      %149 = sbr.rel (%p146) target = $region12
    $region11: #{vae_forward.15} parent=5 // pred_region
      %s150 = ssub.s32 %s10, 1
      // Predicated region
      $region13: #{vae_forward.15} parent=11 // pred_check
        %p151 = pneg %p50
      $region14: #{vae_forward.15} parent=11 // pred_check_branch
        %153 = sbr.rel (%p151) target = $region16
      $region15: #{vae_forward.15} parent=11 // pred_region
        _
      $region16: #{vae_forward.15} parent=11 // pred_fallthru
        _
    $region12: #{vae_forward.15} parent=5 // pred_fallthru
      _
    %p154 = scmp.lt.s32.totalorder %s10, 2
    // Predicated region
    $region17: #{vae_forward.15} parent=5 // pred_check
      %p155 = pneg %p154
    $region18: #{vae_forward.15} parent=5 // pred_check_branch
      %157 = sbr.rel (%p155) target = $region20
    $region19: #{vae_forward.15} parent=5 // pred_region
      // Predicated region
      $region21: #{vae_forward.15} parent=19 // pred_check
        %p158 = pneg %p74
      $region22: #{vae_forward.15} parent=19 // pred_check_branch
        %160 = sbr.rel (%p158) target = $region24
      $region23: #{vae_forward.15} parent=19 // pred_region
        %s161 = smul.u32 32, %s19
        %s162 = smul.u32 2, %s18
        %p163 = scmp.lt.s32.totalorder %s17, 1
        %s164 = scalar_select %p163, %s17, 1
        %p165 = scmp.lt.s32.totalorder %s161, 31
        %s166 = scalar_select %p165, %s161, 31
        %p167 = scmp.lt.s32.totalorder %s162, 1
        %s168 = scalar_select %p167, %s162, 1
        %s169 = smul.addr %s166, 2
        %s170 = sadd.s32 %s168, %s169
        %s171 = smul.addr %s164, 64
        %s172 = sadd.s32 %s170, %s171
        %s173 = smul.addr %s172, 4
        %s174 = scalar_lea.vmem %s1, %s173
        %s175 = smul.u32 32, %s19
        %s176 = smul.u32 2, %s18
      $region24: #{vae_forward.15} parent=19 // pred_fallthru
        _
    $region20: #{vae_forward.15} parent=5 // pred_fallthru
      _
    %p177 = scmp.le.s32.totalorder 1, %s10
    %p178 = scmp.lt.s32.totalorder %s10, 3
    %p179 = pnand %p177, %p178
    %p180 = pneg %p179
    // Predicated region
    $region25: #{vae_forward.15} parent=5 // pred_check
      _
    $region26: #{vae_forward.15} parent=5 // pred_check_branch
      %182 = sbr.rel (%p179) target = $region28
    $region27: #{vae_forward.15} parent=5 // pred_region
      %s183 = ssub.s32 %s10, 1
      %p184 = pneg %p50
      %p185 = pneg %p47
      %s186 = smul.u32 32, %s22
      %s187 = smul.u32 2, %s21
      %p188 = scmp.lt.s32.totalorder %s20, 1
      %s189 = scalar_select %p188, %s20, 1
      %p190 = scmp.lt.s32.totalorder %s186, 31
      %s191 = scalar_select %p190, %s186, 31
      %p192 = scmp.lt.s32.totalorder %s187, 1
      %s193 = scalar_select %p192, %s187, 1
      %s194 = smul.addr %s191, 2
      %s195 = sadd.s32 %s193, %s194
      %s196 = smul.addr %s189, 64
      %s197 = sadd.s32 %s195, %s196
      %s198 = smul.addr %s197, 4
      %s199 = scalar_lea.vmem %s1, %s198
      %p200 = pneg %p80
      %p201 = pneg %p77
      %p202 = pneg %p108
      %p203 = pneg %p105
      %s204 = smul.u32 2, %s21
      %p205 = scmp.lt.s32.totalorder %s20, 1
      %s206 = scalar_select %p205, %s20, 1
      %p207 = scmp.lt.s32.totalorder %s204, 1
      %s208 = scalar_select %p207, %s204, 1
      %s209 = smul.addr %s206, 2
      %s210 = sadd.s32 %s208, %s209
      %s211 = smul.addr %s210, 8
      %s212 = scalar_lea.vmem %s2, %s211
      %p213 = pneg %p136
      %p214 = pneg %p133
      %p215 = scmp.lt.s32.totalorder %s20, 1
      %s216 = scalar_select %p215, %s20, 1
      %p217 = scmp.lt.s32.totalorder %s21, 0
      %s218 = scalar_select %p217, %s21, 0
      %s219 = sadd.s32 %s218, %s216
      %s220 = smul.addr %s219, 8
      %s221 = scalar_lea.vmem %s3, %s220
      %s222 = smul.u32 32, %s22
      %s223 = smul.u32 2, %s21
      %p224 = scmp.lt.s32.totalorder %s20, 1
      %s225 = scalar_select %p224, %s20, 1
      %p226 = scmp.lt.s32.totalorder %s222, 31
      %s227 = scalar_select %p226, %s222, 31
      %p228 = scmp.lt.s32.totalorder %s223, 1
      %s229 = scalar_select %p228, %s223, 1
      %s230 = smul.addr %s227, 2
      %s231 = sadd.s32 %s229, %s230
      %s232 = smul.addr %s225, 64
      %s233 = sadd.s32 %s231, %s232
      %s234 = smul.addr %s233, 4
      %s235 = scalar_lea.vmem %s1, %s234
      %s236 = smul.u32 32, %s22
      %s237 = smul.u32 2, %s21
      %s238 = smul.u32 2, %s21
      %p239 = scmp.lt.s32.totalorder %s20, 1
      %s240 = scalar_select %p239, %s20, 1
      %p241 = scmp.lt.s32.totalorder %s238, 1
      %s242 = scalar_select %p241, %s238, 1
      %s243 = smul.addr %s240, 2
      %s244 = sadd.s32 %s242, %s243
      %s245 = smul.addr %s244, 8
      %s246 = scalar_lea.vmem %s2, %s245
      %s247 = smul.u32 2, %s21
      %p248 = scmp.lt.s32.totalorder %s20, 1
      %s249 = scalar_select %p248, %s20, 1
      %p250 = scmp.lt.s32.totalorder %s21, 0
      %s251 = scalar_select %p250, %s21, 0
      %s252 = sadd.s32 %s251, %s249
      %s253 = smul.addr %s252, 8
      %s254 = scalar_lea.vmem %s3, %s253
      %p255 = scmp.eq.s32.totalorder %s22, 0
      // Predicated region
      $region29: #{vae_forward.15} parent=27 // pred_check
        %p256 = pneg %p255
      $region30: #{vae_forward.15} parent=27 // pred_check_branch
        %258 = sbr.rel (%p256) target = $region32
      $region31: #{vae_forward.15} parent=27 // pred_region
        %259 = vst [vmem:[%s246] sm:$0xff] 0.0
        %260 = vst [vmem:[%s246 + $0x8] sm:$0xff] 0.0
      $region32: #{vae_forward.15} parent=27 // pred_fallthru
        _
      %s261 = smul.u32 %s22, 256
      %v262 = vld [vmem:[%s246] sm:$0xff]
      %v263 = vld [vmem:[%s246 + $0x8] sm:$0xff]
      %s264 = sshra.s32 %s261, 7
      %s265 = sand.u32 %s261, 127
      %s266 = smul.addr %s264, 4
      %s267 = scalar_lea.vmem %s0, %s266
      %v268 = vld [vmem:[%s267] sm:$0xff]
      %v269 = vld [vmem:[%s235] sm:$0xff]
      %v270 = vld [vmem:[%s235 + $0x8] sm:$0xff]
      %v271 = vld [vmem:[%s235 + $0x10] sm:$0xff]
      %v272 = vld [vmem:[%s235 + $0x18] sm:$0xff]
      %v273 = vld [vmem:[%s235 + $0x20] sm:$0xff]
      %v274 = vld [vmem:[%s235 + $0x28] sm:$0xff]
      %v275 = vld [vmem:[%s235 + $0x30] sm:$0xff]
      %v276 = vld [vmem:[%s235 + $0x38] sm:$0xff]
      %v277 = vld [vmem:[%s235 + $0x40] sm:$0xff]
      %v278 = vld [vmem:[%s235 + $0x48] sm:$0xff]
      %v279 = vld [vmem:[%s235 + $0x50] sm:$0xff]
      %v280 = vld [vmem:[%s235 + $0x58] sm:$0xff]
      %v281 = vld [vmem:[%s235 + $0x60] sm:$0xff]
      %v282 = vld [vmem:[%s235 + $0x68] sm:$0xff]
      %v283 = vld [vmem:[%s235 + $0x70] sm:$0xff]
      %v284 = vld [vmem:[%s235 + $0x78] sm:$0xff]
      %v285 = vld [vmem:[%s235 + $0x80] sm:$0xff]
      %v286 = vld [vmem:[%s235 + $0x88] sm:$0xff]
      %v287 = vld [vmem:[%s235 + $0x90] sm:$0xff]
      %v288 = vld [vmem:[%s235 + $0x98] sm:$0xff]
      %v289 = vld [vmem:[%s235 + $0xa0] sm:$0xff]
      %v290 = vld [vmem:[%s235 + $0xa8] sm:$0xff]
      %v291 = vld [vmem:[%s235 + $0xb0] sm:$0xff]
      %v292 = vld [vmem:[%s235 + $0xb8] sm:$0xff]
      %v293 = vld [vmem:[%s235 + $0xc0] sm:$0xff]
      %v294 = vld [vmem:[%s235 + $0xc8] sm:$0xff]
      %v295 = vld [vmem:[%s235 + $0xd0] sm:$0xff]
      %v296 = vld [vmem:[%s235 + $0xd8] sm:$0xff]
      %v297 = vld [vmem:[%s235 + $0xe0] sm:$0xff]
      %v298 = vld [vmem:[%s235 + $0xe8] sm:$0xff]
      %v299 = vld [vmem:[%s235 + $0xf0] sm:$0xff]
      %v300 = vld [vmem:[%s235 + $0xf8] sm:$0xff]
      %v302 = vunpack.c.l.b16 %v268
      %v303 = vunpack.c.h.b16 %v268
      %v304 = vpack.c.b16 %v302, %v302
      %v305 = vpack.c.b16 %v303, %v303
      %v340 = vunpack.c.l.b16 %v269
      %v341 = vunpack.c.h.b16 %v269
      %v342 = vunpack.c.l.b16 %v270
      %v343 = vunpack.c.h.b16 %v270
      %v344 = vunpack.c.l.b16 %v271
      %v345 = vunpack.c.h.b16 %v271
      %v346 = vunpack.c.l.b16 %v272
      %v347 = vunpack.c.h.b16 %v272
      %v348 = vunpack.c.l.b16 %v273
      %v349 = vunpack.c.h.b16 %v273
      %v350 = vunpack.c.l.b16 %v274
      %v351 = vunpack.c.h.b16 %v274
      %v352 = vunpack.c.l.b16 %v275
      %v353 = vunpack.c.h.b16 %v275
      %v354 = vunpack.c.l.b16 %v276
      %v355 = vunpack.c.h.b16 %v276
      %v356 = vunpack.c.l.b16 %v277
      %v357 = vunpack.c.h.b16 %v277
      %v358 = vunpack.c.l.b16 %v278
      %v359 = vunpack.c.h.b16 %v278
      %v360 = vunpack.c.l.b16 %v279
      %v361 = vunpack.c.h.b16 %v279
      %v362 = vunpack.c.l.b16 %v280
      %v363 = vunpack.c.h.b16 %v280
      %v364 = vunpack.c.l.b16 %v281
      %v365 = vunpack.c.h.b16 %v281
      %v366 = vunpack.c.l.b16 %v282
      %v367 = vunpack.c.h.b16 %v282
      %v368 = vunpack.c.l.b16 %v283
      %v369 = vunpack.c.h.b16 %v283
      %v370 = vunpack.c.l.b16 %v284
      %v371 = vunpack.c.h.b16 %v284
      %v372 = vunpack.c.l.b16 %v285
      %v373 = vunpack.c.h.b16 %v285
      %v374 = vunpack.c.l.b16 %v286
      %v375 = vunpack.c.h.b16 %v286
      %v376 = vunpack.c.l.b16 %v287
      %v377 = vunpack.c.h.b16 %v287
      %v378 = vunpack.c.l.b16 %v288
      %v379 = vunpack.c.h.b16 %v288
      %v380 = vunpack.c.l.b16 %v289
      %v381 = vunpack.c.h.b16 %v289
      %v382 = vunpack.c.l.b16 %v290
      %v383 = vunpack.c.h.b16 %v290
      %v384 = vunpack.c.l.b16 %v291
      %v385 = vunpack.c.h.b16 %v291
      %v386 = vunpack.c.l.b16 %v292
      %v387 = vunpack.c.h.b16 %v292
      %v388 = vunpack.c.l.b16 %v293
      %v389 = vunpack.c.h.b16 %v293
      %v390 = vunpack.c.l.b16 %v294
      %v391 = vunpack.c.h.b16 %v294
      %v392 = vunpack.c.l.b16 %v295
      %v393 = vunpack.c.h.b16 %v295
      %v394 = vunpack.c.l.b16 %v296
      %v395 = vunpack.c.h.b16 %v296
      %v396 = vunpack.c.l.b16 %v297
      %v397 = vunpack.c.h.b16 %v297
      %v398 = vunpack.c.l.b16 %v298
      %v399 = vunpack.c.h.b16 %v298
      %v400 = vunpack.c.l.b16 %v299
      %v401 = vunpack.c.h.b16 %v299
      %v402 = vunpack.c.l.b16 %v300
      %v403 = vunpack.c.h.b16 %v300
      %v404 = vpack.c.b16 %v342, %v340
      %v405 = vpack.c.b16 %v343, %v341
      %v406 = vpack.c.b16 %v346, %v344
      %v407 = vpack.c.b16 %v347, %v345
      %v408 = vpack.c.b16 %v350, %v348
      %v409 = vpack.c.b16 %v351, %v349
      %v410 = vpack.c.b16 %v354, %v352
      %v411 = vpack.c.b16 %v355, %v353
      %v412 = vpack.c.b16 %v358, %v356
      %v413 = vpack.c.b16 %v359, %v357
      %v414 = vpack.c.b16 %v362, %v360
      %v415 = vpack.c.b16 %v363, %v361
      %v416 = vpack.c.b16 %v366, %v364
      %v417 = vpack.c.b16 %v367, %v365
      %v418 = vpack.c.b16 %v370, %v368
      %v419 = vpack.c.b16 %v371, %v369
      %v420 = vpack.c.b16 %v374, %v372
      %v421 = vpack.c.b16 %v375, %v373
      %v422 = vpack.c.b16 %v378, %v376
      %v423 = vpack.c.b16 %v379, %v377
      %v424 = vpack.c.b16 %v382, %v380
      %v425 = vpack.c.b16 %v383, %v381
      %v426 = vpack.c.b16 %v386, %v384
      %v427 = vpack.c.b16 %v387, %v385
      %v428 = vpack.c.b16 %v390, %v388
      %v429 = vpack.c.b16 %v391, %v389
      %v430 = vpack.c.b16 %v394, %v392
      %v431 = vpack.c.b16 %v395, %v393
      %v432 = vpack.c.b16 %v398, %v396
      %v433 = vpack.c.b16 %v399, %v397
      %v434 = vpack.c.b16 %v402, %v400
      %v435 = vpack.c.b16 %v403, %v401
      %468 = vmatprep.subr.bf16.mxu0 %v405
      %469 = vmatpush1.bf16.msra.mxu0 %v404
      %470 = vmatprep.subr.bf16.mxu0 %v407
      %471 = vmatpush1.bf16.msra.mxu0 %v406
      %472 = vmatprep.subr.bf16.mxu0 %v409
      %473 = vmatpush1.bf16.msra.mxu0 %v408
      %474 = vmatprep.subr.bf16.mxu0 %v411
      %475 = vmatpush1.bf16.msra.mxu0 %v410
      %476 = vmatprep.subr.bf16.mxu0 %v413
      %477 = vmatpush1.bf16.msra.mxu0 %v412
      %478 = vmatprep.subr.bf16.mxu0 %v415
      %479 = vmatpush1.bf16.msra.mxu0 %v414
      %480 = vmatprep.subr.bf16.mxu0 %v417
      %481 = vmatpush1.bf16.msra.mxu0 %v416
      %482 = vmatprep.subr.bf16.mxu0 %v419
      %483 = vmatpush1.bf16.msra.mxu0 %v418
      %484 = vmatprep.subr.bf16.mxu0 %v421
      %485 = vmatpush1.bf16.msra.mxu0 %v420
      %486 = vmatprep.subr.bf16.mxu0 %v423
      %487 = vmatpush1.bf16.msra.mxu0 %v422
      %488 = vmatprep.subr.bf16.mxu0 %v425
      %489 = vmatpush1.bf16.msra.mxu0 %v424
      %490 = vmatprep.subr.bf16.mxu0 %v427
      %491 = vmatpush1.bf16.msra.mxu0 %v426
      %492 = vmatprep.subr.bf16.mxu0 %v429
      %493 = vmatpush1.bf16.msra.mxu0 %v428
      %494 = vmatprep.subr.bf16.mxu0 %v431
      %495 = vmatpush1.bf16.msra.mxu0 %v430
      %496 = vmatprep.subr.bf16.mxu0 %v433
      %497 = vmatpush1.bf16.msra.mxu0 %v432
      %498 = vmatprep.subr.bf16.mxu0 %v435
      %499 = vmatpush1.bf16.msra.mxu0 %v434
      %500 = vmatprep.mubr.bf16.mxu0 %v305
      %501 = vmatmul.mubr.bf16.gmra.mrb[0].mxu0 %v304
      %v502 = vpop.f32.mrb[0].mxu0
      %v503 = vadd.f32 0.0, %v502
      %v504 = vpop.f32.mrb[0].mxu0
      %v505 = vadd.f32 0.0, %v504
      %v506 = vpop.f32.mrb[0].mxu0
      %v507 = vpop.f32.mrb[0].mxu0
      %508 = vdwg.mxu0
      %v509 = vadd.f32 %v262, %v503
      %v510 = vadd.f32 %v263, %v505
      %511 = vst [vmem:[%s246] sm:$0xff] %v509
      %512 = vst [vmem:[%s246 + $0x8] sm:$0xff] %v510
      // Predicated region
      $region33: #{vae_forward.15} parent=27 // pred_check
        %p513 = pneg %p255
      $region34: #{vae_forward.15} parent=27 // pred_check_branch
        %515 = sbr.rel (%p513) target = $region36
      $region35: #{vae_forward.15} parent=27 // pred_region
        %v516 = vld [vmem:[%s246] sm:$0xff]
        %v517 = vld [vmem:[%s246 + $0x8] sm:$0xff]
        %v518 = vadd.f32 %v516, %v517
        %519 = vadd.xlane.f32.xlu0 %v518
        %v520 = vpop.xlane.xlu0 %519
        %vm521 = vcmask 7168
        %522 = vst.msk [vmem:[%s254] sm:$0xff] %vm521, %v520
        %v523 = vmul.f32 %v516, %v516
        %v524 = vmul.f32 %v517, %v517
        %v525 = vadd.f32 %v523, %v524
        %526 = vadd.xlane.f32.xlu0 %v525
        %v527 = vpop.xlane.xlu0 %526
        %vm528 = vcmask 15368
        %529 = vst.msk [vmem:[%s254] sm:$0xff] %vm528, %v527
      $region36: #{vae_forward.15} parent=27 // pred_fallthru
        _
      %s530 = smul.u32 2, %s21
      %p531 = scmp.lt.s32.totalorder %s20, 1
      %s532 = scalar_select %p531, %s20, 1
      %p533 = scmp.lt.s32.totalorder %s530, 1
      %s534 = scalar_select %p533, %s530, 1
      %s535 = smul.addr %s532, 2
      %s536 = sadd.s32 %s534, %s535
      %s537 = smul.addr %s536, 8
      %s538 = scalar_lea.vmem %s2, %s537
      %p539 = scmp.lt.s32.totalorder %s20, 1
      %s540 = scalar_select %p539, %s20, 1
      %p541 = scmp.lt.s32.totalorder %s21, 0
      %s542 = scalar_select %p541, %s21, 0
      %s543 = sadd.s32 %s542, %s540
      %s544 = smul.addr %s543, 8
      %s545 = scalar_lea.vmem %s3, %s544
      // Predicated region
      $region37: #{vae_forward.15} parent=27 // pred_check
        %p546 = pneg %p105
      $region38: #{vae_forward.15} parent=27 // pred_check_branch
        %548 = sbr.rel (%p546) target = $region40
      $region39: #{vae_forward.15} parent=27 // pred_region
        %s549 = smul.u32 2, %s21
      $region40: #{vae_forward.15} parent=27 // pred_fallthru
        _
      // Predicated region
      $region41: #{vae_forward.15} parent=27 // pred_check
        %p550 = pneg %p133
      $region42: #{vae_forward.15} parent=27 // pred_check_branch
        %552 = sbr.rel (%p550) target = $region44
      $region43: #{vae_forward.15} parent=27 // pred_region
        _
      $region44: #{vae_forward.15} parent=27 // pred_fallthru
        _
    $region28: #{vae_forward.15} parent=5 // pred_fallthru
      _
    %p553 = scmp.le.s32.totalorder 2, %s10
    // Predicated region
    $region45: #{vae_forward.15} parent=5 // pred_check
      %p554 = pneg %p553
    $region46: #{vae_forward.15} parent=5 // pred_check_branch
      %556 = sbr.rel (%p554) target = $region48
    $region47: #{vae_forward.15} parent=5 // pred_region
      %s557 = ssub.s32 %s10, 2
      // Predicated region
      $region49: #{vae_forward.15} parent=47 // pred_check
        %p558 = pneg %p111
      $region50: #{vae_forward.15} parent=47 // pred_check_branch
        %560 = sbr.rel (%p558) target = $region52
      $region51: #{vae_forward.15} parent=47 // pred_region
        %s561 = smul.u32 2, %s24
        %p562 = scmp.lt.s32.totalorder %s23, 1
        %s563 = scalar_select %p562, %s23, 1
        %p564 = scmp.lt.s32.totalorder %s561, 1
        %s565 = scalar_select %p564, %s561, 1
        %s566 = smul.addr %s563, 2
        %s567 = sadd.s32 %s565, %s566
        %s568 = smul.addr %s567, 8
        %s569 = scalar_lea.vmem %s2, %s568
      $region52: #{vae_forward.15} parent=47 // pred_fallthru
        _
      // Predicated region
      $region53: #{vae_forward.15} parent=47 // pred_check
        %p570 = pneg %p139
      $region54: #{vae_forward.15} parent=47 // pred_check_branch
        %572 = sbr.rel (%p570) target = $region56
      $region55: #{vae_forward.15} parent=47 // pred_region
        %p573 = scmp.lt.s32.totalorder %s23, 1
        %s574 = scalar_select %p573, %s23, 1
        %p575 = scmp.lt.s32.totalorder %s24, 0
        %s576 = scalar_select %p575, %s24, 0
        %s577 = sadd.s32 %s576, %s574
        %s578 = smul.addr %s577, 8
        %s579 = scalar_lea.vmem %s3, %s578
      $region56: #{vae_forward.15} parent=47 // pred_fallthru
        _
    $region48: #{vae_forward.15} parent=5 // pred_fallthru
      _
  $region6: #{vae_forward.15} parent=0 // loop_footer
    %s14 = sadd.s32 1, %s10
  $region7: #{vae_forward.15} parent=0 // loop_footer_branch
    %9 = sbr.rel target = $region3
  $region8: #{vae_forward.15} parent=0 // loop_exit
    _

// kernel: vae_forward.17
$region0: #{vae_forward.17}
  #allocation0 [shape = 'u32[]', space=smem, size = 0x4, offset = 0x4, fixed_abs, tag = 'smem constant byte address 0x4 - core index']
  #allocation1 [shape = 'u32[144,128]{1,0:T(1,128)}', space=vmem, size = 0x12000, scoped, tag = 'internal scratch']
  %s0 = inlined_call_operand.vmem [shape: bf16[16,128], index: 0, kind: input, shape index: {}]
  %s1 = inlined_call_operand.vmem [shape: bf16[2,128,64], index: 1, kind: input, shape index: {}]
  %s2 = inlined_call_operand.vmem [shape: f32[2,16,64], index: 2, kind: output, shape index: {0}]
  %s3 = inlined_call_operand.vmem [shape: f32[2,1,16,2], index: 3, kind: output, shape index: {1}]
  %4 = xla_tuple %s2, %s3
  %s5 = sld [smem:[#allocation0]]
  $region57: #{vae_forward.17} parent=0
    _
  %s7 = ssub.s32 1, %s5
  %s8 = scalar_select 0, %s7, %s5
  loop: start=0, step=1, limit=4
  $region2: #{vae_forward.17} parent=0 // loop_pre_header
    _
  $region3: #{vae_forward.17} parent=0 // loop_header
    %s10 = sphi 0, %s14
    %p11 = scmp.ge.s32.totalorder %s10, 4
    %s17 = sphi 0, %s36
    %s18 = sphi 0, %s32
    %s19 = sphi 0, %s28
    %s20 = sphi 0, %s17
    %s21 = sphi 0, %s18
    %s22 = sphi 0, %s19
    %s23 = sphi 0, %s20
    %s24 = sphi 0, %s21
    %s25 = sphi 0, %s22
    %s37 = sphi 0, %s37
    %s39 = sphi 0, %s37
    %s40 = sphi 0, %s39
    %s54 = sphi 0, %s40
    %s64 = sphi 0, %s66
    %s67 = sphi 0, %s64
    %s68 = sphi 0, %s67
    %s84 = sphi 0, %s68
    %s92 = sphi 0, %s94
    %s95 = sphi 0, %s92
    %s96 = sphi 0, %s95
    %s112 = sphi 0, %s96
    %s120 = sphi 0, %s122
    %s123 = sphi 0, %s120
    %s124 = sphi 0, %s123
    %s140 = sphi 0, %s124
  $region4: #{vae_forward.17} parent=0 // loop_header_branch
    %13 = sbr.rel (%p11) target = $region8
  $region5: #{vae_forward.17} parent=0 // loop_body
    %s15 = ssub.s32 %s10, 1
    %s16 = ssub.s32 %s10, 2
    %s26 = sadd.s32 1, %s19
    %p27 = scmp.ge.s32.totalorder %s26, 1
    %s28 = scalar_select %p27, 0, %s26
    %s29 = sadd.s32 1, %s18
    %s30 = scalar_select %p27, %s29, %s18
    %p31 = scmp.ge.s32.totalorder %s30, 1
    %s32 = scalar_select %p31, 0, %s30
    %s33 = sadd.s32 1, %s17
    %s34 = scalar_select %p31, %s33, %s17
    %p35 = scmp.ge.s32.totalorder %s34, 2
    %s36 = scalar_select %p35, 0, %s34
    %s38 = sadd.s32 %s37, 1
    %p41 = scmp.eq.s32.totalorder %s10, 1
    %p42 = scmp.ne.s32.totalorder %s37, %s39
    %p43 = scmp.eq.s32.totalorder %s10, 0
    %p44 = por %p42, %p43
    %p45 = scmp.ne.s32.totalorder %s37, %s39
    %p46 = scmp.eq.s32.totalorder %s15, 1
    %p47 = por %p45, %p46
    %p48 = scmp.ne.s32.totalorder %s39, %s40
    %p49 = scmp.eq.s32.totalorder %s15, 0
    %p50 = por %p48, %p49
    %p51 = scmp.ne.s32.totalorder %s39, %s40
    %p52 = scmp.eq.s32.totalorder %s16, 1
    %p53 = por %p51, %p52
    %p55 = scmp.ne.s32.totalorder %s40, %s54
    %p56 = scmp.eq.s32.totalorder %s16, 0
    %p57 = por %p55, %p56
    %s58 = ssub.s32 %s17, %s36
    %s59 = ssub.s32 %s19, %s28
    %s60 = sor.u32 %s58, %s59
    %s61 = ssub.s32 %s18, %s32
    %s62 = sor.u32 %s60, %s61
    %p63 = scmp.eq.s32.totalorder %s62, 0
    %s65 = sadd.s32 %s64, 1
    %s66 = scalar_select %p63, %s64, %s65
    %p69 = pneg %p63
    %p70 = scmp.eq.s32.totalorder %s10, 1
    %p71 = por %p69, %p70
    %p72 = scmp.ne.s32.totalorder %s64, %s67
    %p73 = scmp.eq.s32.totalorder %s10, 0
    %p74 = por %p72, %p73
    %p75 = scmp.ne.s32.totalorder %s64, %s67
    %p76 = scmp.eq.s32.totalorder %s15, 1
    %p77 = por %p75, %p76
    %p78 = scmp.ne.s32.totalorder %s67, %s68
    %p79 = scmp.eq.s32.totalorder %s15, 0
    %p80 = por %p78, %p79
    %p81 = scmp.ne.s32.totalorder %s67, %s68
    %p82 = scmp.eq.s32.totalorder %s16, 1
    %p83 = por %p81, %p82
    %p85 = scmp.ne.s32.totalorder %s68, %s84
    %p86 = scmp.eq.s32.totalorder %s16, 0
    %p87 = por %p85, %p86
    %s88 = ssub.s32 %s17, %s36
    %s89 = ssub.s32 %s18, %s32
    %s90 = sor.u32 %s88, %s89
    %p91 = scmp.eq.s32.totalorder %s90, 0
    %s93 = sadd.s32 %s92, 1
    %s94 = scalar_select %p91, %s92, %s93
    %p97 = pneg %p91
    %p98 = scmp.eq.s32.totalorder %s10, 1
    %p99 = por %p97, %p98
    %p100 = scmp.ne.s32.totalorder %s92, %s95
    %p101 = scmp.eq.s32.totalorder %s10, 0
    %p102 = por %p100, %p101
    %p103 = scmp.ne.s32.totalorder %s92, %s95
    %p104 = scmp.eq.s32.totalorder %s15, 1
    %p105 = por %p103, %p104
    %p106 = scmp.ne.s32.totalorder %s95, %s96
    %p107 = scmp.eq.s32.totalorder %s15, 0
    %p108 = por %p106, %p107
    %p109 = scmp.ne.s32.totalorder %s95, %s96
    %p110 = scmp.eq.s32.totalorder %s16, 1
    %p111 = por %p109, %p110
    %p113 = scmp.ne.s32.totalorder %s96, %s112
    %p114 = scmp.eq.s32.totalorder %s16, 0
    %p115 = por %p113, %p114
    %s116 = ssub.s32 %s17, %s36
    %s117 = ssub.s32 %s18, %s32
    %s118 = sor.u32 %s116, %s117
    %p119 = scmp.eq.s32.totalorder %s118, 0
    %s121 = sadd.s32 %s120, 1
    %s122 = scalar_select %p119, %s120, %s121
    %p125 = pneg %p119
    %p126 = scmp.eq.s32.totalorder %s10, 1
    %p127 = por %p125, %p126
    %p128 = scmp.ne.s32.totalorder %s120, %s123
    %p129 = scmp.eq.s32.totalorder %s10, 0
    %p130 = por %p128, %p129
    %p131 = scmp.ne.s32.totalorder %s120, %s123
    %p132 = scmp.eq.s32.totalorder %s15, 1
    %p133 = por %p131, %p132
    %p134 = scmp.ne.s32.totalorder %s123, %s124
    %p135 = scmp.eq.s32.totalorder %s15, 0
    %p136 = por %p134, %p135
    %p137 = scmp.ne.s32.totalorder %s123, %s124
    %p138 = scmp.eq.s32.totalorder %s16, 1
    %p139 = por %p137, %p138
    %p141 = scmp.ne.s32.totalorder %s124, %s140
    %p142 = scmp.eq.s32.totalorder %s16, 0
    %p143 = por %p141, %p142
    %p144 = scmp.le.s32.totalorder 1, %s10
    %p145 = scmp.lt.s32.totalorder %s10, 3
    %p146 = pnand %p144, %p145
    %p147 = pneg %p146
    // Predicated region
    $region9: #{vae_forward.17} parent=5 // pred_check
      _
    $region10: #{vae_forward.17} parent=5 // pred_check_branch
      %149 = sbr.rel (%p146) target = $region12
    $region11: #{vae_forward.17} parent=5 // pred_region
      %s150 = ssub.s32 %s10, 1
      // Predicated region
      $region13: #{vae_forward.17} parent=11 // pred_check
        %p151 = pneg %p50
      $region14: #{vae_forward.17} parent=11 // pred_check_branch
        %153 = sbr.rel (%p151) target = $region16
      $region15: #{vae_forward.17} parent=11 // pred_region
        _
      $region16: #{vae_forward.17} parent=11 // pred_fallthru
        _
    $region12: #{vae_forward.17} parent=5 // pred_fallthru
      _
    %p154 = scmp.lt.s32.totalorder %s10, 2
    // Predicated region
    $region17: #{vae_forward.17} parent=5 // pred_check
      %p155 = pneg %p154
    $region18: #{vae_forward.17} parent=5 // pred_check_branch
      %157 = sbr.rel (%p155) target = $region20
    $region19: #{vae_forward.17} parent=5 // pred_region
      // Predicated region
      $region21: #{vae_forward.17} parent=19 // pred_check
        %p158 = pneg %p74
      $region22: #{vae_forward.17} parent=19 // pred_check_branch
        %160 = sbr.rel (%p158) target = $region24
      $region23: #{vae_forward.17} parent=19 // pred_region
        %s161 = smul.u32 16, %s19
        %p162 = scmp.lt.s32.totalorder %s17, 1
        %s163 = scalar_select %p162, %s17, 1
        %p164 = scmp.lt.s32.totalorder %s161, 15
        %s165 = scalar_select %p164, %s161, 15
        %p166 = scmp.lt.s32.totalorder %s18, 0
        %s167 = scalar_select %p166, %s18, 0
        %s168 = sadd.s32 %s167, %s165
        %s169 = smul.addr %s163, 16
        %s170 = sadd.s32 %s168, %s169
        %s171 = smul.addr %s170, 4
        %s172 = scalar_lea.vmem %s1, %s171
        %s173 = smul.u32 16, %s19
      $region24: #{vae_forward.17} parent=19 // pred_fallthru
        _
    $region20: #{vae_forward.17} parent=5 // pred_fallthru
      _
    %p174 = scmp.le.s32.totalorder 1, %s10
    %p175 = scmp.lt.s32.totalorder %s10, 3
    %p176 = pnand %p174, %p175
    %p177 = pneg %p176
    // Predicated region
    $region25: #{vae_forward.17} parent=5 // pred_check
      _
    $region26: #{vae_forward.17} parent=5 // pred_check_branch
      %179 = sbr.rel (%p176) target = $region28
    $region27: #{vae_forward.17} parent=5 // pred_region
      %s180 = ssub.s32 %s10, 1
      %p181 = pneg %p50
      %p182 = pneg %p47
      %s183 = smul.u32 16, %s22
      %p184 = scmp.lt.s32.totalorder %s20, 1
      %s185 = scalar_select %p184, %s20, 1
      %p186 = scmp.lt.s32.totalorder %s183, 15
      %s187 = scalar_select %p186, %s183, 15
      %p188 = scmp.lt.s32.totalorder %s21, 0
      %s189 = scalar_select %p188, %s21, 0
      %s190 = sadd.s32 %s189, %s187
      %s191 = smul.addr %s185, 16
      %s192 = sadd.s32 %s190, %s191
      %s193 = smul.addr %s192, 4
      %s194 = scalar_lea.vmem %s1, %s193
      %p195 = pneg %p80
      %p196 = pneg %p77
      %p197 = pneg %p108
      %p198 = pneg %p105
      %p199 = scmp.lt.s32.totalorder %s20, 1
      %s200 = scalar_select %p199, %s20, 1
      %p201 = scmp.lt.s32.totalorder %s21, 0
      %s202 = scalar_select %p201, %s21, 0
      %s203 = smul.addr %s200, 2
      %s204 = sadd.s32 %s202, %s203
      %s205 = smul.addr %s204, 8
      %s206 = scalar_lea.vmem %s2, %s205
      %p207 = pneg %p136
      %p208 = pneg %p133
      %p209 = scmp.lt.s32.totalorder %s20, 1
      %s210 = scalar_select %p209, %s20, 1
      %p211 = scmp.lt.s32.totalorder %s21, 0
      %s212 = scalar_select %p211, %s21, 0
      %s213 = smul.addr %s212, 2
      %s214 = smul.addr %s210, 2
      %s215 = sadd.s32 %s213, %s214
      %s216 = smul.addr %s215, 8
      %s217 = scalar_lea.vmem %s3, %s216
      %s218 = smul.u32 16, %s22
      %p219 = scmp.lt.s32.totalorder %s20, 1
      %s220 = scalar_select %p219, %s20, 1
      %p221 = scmp.lt.s32.totalorder %s218, 15
      %s222 = scalar_select %p221, %s218, 15
      %p223 = scmp.lt.s32.totalorder %s21, 0
      %s224 = scalar_select %p223, %s21, 0
      %s225 = sadd.s32 %s224, %s222
      %s226 = smul.addr %s220, 16
      %s227 = sadd.s32 %s225, %s226
      %s228 = smul.addr %s227, 4
      %s229 = scalar_lea.vmem %s1, %s228
      %s230 = smul.u32 16, %s22
      %p231 = scmp.lt.s32.totalorder %s20, 1
      %s232 = scalar_select %p231, %s20, 1
      %p233 = scmp.lt.s32.totalorder %s21, 0
      %s234 = scalar_select %p233, %s21, 0
      %s235 = smul.addr %s232, 2
      %s236 = sadd.s32 %s234, %s235
      %s237 = smul.addr %s236, 8
      %s238 = scalar_lea.vmem %s2, %s237
      %p239 = scmp.lt.s32.totalorder %s20, 1
      %s240 = scalar_select %p239, %s20, 1
      %p241 = scmp.lt.s32.totalorder %s21, 0
      %s242 = scalar_select %p241, %s21, 0
      %s243 = smul.addr %s242, 2
      %s244 = smul.addr %s240, 2
      %s245 = sadd.s32 %s243, %s244
      %s246 = smul.addr %s245, 8
      %s247 = scalar_lea.vmem %s3, %s246
      %p249 = scmp.eq.s32.totalorder %s22, 0
      // Predicated region
      $region29: #{vae_forward.17} parent=27 // pred_check
        %p250 = pneg %p249
      $region30: #{vae_forward.17} parent=27 // pred_check_branch
        %252 = sbr.rel (%p250) target = $region32
      $region31: #{vae_forward.17} parent=27 // pred_region
        %vm253 = vcmask 523264
        %254 = vst.msk [vmem:[%s238] sm:$0xff] %vm253, 0.0
        %255 = vst.msk [vmem:[%s238 + $0x8] sm:$0xff] %vm253, 0.0
      $region32: #{vae_forward.17} parent=27 // pred_fallthru
        _
      %s256 = smul.u32 %s22, 128
      %v257 = vld [vmem:[%s238] sm:$0xff]
      %v258 = vld [vmem:[%s238 + $0x8] sm:$0xff]
      %s259 = sshra.s32 %s256, 7
      %s260 = sand.u32 %s256, 127
      %s261 = smul.addr %s259, 4
      %s262 = scalar_lea.vmem %s0, %s261
      %v263 = vld [vmem:[%s262] sm:$0xf]
      %v264 = vld [vmem:[%s262 + $0x4] sm:$0xf]
      %v265 = vld [vmem:[%s229] sm:$0xf]
      %v266 = vld [vmem:[%s229 + $0x4] sm:$0xf]
      %v267 = vld [vmem:[%s229 + $0x8] sm:$0xf]
      %v268 = vld [vmem:[%s229 + $0xc] sm:$0xf]
      %v269 = vld [vmem:[%s229 + $0x10] sm:$0xf]
      %v270 = vld [vmem:[%s229 + $0x14] sm:$0xf]
      %v271 = vld [vmem:[%s229 + $0x18] sm:$0xf]
      %v272 = vld [vmem:[%s229 + $0x1c] sm:$0xf]
      %v273 = vld [vmem:[%s229 + $0x20] sm:$0xf]
      %v274 = vld [vmem:[%s229 + $0x24] sm:$0xf]
      %v275 = vld [vmem:[%s229 + $0x28] sm:$0xf]
      %v276 = vld [vmem:[%s229 + $0x2c] sm:$0xf]
      %v277 = vld [vmem:[%s229 + $0x30] sm:$0xf]
      %v278 = vld [vmem:[%s229 + $0x34] sm:$0xf]
      %v279 = vld [vmem:[%s229 + $0x38] sm:$0xf]
      %v280 = vld [vmem:[%s229 + $0x3c] sm:$0xf]
      %v283 = vunpack.c.l.b16 %v263
      %v284 = vunpack.c.l.b16 %v264
      %v285 = vpack.c.b16 %v284, %v283
      %v303 = vunpack.c.l.b16 %v265
      %v304 = vunpack.c.l.b16 %v266
      %v305 = vunpack.c.l.b16 %v267
      %v306 = vunpack.c.l.b16 %v268
      %v307 = vunpack.c.l.b16 %v269
      %v308 = vunpack.c.l.b16 %v270
      %v309 = vunpack.c.l.b16 %v271
      %v310 = vunpack.c.l.b16 %v272
      %v311 = vunpack.c.l.b16 %v273
      %v312 = vunpack.c.l.b16 %v274
      %v313 = vunpack.c.l.b16 %v275
      %v314 = vunpack.c.l.b16 %v276
      %v315 = vunpack.c.l.b16 %v277
      %v316 = vunpack.c.l.b16 %v278
      %v317 = vunpack.c.l.b16 %v279
      %v318 = vunpack.c.l.b16 %v280
      %v319 = vpack.c.b16 %v304, %v303
      %v320 = vpack.c.b16 %v306, %v305
      %v321 = vpack.c.b16 %v308, %v307
      %v322 = vpack.c.b16 %v310, %v309
      %v323 = vpack.c.b16 %v312, %v311
      %v324 = vpack.c.b16 %v314, %v313
      %v325 = vpack.c.b16 %v316, %v315
      %v326 = vpack.c.b16 %v318, %v317
      %335 = vmatprep.subr.bf16.mxu0 0
      %336 = vmatpush1.bf16.msra.mxu0 %v319
      %337 = vmatprep.subr.bf16.mxu0 0
      %338 = vmatpush1.bf16.msra.mxu0 %v320
      %339 = vmatprep.subr.bf16.mxu0 0
      %340 = vmatpush1.bf16.msra.mxu0 %v321
      %341 = vmatprep.subr.bf16.mxu0 0
      %342 = vmatpush1.bf16.msra.mxu0 %v322
      %343 = vmatprep.subr.bf16.mxu0 0
      %344 = vmatpush1.bf16.msra.mxu0 %v323
      %345 = vmatprep.subr.bf16.mxu0 0
      %346 = vmatpush1.bf16.msra.mxu0 %v324
      %347 = vmatprep.subr.bf16.mxu0 0
      %348 = vmatpush1.bf16.msra.mxu0 %v325
      %349 = vmatprep.subr.bf16.mxu0 0
      %350 = vmatpush1.bf16.msra.mxu0 %v326
      %351 = vmatprep.subr.bf16.mxu0 0
      %352 = vmatpush1.bf16.msra.mxu0 0
      %353 = vmatprep.subr.bf16.mxu0 0
      %354 = vmatpush1.bf16.msra.mxu0 0
      %355 = vmatprep.subr.bf16.mxu0 0
      %356 = vmatpush1.bf16.msra.mxu0 0
      %357 = vmatprep.subr.bf16.mxu0 0
      %358 = vmatpush1.bf16.msra.mxu0 0
      %359 = vmatprep.subr.bf16.mxu0 0
      %360 = vmatpush1.bf16.msra.mxu0 0
      %361 = vmatprep.subr.bf16.mxu0 0
      %362 = vmatpush1.bf16.msra.mxu0 0
      %363 = vmatprep.subr.bf16.mxu0 0
      %364 = vmatpush1.bf16.msra.mxu0 0
      %365 = vmatprep.subr.bf16.mxu0 0
      %366 = vmatpush1.bf16.msra.mxu0 0
      %367 = vmatprep.mubr.bf16.mxu0 0
      %368 = vmatmul.mubr.bf16.gmra.mrb[0].mxu0 %v285
      %v369 = vpop.f32.mrb[0].mxu0
      %v370 = vadd.f32 0.0, %v369
      %v371 = vpop.f32.mrb[0].mxu0
      %v372 = vpop.f32.mrb[0].mxu0
      %v373 = vadd.f32 0.0, %v372
      %v374 = vpop.f32.mrb[0].mxu0
      %375 = vdwg.mxu0
      %v376 = vadd.f32 %v257, %v370
      %v377 = vadd.f32 %v258, %v373
      %vm378 = vcmask 523264
      %379 = vst.msk [vmem:[%s238] sm:$0xff] %vm378, %v376
      %380 = vst.msk [vmem:[%s238 + $0x8] sm:$0xff] %vm378, %v377
      // Predicated region
      $region33: #{vae_forward.17} parent=27 // pred_check
        %p381 = pneg %p249
      $region34: #{vae_forward.17} parent=27 // pred_check_branch
        %383 = sbr.rel (%p381) target = $region36
      $region35: #{vae_forward.17} parent=27 // pred_region
        %v384 = vld [vmem:[%s238] sm:$0xff]
        %v385 = vld [vmem:[%s238 + $0x8] sm:$0xff]
        %v386 = vsel %vm378, %v384, 0.0
        %387 = vadd.xlane.f32.xlu0 %v386
        %v388 = vpop.xlane.xlu0 %387
        %v389 = vsel %vm378, %v385, 0.0
        %390 = vadd.xlane.f32.xlu0 %v389
        %v391 = vpop.xlane.xlu0 %390
        %vm392 = vcmask 7168
        %393 = vst.msk [vmem:[%s247] sm:$0xff] %vm392, %v388
        %394 = vst.msk [vmem:[%s247 + $0x8] sm:$0xff] %vm392, %v391
        %v395 = vmul.f32 %v384, %v384
        %v396 = vmul.f32 %v385, %v385
        %v397 = vsel %vm378, %v395, 0.0
        %398 = vadd.xlane.f32.xlu0 %v397
        %v399 = vpop.xlane.xlu0 %398
        %v400 = vsel %vm378, %v396, 0.0
        %401 = vadd.xlane.f32.xlu0 %v400
        %v402 = vpop.xlane.xlu0 %401
        %vm403 = vcmask 15368
        %404 = vst.msk [vmem:[%s247] sm:$0xff] %vm403, %v399
        %405 = vst.msk [vmem:[%s247 + $0x8] sm:$0xff] %vm403, %v402
      $region36: #{vae_forward.17} parent=27 // pred_fallthru
        _
      %p406 = scmp.lt.s32.totalorder %s20, 1
      %s407 = scalar_select %p406, %s20, 1
      %p408 = scmp.lt.s32.totalorder %s21, 0
      %s409 = scalar_select %p408, %s21, 0
      %s410 = smul.addr %s407, 2
      %s411 = sadd.s32 %s409, %s410
      %s412 = smul.addr %s411, 8
      %s413 = scalar_lea.vmem %s2, %s412
      %p414 = scmp.lt.s32.totalorder %s20, 1
      %s415 = scalar_select %p414, %s20, 1
      %p416 = scmp.lt.s32.totalorder %s21, 0
      %s417 = scalar_select %p416, %s21, 0
      %s418 = smul.addr %s417, 2
      %s419 = smul.addr %s415, 2
      %s420 = sadd.s32 %s418, %s419
      %s421 = smul.addr %s420, 8
      %s422 = scalar_lea.vmem %s3, %s421
      // Predicated region
      $region37: #{vae_forward.17} parent=27 // pred_check
        %p423 = pneg %p105
      $region38: #{vae_forward.17} parent=27 // pred_check_branch
        %425 = sbr.rel (%p423) target = $region40
      $region39: #{vae_forward.17} parent=27 // pred_region
        _
      $region40: #{vae_forward.17} parent=27 // pred_fallthru
        _
      // Predicated region
      $region41: #{vae_forward.17} parent=27 // pred_check
        %p426 = pneg %p133
      $region42: #{vae_forward.17} parent=27 // pred_check_branch
        %428 = sbr.rel (%p426) target = $region44
      $region43: #{vae_forward.17} parent=27 // pred_region
        _
      $region44: #{vae_forward.17} parent=27 // pred_fallthru
        _
    $region28: #{vae_forward.17} parent=5 // pred_fallthru
      _
    %p429 = scmp.le.s32.totalorder 2, %s10
    // Predicated region
    $region45: #{vae_forward.17} parent=5 // pred_check
      %p430 = pneg %p429
    $region46: #{vae_forward.17} parent=5 // pred_check_branch
      %432 = sbr.rel (%p430) target = $region48
    $region47: #{vae_forward.17} parent=5 // pred_region
      %s433 = ssub.s32 %s10, 2
      // Predicated region
      $region49: #{vae_forward.17} parent=47 // pred_check
        %p434 = pneg %p111
      $region50: #{vae_forward.17} parent=47 // pred_check_branch
        %436 = sbr.rel (%p434) target = $region52
      $region51: #{vae_forward.17} parent=47 // pred_region
        %p437 = scmp.lt.s32.totalorder %s23, 1
        %s438 = scalar_select %p437, %s23, 1
        %p439 = scmp.lt.s32.totalorder %s24, 0
        %s440 = scalar_select %p439, %s24, 0
        %s441 = smul.addr %s438, 2
        %s442 = sadd.s32 %s440, %s441
        %s443 = smul.addr %s442, 8
        %s444 = scalar_lea.vmem %s2, %s443
      $region52: #{vae_forward.17} parent=47 // pred_fallthru
        _
      // Predicated region
      $region53: #{vae_forward.17} parent=47 // pred_check
        %p445 = pneg %p139
      $region54: #{vae_forward.17} parent=47 // pred_check_branch
        %447 = sbr.rel (%p445) target = $region56
      $region55: #{vae_forward.17} parent=47 // pred_region
        %p448 = scmp.lt.s32.totalorder %s23, 1
        %s449 = scalar_select %p448, %s23, 1
        %p450 = scmp.lt.s32.totalorder %s24, 0
        %s451 = scalar_select %p450, %s24, 0
        %s452 = smul.addr %s451, 2
        %s453 = smul.addr %s449, 2
        %s454 = sadd.s32 %s452, %s453
        %s455 = smul.addr %s454, 8
        %s456 = scalar_lea.vmem %s3, %s455
      $region56: #{vae_forward.17} parent=47 // pred_fallthru
        _
    $region48: #{vae_forward.17} parent=5 // pred_fallthru
      _
  $region6: #{vae_forward.17} parent=0 // loop_footer
    %s14 = sadd.s32 1, %s10
  $region7: #{vae_forward.17} parent=0 // loop_footer_branch
    %9 = sbr.rel target = $region3
  $region8: #{vae_forward.17} parent=0 // loop_exit
    _

// kernel: vae_forward.18
$region0: #{vae_forward.18}
  #allocation0 [shape = 'u32[]', space=smem, size = 0x4, offset = 0x4, fixed_abs, tag = 'smem constant byte address 0x4 - core index']
  #allocation1 [shape = 'u32[144,128]{1,0:T(1,128)}', space=vmem, size = 0x12000, scoped, tag = 'internal scratch']
  %s0 = inlined_call_operand.vmem [shape: f32[2,16,64], index: 0, kind: input, shape index: {}]
  %s1 = inlined_call_operand.vmem [shape: f32[2,16,2], index: 1, kind: input, shape index: {}]
  %s2 = inlined_call_operand.vmem [shape: bf16[2,16,64], index: 2, kind: output, shape index: {}]
  %s3 = sld [smem:[#allocation0]]
  $region41: #{vae_forward.18} parent=0
    _
  %s5 = ssub.s32 1, %s3
  %s6 = scalar_select 0, %s5, %s3
  loop: start=0, step=1, limit=4
  $region2: #{vae_forward.18} parent=0 // loop_pre_header
    _
  $region3: #{vae_forward.18} parent=0 // loop_header
    %s8 = sphi 0, %s12
    %p9 = scmp.ge.s32.totalorder %s8, 4
    %s15 = sphi 0, %s27
    %s16 = sphi 0, %s23
    %s17 = sphi 0, %s15
    %s18 = sphi 0, %s16
    %s19 = sphi 0, %s17
    %s20 = sphi 0, %s18
    %s32 = sphi 0, %s34
    %s35 = sphi 0, %s32
    %s36 = sphi 0, %s35
    %s52 = sphi 0, %s36
    %s58 = sphi 0, %s60
    %s61 = sphi 0, %s58
    %s62 = sphi 0, %s61
    %s78 = sphi 0, %s62
    %s86 = sphi 0, %s88
    %s89 = sphi 0, %s86
    %s90 = sphi 0, %s89
    %s106 = sphi 0, %s90
  $region4: #{vae_forward.18} parent=0 // loop_header_branch
    %11 = sbr.rel (%p9) target = $region8
  $region5: #{vae_forward.18} parent=0 // loop_body
    %s13 = ssub.s32 %s8, 1
    %s14 = ssub.s32 %s8, 2
    %s21 = sadd.s32 1, %s16
    %p22 = scmp.ge.s32.totalorder %s21, 1
    %s23 = scalar_select %p22, 0, %s21
    %s24 = sadd.s32 1, %s15
    %s25 = scalar_select %p22, %s24, %s15
    %p26 = scmp.ge.s32.totalorder %s25, 2
    %s27 = scalar_select %p26, 0, %s25
    %s28 = ssub.s32 %s15, %s27
    %s29 = ssub.s32 %s16, %s23
    %s30 = sor.u32 %s28, %s29
    %p31 = scmp.eq.s32.totalorder %s30, 0
    %s33 = sadd.s32 %s32, 1
    %s34 = scalar_select %p31, %s32, %s33
    %p37 = pneg %p31
    %p38 = scmp.eq.s32.totalorder %s8, 1
    %p39 = por %p37, %p38
    %p40 = scmp.ne.s32.totalorder %s32, %s35
    %p41 = scmp.eq.s32.totalorder %s8, 0
    %p42 = por %p40, %p41
    %p43 = scmp.ne.s32.totalorder %s32, %s35
    %p44 = scmp.eq.s32.totalorder %s13, 1
    %p45 = por %p43, %p44
    %p46 = scmp.ne.s32.totalorder %s35, %s36
    %p47 = scmp.eq.s32.totalorder %s13, 0
    %p48 = por %p46, %p47
    %p49 = scmp.ne.s32.totalorder %s35, %s36
    %p50 = scmp.eq.s32.totalorder %s14, 1
    %p51 = por %p49, %p50
    %p53 = scmp.ne.s32.totalorder %s36, %s52
    %p54 = scmp.eq.s32.totalorder %s14, 0
    %p55 = por %p53, %p54
    %s56 = ssub.s32 %s15, %s27
    %p57 = scmp.eq.s32.totalorder %s56, 0
    %s59 = sadd.s32 %s58, 1
    %s60 = scalar_select %p57, %s58, %s59
    %p63 = pneg %p57
    %p64 = scmp.eq.s32.totalorder %s8, 1
    %p65 = por %p63, %p64
    %p66 = scmp.ne.s32.totalorder %s58, %s61
    %p67 = scmp.eq.s32.totalorder %s8, 0
    %p68 = por %p66, %p67
    %p69 = scmp.ne.s32.totalorder %s58, %s61
    %p70 = scmp.eq.s32.totalorder %s13, 1
    %p71 = por %p69, %p70
    %p72 = scmp.ne.s32.totalorder %s61, %s62
    %p73 = scmp.eq.s32.totalorder %s13, 0
    %p74 = por %p72, %p73
    %p75 = scmp.ne.s32.totalorder %s61, %s62
    %p76 = scmp.eq.s32.totalorder %s14, 1
    %p77 = por %p75, %p76
    %p79 = scmp.ne.s32.totalorder %s62, %s78
    %p80 = scmp.eq.s32.totalorder %s14, 0
    %p81 = por %p79, %p80
    %s82 = ssub.s32 %s15, %s27
    %s83 = ssub.s32 %s16, %s23
    %s84 = sor.u32 %s82, %s83
    %p85 = scmp.eq.s32.totalorder %s84, 0
    %s87 = sadd.s32 %s86, 1
    %s88 = scalar_select %p85, %s86, %s87
    %p91 = pneg %p85
    %p92 = scmp.eq.s32.totalorder %s8, 1
    %p93 = por %p91, %p92
    %p94 = scmp.ne.s32.totalorder %s86, %s89
    %p95 = scmp.eq.s32.totalorder %s8, 0
    %p96 = por %p94, %p95
    %p97 = scmp.ne.s32.totalorder %s86, %s89
    %p98 = scmp.eq.s32.totalorder %s13, 1
    %p99 = por %p97, %p98
    %p100 = scmp.ne.s32.totalorder %s89, %s90
    %p101 = scmp.eq.s32.totalorder %s13, 0
    %p102 = por %p100, %p101
    %p103 = scmp.ne.s32.totalorder %s89, %s90
    %p104 = scmp.eq.s32.totalorder %s14, 1
    %p105 = por %p103, %p104
    %p107 = scmp.ne.s32.totalorder %s90, %s106
    %p108 = scmp.eq.s32.totalorder %s14, 0
    %p109 = por %p107, %p108
    %p110 = scmp.le.s32.totalorder 1, %s8
    %p111 = scmp.lt.s32.totalorder %s8, 3
    %p112 = pnand %p110, %p111
    %p113 = pneg %p112
    // Predicated region
    $region9: #{vae_forward.18} parent=5 // pred_check
      _
    $region10: #{vae_forward.18} parent=5 // pred_check_branch
      %115 = sbr.rel (%p112) target = $region12
    $region11: #{vae_forward.18} parent=5 // pred_region
      %s116 = ssub.s32 %s8, 1
    $region12: #{vae_forward.18} parent=5 // pred_fallthru
      _
    %p117 = scmp.lt.s32.totalorder %s8, 2
    // Predicated region
    $region13: #{vae_forward.18} parent=5 // pred_check
      %p118 = pneg %p117
    $region14: #{vae_forward.18} parent=5 // pred_check_branch
      %120 = sbr.rel (%p118) target = $region16
    $region15: #{vae_forward.18} parent=5 // pred_region
      // Predicated region
      $region17: #{vae_forward.18} parent=15 // pred_check
        %p121 = pneg %p42
      $region18: #{vae_forward.18} parent=15 // pred_check_branch
        %123 = sbr.rel (%p121) target = $region20
      $region19: #{vae_forward.18} parent=15 // pred_region
        %p124 = scmp.lt.s32.totalorder %s15, 1
        %s125 = scalar_select %p124, %s15, 1
        %p126 = scmp.lt.s32.totalorder %s16, 0
        %s127 = scalar_select %p126, %s16, 0
        %s128 = smul.addr %s125, 2
        %s129 = sadd.s32 %s127, %s128
        %s130 = smul.addr %s129, 8
        %s131 = scalar_lea.vmem %s0, %s130
      $region20: #{vae_forward.18} parent=15 // pred_fallthru
        _
      // Predicated region
      $region21: #{vae_forward.18} parent=15 // pred_check
        %p132 = pneg %p68
      $region22: #{vae_forward.18} parent=15 // pred_check_branch
        %134 = sbr.rel (%p132) target = $region24
      $region23: #{vae_forward.18} parent=15 // pred_region
        %p135 = scmp.lt.s32.totalorder %s15, 1
        %s136 = scalar_select %p135, %s15, 1
        %s137 = smul.addr %s136, 2
        %s138 = smul.addr %s137, 8
        %s139 = scalar_lea.vmem %s1, %s138
      $region24: #{vae_forward.18} parent=15 // pred_fallthru
        _
    $region16: #{vae_forward.18} parent=5 // pred_fallthru
      _
    %p140 = scmp.le.s32.totalorder 1, %s8
    %p141 = scmp.lt.s32.totalorder %s8, 3
    %p142 = pnand %p140, %p141
    %p143 = pneg %p142
    // Predicated region
    $region25: #{vae_forward.18} parent=5 // pred_check
      _
    $region26: #{vae_forward.18} parent=5 // pred_check_branch
      %145 = sbr.rel (%p142) target = $region28
    $region27: #{vae_forward.18} parent=5 // pred_region
      %s146 = ssub.s32 %s8, 1
      %p147 = scmp.lt.s32.totalorder %s17, 1
      %s148 = scalar_select %p147, %s17, 1
      %p149 = scmp.lt.s32.totalorder %s18, 0
      %s150 = scalar_select %p149, %s18, 0
      %s151 = smul.addr %s148, 2
      %s152 = sadd.s32 %s150, %s151
      %s153 = smul.addr %s152, 8
      %s154 = scalar_lea.vmem %s0, %s153
      %p155 = pneg %p48
      %p156 = pneg %p45
      %p157 = scmp.lt.s32.totalorder %s17, 1
      %s158 = scalar_select %p157, %s17, 1
      %s159 = smul.addr %s158, 2
      %s160 = smul.addr %s159, 8
      %s161 = scalar_lea.vmem %s1, %s160
      %p162 = pneg %p74
      %p163 = pneg %p71
      %p164 = pneg %p102
      %p165 = pneg %p99
      %p166 = scmp.lt.s32.totalorder %s17, 1
      %s167 = scalar_select %p166, %s17, 1
      %p168 = scmp.lt.s32.totalorder %s18, 0
      %s169 = scalar_select %p168, %s18, 0
      %s170 = smul.addr %s167, 2
      %s171 = sadd.s32 %s169, %s170
      %s172 = smul.addr %s171, 4
      %s173 = scalar_lea.vmem %s2, %s172
      %p174 = scmp.lt.s32.totalorder %s17, 1
      %s175 = scalar_select %p174, %s17, 1
      %p176 = scmp.lt.s32.totalorder %s18, 0
      %s177 = scalar_select %p176, %s18, 0
      %s178 = smul.addr %s175, 2
      %s179 = sadd.s32 %s177, %s178
      %s180 = smul.addr %s179, 8
      %s181 = scalar_lea.vmem %s0, %s180
      %p182 = scmp.lt.s32.totalorder %s17, 1
      %s183 = scalar_select %p182, %s17, 1
      %s184 = smul.addr %s183, 2
      %s185 = smul.addr %s184, 8
      %s186 = scalar_lea.vmem %s1, %s185
      %p187 = scmp.lt.s32.totalorder %s17, 1
      %s188 = scalar_select %p187, %s17, 1
      %p189 = scmp.lt.s32.totalorder %s18, 0
      %s190 = scalar_select %p189, %s18, 0
      %s191 = smul.addr %s188, 2
      %s192 = sadd.s32 %s190, %s191
      %s193 = smul.addr %s192, 4
      %s194 = scalar_lea.vmem %s2, %s193
      %v195 = vld [vmem:[%s186] sm:$0xff]
      %v196 = vld [vmem:[%s186 + $0x8] sm:$0xff]
      %v197 = vmul.f32 %v195, 0.015625
      %v198 = vmul.f32 %v196, 0.015625
      %v199 = vmul.f32 %v197, %v197
      %v200 = vmul.f32 %v198, %v198
      %203 = vrot.lane.b32.xlu0 %v199, 1
      %v204 = vpop.permute.xlu0 %203
      %205 = vrot.lane.b32.xlu0 %v200, 1
      %v206 = vpop.permute.xlu0 %205
      %v209 = vsub.f32 %v197, %v204
      %v210 = vsub.f32 %v198, %v206
      %v211 = vmax.f32 %v209, 0.0
      %v212 = vmax.f32 %v210, 0.0
      %v213 = vld [vmem:[%s181] sm:$0xff]
      %v214 = vld [vmem:[%s181 + $0x8] sm:$0xff]
      %216 = vset.pattern.permute.xlu0 0
      %217 = vperm.xlu0 %216, %v197
      %v218 = vpop.permute.xlu0 %217
      %221 = vset.pattern.permute.xlu0 0
      %222 = vperm.xlu0 %221, %v198
      %v223 = vpop.permute.xlu0 %222
      %v225 = vsub.f32 %v213, %v218
      %v226 = vsub.f32 %v214, %v223
      %v227 = vadd.f32 %v211, 1e-05
      %v228 = vadd.f32 %v212, 1e-05
      %v229 = vrsqrt.pop %v227
      %v230 = vrsqrt.pop %v228
      %232 = vset.pattern.permute.xlu0 1
      %233 = vperm.xlu0 %232, %v229
      %v234 = vpop.permute.xlu0 %233
      %237 = vset.pattern.permute.xlu0 1
      %238 = vperm.xlu0 %237, %v230
      %v239 = vpop.permute.xlu0 %238
      %v241 = vmul.f32 %v225, %v234
      %v242 = vmul.f32 %v226, %v239
      %v243 = vmax.f32 %v241, 0.0
      %v244 = vmax.f32 %v242, 0.0
      %v245 = vpack.c.bf16 %v244, %v243
      %v247 = vunpack.c.l.b16 %v245
      %v248 = vunpack.c.h.b16 %v245
      %v249 = vpack.c.b16 %v247, %v247
      %v250 = vpack.c.b16 %v248, %v248
      %vm253 = vcmask 519168
      %254 = vst.msk [vmem:[%s194] sm:$0xf] %vm253, %v249
      %255 = vst.msk [vmem:[%s194 + $0x4] sm:$0xf] %vm253, %v250
      %p256 = scmp.lt.s32.totalorder %s17, 1
      %s257 = scalar_select %p256, %s17, 1
      %p258 = scmp.lt.s32.totalorder %s18, 0
      %s259 = scalar_select %p258, %s18, 0
      %s260 = smul.addr %s257, 2
      %s261 = sadd.s32 %s259, %s260
      %s262 = smul.addr %s261, 4
      %s263 = scalar_lea.vmem %s2, %s262
      // Predicated region
      $region29: #{vae_forward.18} parent=27 // pred_check
        %p264 = pneg %p99
      $region30: #{vae_forward.18} parent=27 // pred_check_branch
        %266 = sbr.rel (%p264) target = $region32
      $region31: #{vae_forward.18} parent=27 // pred_region
        _
      $region32: #{vae_forward.18} parent=27 // pred_fallthru
        _
    $region28: #{vae_forward.18} parent=5 // pred_fallthru
      _
    %p267 = scmp.le.s32.totalorder 2, %s8
    // Predicated region
    $region33: #{vae_forward.18} parent=5 // pred_check
      %p268 = pneg %p267
    $region34: #{vae_forward.18} parent=5 // pred_check_branch
      %270 = sbr.rel (%p268) target = $region36
    $region35: #{vae_forward.18} parent=5 // pred_region
      %s271 = ssub.s32 %s8, 2
      // Predicated region
      $region37: #{vae_forward.18} parent=35 // pred_check
        %p272 = pneg %p105
      $region38: #{vae_forward.18} parent=35 // pred_check_branch
        %274 = sbr.rel (%p272) target = $region40
      $region39: #{vae_forward.18} parent=35 // pred_region
        %p275 = scmp.lt.s32.totalorder %s19, 1
        %s276 = scalar_select %p275, %s19, 1
        %p277 = scmp.lt.s32.totalorder %s20, 0
        %s278 = scalar_select %p277, %s20, 0
        %s279 = smul.addr %s276, 2
        %s280 = sadd.s32 %s278, %s279
        %s281 = smul.addr %s280, 4
        %s282 = scalar_lea.vmem %s2, %s281
      $region40: #{vae_forward.18} parent=35 // pred_fallthru
        _
    $region36: #{vae_forward.18} parent=5 // pred_fallthru
      _
  $region6: #{vae_forward.18} parent=0 // loop_footer
    %s12 = sadd.s32 1, %s8
  $region7: #{vae_forward.18} parent=0 // loop_footer_branch
    %7 = sbr.rel target = $region3
  $region8: #{vae_forward.18} parent=0 // loop_exit
    _

// kernel: vae_forward.19
$region0: #{vae_forward.19}
  #allocation0 [shape = 'u32[]', space=smem, size = 0x4, offset = 0x4, fixed_abs, tag = 'smem constant byte address 0x4 - core index']
  #allocation1 [shape = 'u32[144,128]{1,0:T(1,128)}', space=vmem, size = 0x12000, scoped, tag = 'internal scratch']
  %s0 = inlined_call_operand.vmem [shape: bf16[16,256], index: 0, kind: input, shape index: {}]
  %s1 = inlined_call_operand.vmem [shape: bf16[2,256,64], index: 1, kind: input, shape index: {}]
  %s2 = inlined_call_operand.vmem [shape: f32[2,16,64], index: 2, kind: output, shape index: {0}]
  %s3 = inlined_call_operand.vmem [shape: f32[2,1,16,2], index: 3, kind: output, shape index: {1}]
  %4 = xla_tuple %s2, %s3
  %s5 = sld [smem:[#allocation0]]
  $region57: #{vae_forward.19} parent=0
    _
  %s7 = ssub.s32 1, %s5
  %s8 = scalar_select 0, %s7, %s5
  loop: start=0, step=1, limit=4
  $region2: #{vae_forward.19} parent=0 // loop_pre_header
    _
  $region3: #{vae_forward.19} parent=0 // loop_header
    %s10 = sphi 0, %s14
    %p11 = scmp.ge.s32.totalorder %s10, 4
    %s17 = sphi 0, %s36
    %s18 = sphi 0, %s32
    %s19 = sphi 0, %s28
    %s20 = sphi 0, %s17
    %s21 = sphi 0, %s18
    %s22 = sphi 0, %s19
    %s23 = sphi 0, %s20
    %s24 = sphi 0, %s21
    %s25 = sphi 0, %s22
    %s37 = sphi 0, %s37
    %s39 = sphi 0, %s37
    %s40 = sphi 0, %s39
    %s54 = sphi 0, %s40
    %s64 = sphi 0, %s66
    %s67 = sphi 0, %s64
    %s68 = sphi 0, %s67
    %s84 = sphi 0, %s68
    %s92 = sphi 0, %s94
    %s95 = sphi 0, %s92
    %s96 = sphi 0, %s95
    %s112 = sphi 0, %s96
    %s120 = sphi 0, %s122
    %s123 = sphi 0, %s120
    %s124 = sphi 0, %s123
    %s140 = sphi 0, %s124
  $region4: #{vae_forward.19} parent=0 // loop_header_branch
    %13 = sbr.rel (%p11) target = $region8
  $region5: #{vae_forward.19} parent=0 // loop_body
    %s15 = ssub.s32 %s10, 1
    %s16 = ssub.s32 %s10, 2
    %s26 = sadd.s32 1, %s19
    %p27 = scmp.ge.s32.totalorder %s26, 1
    %s28 = scalar_select %p27, 0, %s26
    %s29 = sadd.s32 1, %s18
    %s30 = scalar_select %p27, %s29, %s18
    %p31 = scmp.ge.s32.totalorder %s30, 1
    %s32 = scalar_select %p31, 0, %s30
    %s33 = sadd.s32 1, %s17
    %s34 = scalar_select %p31, %s33, %s17
    %p35 = scmp.ge.s32.totalorder %s34, 2
    %s36 = scalar_select %p35, 0, %s34
    %s38 = sadd.s32 %s37, 1
    %p41 = scmp.eq.s32.totalorder %s10, 1
    %p42 = scmp.ne.s32.totalorder %s37, %s39
    %p43 = scmp.eq.s32.totalorder %s10, 0
    %p44 = por %p42, %p43
    %p45 = scmp.ne.s32.totalorder %s37, %s39
    %p46 = scmp.eq.s32.totalorder %s15, 1
    %p47 = por %p45, %p46
    %p48 = scmp.ne.s32.totalorder %s39, %s40
    %p49 = scmp.eq.s32.totalorder %s15, 0
    %p50 = por %p48, %p49
    %p51 = scmp.ne.s32.totalorder %s39, %s40
    %p52 = scmp.eq.s32.totalorder %s16, 1
    %p53 = por %p51, %p52
    %p55 = scmp.ne.s32.totalorder %s40, %s54
    %p56 = scmp.eq.s32.totalorder %s16, 0
    %p57 = por %p55, %p56
    %s58 = ssub.s32 %s17, %s36
    %s59 = ssub.s32 %s19, %s28
    %s60 = sor.u32 %s58, %s59
    %s61 = ssub.s32 %s18, %s32
    %s62 = sor.u32 %s60, %s61
    %p63 = scmp.eq.s32.totalorder %s62, 0
    %s65 = sadd.s32 %s64, 1
    %s66 = scalar_select %p63, %s64, %s65
    %p69 = pneg %p63
    %p70 = scmp.eq.s32.totalorder %s10, 1
    %p71 = por %p69, %p70
    %p72 = scmp.ne.s32.totalorder %s64, %s67
    %p73 = scmp.eq.s32.totalorder %s10, 0
    %p74 = por %p72, %p73
    %p75 = scmp.ne.s32.totalorder %s64, %s67
    %p76 = scmp.eq.s32.totalorder %s15, 1
    %p77 = por %p75, %p76
    %p78 = scmp.ne.s32.totalorder %s67, %s68
    %p79 = scmp.eq.s32.totalorder %s15, 0
    %p80 = por %p78, %p79
    %p81 = scmp.ne.s32.totalorder %s67, %s68
    %p82 = scmp.eq.s32.totalorder %s16, 1
    %p83 = por %p81, %p82
    %p85 = scmp.ne.s32.totalorder %s68, %s84
    %p86 = scmp.eq.s32.totalorder %s16, 0
    %p87 = por %p85, %p86
    %s88 = ssub.s32 %s17, %s36
    %s89 = ssub.s32 %s18, %s32
    %s90 = sor.u32 %s88, %s89
    %p91 = scmp.eq.s32.totalorder %s90, 0
    %s93 = sadd.s32 %s92, 1
    %s94 = scalar_select %p91, %s92, %s93
    %p97 = pneg %p91
    %p98 = scmp.eq.s32.totalorder %s10, 1
    %p99 = por %p97, %p98
    %p100 = scmp.ne.s32.totalorder %s92, %s95
    %p101 = scmp.eq.s32.totalorder %s10, 0
    %p102 = por %p100, %p101
    %p103 = scmp.ne.s32.totalorder %s92, %s95
    %p104 = scmp.eq.s32.totalorder %s15, 1
    %p105 = por %p103, %p104
    %p106 = scmp.ne.s32.totalorder %s95, %s96
    %p107 = scmp.eq.s32.totalorder %s15, 0
    %p108 = por %p106, %p107
    %p109 = scmp.ne.s32.totalorder %s95, %s96
    %p110 = scmp.eq.s32.totalorder %s16, 1
    %p111 = por %p109, %p110
    %p113 = scmp.ne.s32.totalorder %s96, %s112
    %p114 = scmp.eq.s32.totalorder %s16, 0
    %p115 = por %p113, %p114
    %s116 = ssub.s32 %s17, %s36
    %s117 = ssub.s32 %s18, %s32
    %s118 = sor.u32 %s116, %s117
    %p119 = scmp.eq.s32.totalorder %s118, 0
    %s121 = sadd.s32 %s120, 1
    %s122 = scalar_select %p119, %s120, %s121
    %p125 = pneg %p119
    %p126 = scmp.eq.s32.totalorder %s10, 1
    %p127 = por %p125, %p126
    %p128 = scmp.ne.s32.totalorder %s120, %s123
    %p129 = scmp.eq.s32.totalorder %s10, 0
    %p130 = por %p128, %p129
    %p131 = scmp.ne.s32.totalorder %s120, %s123
    %p132 = scmp.eq.s32.totalorder %s15, 1
    %p133 = por %p131, %p132
    %p134 = scmp.ne.s32.totalorder %s123, %s124
    %p135 = scmp.eq.s32.totalorder %s15, 0
    %p136 = por %p134, %p135
    %p137 = scmp.ne.s32.totalorder %s123, %s124
    %p138 = scmp.eq.s32.totalorder %s16, 1
    %p139 = por %p137, %p138
    %p141 = scmp.ne.s32.totalorder %s124, %s140
    %p142 = scmp.eq.s32.totalorder %s16, 0
    %p143 = por %p141, %p142
    %p144 = scmp.le.s32.totalorder 1, %s10
    %p145 = scmp.lt.s32.totalorder %s10, 3
    %p146 = pnand %p144, %p145
    %p147 = pneg %p146
    // Predicated region
    $region9: #{vae_forward.19} parent=5 // pred_check
      _
    $region10: #{vae_forward.19} parent=5 // pred_check_branch
      %149 = sbr.rel (%p146) target = $region12
    $region11: #{vae_forward.19} parent=5 // pred_region
      %s150 = ssub.s32 %s10, 1
      // Predicated region
      $region13: #{vae_forward.19} parent=11 // pred_check
        %p151 = pneg %p50
      $region14: #{vae_forward.19} parent=11 // pred_check_branch
        %153 = sbr.rel (%p151) target = $region16
      $region15: #{vae_forward.19} parent=11 // pred_region
        _
      $region16: #{vae_forward.19} parent=11 // pred_fallthru
        _
    $region12: #{vae_forward.19} parent=5 // pred_fallthru
      _
    %p154 = scmp.lt.s32.totalorder %s10, 2
    // Predicated region
    $region17: #{vae_forward.19} parent=5 // pred_check
      %p155 = pneg %p154
    $region18: #{vae_forward.19} parent=5 // pred_check_branch
      %157 = sbr.rel (%p155) target = $region20
    $region19: #{vae_forward.19} parent=5 // pred_region
      // Predicated region
      $region21: #{vae_forward.19} parent=19 // pred_check
        %p158 = pneg %p74
      $region22: #{vae_forward.19} parent=19 // pred_check_branch
        %160 = sbr.rel (%p158) target = $region24
      $region23: #{vae_forward.19} parent=19 // pred_region
        %s161 = smul.u32 32, %s19
        %p162 = scmp.lt.s32.totalorder %s17, 1
        %s163 = scalar_select %p162, %s17, 1
        %p164 = scmp.lt.s32.totalorder %s161, 31
        %s165 = scalar_select %p164, %s161, 31
        %p166 = scmp.lt.s32.totalorder %s18, 0
        %s167 = scalar_select %p166, %s18, 0
        %s168 = sadd.s32 %s167, %s165
        %s169 = smul.addr %s163, 32
        %s170 = sadd.s32 %s168, %s169
        %s171 = smul.addr %s170, 4
        %s172 = scalar_lea.vmem %s1, %s171
        %s173 = smul.u32 32, %s19
      $region24: #{vae_forward.19} parent=19 // pred_fallthru
        _
    $region20: #{vae_forward.19} parent=5 // pred_fallthru
      _
    %p174 = scmp.le.s32.totalorder 1, %s10
    %p175 = scmp.lt.s32.totalorder %s10, 3
    %p176 = pnand %p174, %p175
    %p177 = pneg %p176
    // Predicated region
    $region25: #{vae_forward.19} parent=5 // pred_check
      _
    $region26: #{vae_forward.19} parent=5 // pred_check_branch
      %179 = sbr.rel (%p176) target = $region28
    $region27: #{vae_forward.19} parent=5 // pred_region
      %s180 = ssub.s32 %s10, 1
      %p181 = pneg %p50
      %p182 = pneg %p47
      %s183 = smul.u32 32, %s22
      %p184 = scmp.lt.s32.totalorder %s20, 1
      %s185 = scalar_select %p184, %s20, 1
      %p186 = scmp.lt.s32.totalorder %s183, 31
      %s187 = scalar_select %p186, %s183, 31
      %p188 = scmp.lt.s32.totalorder %s21, 0
      %s189 = scalar_select %p188, %s21, 0
      %s190 = sadd.s32 %s189, %s187
      %s191 = smul.addr %s185, 32
      %s192 = sadd.s32 %s190, %s191
      %s193 = smul.addr %s192, 4
      %s194 = scalar_lea.vmem %s1, %s193
      %p195 = pneg %p80
      %p196 = pneg %p77
      %p197 = pneg %p108
      %p198 = pneg %p105
      %p199 = scmp.lt.s32.totalorder %s20, 1
      %s200 = scalar_select %p199, %s20, 1
      %p201 = scmp.lt.s32.totalorder %s21, 0
      %s202 = scalar_select %p201, %s21, 0
      %s203 = smul.addr %s200, 2
      %s204 = sadd.s32 %s202, %s203
      %s205 = smul.addr %s204, 8
      %s206 = scalar_lea.vmem %s2, %s205
      %p207 = pneg %p136
      %p208 = pneg %p133
      %p209 = scmp.lt.s32.totalorder %s20, 1
      %s210 = scalar_select %p209, %s20, 1
      %p211 = scmp.lt.s32.totalorder %s21, 0
      %s212 = scalar_select %p211, %s21, 0
      %s213 = smul.addr %s212, 2
      %s214 = smul.addr %s210, 2
      %s215 = sadd.s32 %s213, %s214
      %s216 = smul.addr %s215, 8
      %s217 = scalar_lea.vmem %s3, %s216
      %s218 = smul.u32 32, %s22
      %p219 = scmp.lt.s32.totalorder %s20, 1
      %s220 = scalar_select %p219, %s20, 1
      %p221 = scmp.lt.s32.totalorder %s218, 31
      %s222 = scalar_select %p221, %s218, 31
      %p223 = scmp.lt.s32.totalorder %s21, 0
      %s224 = scalar_select %p223, %s21, 0
      %s225 = sadd.s32 %s224, %s222
      %s226 = smul.addr %s220, 32
      %s227 = sadd.s32 %s225, %s226
      %s228 = smul.addr %s227, 4
      %s229 = scalar_lea.vmem %s1, %s228
      %s230 = smul.u32 32, %s22
      %p231 = scmp.lt.s32.totalorder %s20, 1
      %s232 = scalar_select %p231, %s20, 1
      %p233 = scmp.lt.s32.totalorder %s21, 0
      %s234 = scalar_select %p233, %s21, 0
      %s235 = smul.addr %s232, 2
      %s236 = sadd.s32 %s234, %s235
      %s237 = smul.addr %s236, 8
      %s238 = scalar_lea.vmem %s2, %s237
      %p239 = scmp.lt.s32.totalorder %s20, 1
      %s240 = scalar_select %p239, %s20, 1
      %p241 = scmp.lt.s32.totalorder %s21, 0
      %s242 = scalar_select %p241, %s21, 0
      %s243 = smul.addr %s242, 2
      %s244 = smul.addr %s240, 2
      %s245 = sadd.s32 %s243, %s244
      %s246 = smul.addr %s245, 8
      %s247 = scalar_lea.vmem %s3, %s246
      %p249 = scmp.eq.s32.totalorder %s22, 0
      // Predicated region
      $region29: #{vae_forward.19} parent=27 // pred_check
        %p250 = pneg %p249
      $region30: #{vae_forward.19} parent=27 // pred_check_branch
        %252 = sbr.rel (%p250) target = $region32
      $region31: #{vae_forward.19} parent=27 // pred_region
        %vm253 = vcmask 523264
        %254 = vst.msk [vmem:[%s238] sm:$0xff] %vm253, 0.0
        %255 = vst.msk [vmem:[%s238 + $0x8] sm:$0xff] %vm253, 0.0
      $region32: #{vae_forward.19} parent=27 // pred_fallthru
        _
      %s256 = smul.u32 %s22, 256
      %v257 = vld [vmem:[%s238] sm:$0xff]
      %v258 = vld [vmem:[%s238 + $0x8] sm:$0xff]
      %s259 = sshra.s32 %s256, 7
      %s260 = sand.u32 %s256, 127
      %s261 = smul.addr %s259, 4
      %s262 = scalar_lea.vmem %s0, %s261
      %v263 = vld [vmem:[%s262] sm:$0xff]
      %v264 = vld [vmem:[%s262 + $0x8] sm:$0xff]
      %v265 = vld [vmem:[%s229] sm:$0xf]
      %v266 = vld [vmem:[%s229 + $0x4] sm:$0xf]
      %v267 = vld [vmem:[%s229 + $0x8] sm:$0xf]
      %v268 = vld [vmem:[%s229 + $0xc] sm:$0xf]
      %v269 = vld [vmem:[%s229 + $0x10] sm:$0xf]
      %v270 = vld [vmem:[%s229 + $0x14] sm:$0xf]
      %v271 = vld [vmem:[%s229 + $0x18] sm:$0xf]
      %v272 = vld [vmem:[%s229 + $0x1c] sm:$0xf]
      %v273 = vld [vmem:[%s229 + $0x20] sm:$0xf]
      %v274 = vld [vmem:[%s229 + $0x24] sm:$0xf]
      %v275 = vld [vmem:[%s229 + $0x28] sm:$0xf]
      %v276 = vld [vmem:[%s229 + $0x2c] sm:$0xf]
      %v277 = vld [vmem:[%s229 + $0x30] sm:$0xf]
      %v278 = vld [vmem:[%s229 + $0x34] sm:$0xf]
      %v279 = vld [vmem:[%s229 + $0x38] sm:$0xf]
      %v280 = vld [vmem:[%s229 + $0x3c] sm:$0xf]
      %v281 = vld [vmem:[%s229 + $0x40] sm:$0xf]
      %v282 = vld [vmem:[%s229 + $0x44] sm:$0xf]
      %v283 = vld [vmem:[%s229 + $0x48] sm:$0xf]
      %v284 = vld [vmem:[%s229 + $0x4c] sm:$0xf]
      %v285 = vld [vmem:[%s229 + $0x50] sm:$0xf]
      %v286 = vld [vmem:[%s229 + $0x54] sm:$0xf]
      %v287 = vld [vmem:[%s229 + $0x58] sm:$0xf]
      %v288 = vld [vmem:[%s229 + $0x5c] sm:$0xf]
      %v289 = vld [vmem:[%s229 + $0x60] sm:$0xf]
      %v290 = vld [vmem:[%s229 + $0x64] sm:$0xf]
      %v291 = vld [vmem:[%s229 + $0x68] sm:$0xf]
      %v292 = vld [vmem:[%s229 + $0x6c] sm:$0xf]
      %v293 = vld [vmem:[%s229 + $0x70] sm:$0xf]
      %v294 = vld [vmem:[%s229 + $0x74] sm:$0xf]
      %v295 = vld [vmem:[%s229 + $0x78] sm:$0xf]
      %v296 = vld [vmem:[%s229 + $0x7c] sm:$0xf]
      %v299 = vunpack.c.l.b16 %v263
      %v300 = vunpack.c.h.b16 %v263
      %v301 = vunpack.c.l.b16 %v264
      %v302 = vunpack.c.h.b16 %v264
      %v303 = vpack.c.b16 %v301, %v299
      %v304 = vpack.c.b16 %v302, %v300
      %v339 = vunpack.c.l.b16 %v265
      %v340 = vunpack.c.l.b16 %v266
      %v341 = vunpack.c.l.b16 %v267
      %v342 = vunpack.c.l.b16 %v268
      %v343 = vunpack.c.l.b16 %v269
      %v344 = vunpack.c.l.b16 %v270
      %v345 = vunpack.c.l.b16 %v271
      %v346 = vunpack.c.l.b16 %v272
      %v347 = vunpack.c.l.b16 %v273
      %v348 = vunpack.c.l.b16 %v274
      %v349 = vunpack.c.l.b16 %v275
      %v350 = vunpack.c.l.b16 %v276
      %v351 = vunpack.c.l.b16 %v277
      %v352 = vunpack.c.l.b16 %v278
      %v353 = vunpack.c.l.b16 %v279
      %v354 = vunpack.c.l.b16 %v280
      %v355 = vunpack.c.l.b16 %v281
      %v356 = vunpack.c.l.b16 %v282
      %v357 = vunpack.c.l.b16 %v283
      %v358 = vunpack.c.l.b16 %v284
      %v359 = vunpack.c.l.b16 %v285
      %v360 = vunpack.c.l.b16 %v286
      %v361 = vunpack.c.l.b16 %v287
      %v362 = vunpack.c.l.b16 %v288
      %v363 = vunpack.c.l.b16 %v289
      %v364 = vunpack.c.l.b16 %v290
      %v365 = vunpack.c.l.b16 %v291
      %v366 = vunpack.c.l.b16 %v292
      %v367 = vunpack.c.l.b16 %v293
      %v368 = vunpack.c.l.b16 %v294
      %v369 = vunpack.c.l.b16 %v295
      %v370 = vunpack.c.l.b16 %v296
      %v371 = vpack.c.b16 %v340, %v339
      %v372 = vpack.c.b16 %v342, %v341
      %v373 = vpack.c.b16 %v344, %v343
      %v374 = vpack.c.b16 %v346, %v345
      %v375 = vpack.c.b16 %v348, %v347
      %v376 = vpack.c.b16 %v350, %v349
      %v377 = vpack.c.b16 %v352, %v351
      %v378 = vpack.c.b16 %v354, %v353
      %v379 = vpack.c.b16 %v356, %v355
      %v380 = vpack.c.b16 %v358, %v357
      %v381 = vpack.c.b16 %v360, %v359
      %v382 = vpack.c.b16 %v362, %v361
      %v383 = vpack.c.b16 %v364, %v363
      %v384 = vpack.c.b16 %v366, %v365
      %v385 = vpack.c.b16 %v368, %v367
      %v386 = vpack.c.b16 %v370, %v369
      %403 = vmatprep.subr.bf16.mxu0 0
      %404 = vmatpush1.bf16.msra.mxu0 %v371
      %405 = vmatprep.subr.bf16.mxu0 0
      %406 = vmatpush1.bf16.msra.mxu0 %v372
      %407 = vmatprep.subr.bf16.mxu0 0
      %408 = vmatpush1.bf16.msra.mxu0 %v373
      %409 = vmatprep.subr.bf16.mxu0 0
      %410 = vmatpush1.bf16.msra.mxu0 %v374
      %411 = vmatprep.subr.bf16.mxu0 0
      %412 = vmatpush1.bf16.msra.mxu0 %v375
      %413 = vmatprep.subr.bf16.mxu0 0
      %414 = vmatpush1.bf16.msra.mxu0 %v376
      %415 = vmatprep.subr.bf16.mxu0 0
      %416 = vmatpush1.bf16.msra.mxu0 %v377
      %417 = vmatprep.subr.bf16.mxu0 0
      %418 = vmatpush1.bf16.msra.mxu0 %v378
      %419 = vmatprep.subr.bf16.mxu0 0
      %420 = vmatpush1.bf16.msra.mxu0 %v379
      %421 = vmatprep.subr.bf16.mxu0 0
      %422 = vmatpush1.bf16.msra.mxu0 %v380
      %423 = vmatprep.subr.bf16.mxu0 0
      %424 = vmatpush1.bf16.msra.mxu0 %v381
      %425 = vmatprep.subr.bf16.mxu0 0
      %426 = vmatpush1.bf16.msra.mxu0 %v382
      %427 = vmatprep.subr.bf16.mxu0 0
      %428 = vmatpush1.bf16.msra.mxu0 %v383
      %429 = vmatprep.subr.bf16.mxu0 0
      %430 = vmatpush1.bf16.msra.mxu0 %v384
      %431 = vmatprep.subr.bf16.mxu0 0
      %432 = vmatpush1.bf16.msra.mxu0 %v385
      %433 = vmatprep.subr.bf16.mxu0 0
      %434 = vmatpush1.bf16.msra.mxu0 %v386
      %435 = vmatprep.mubr.bf16.mxu0 %v304
      %436 = vmatmul.mubr.bf16.gmra.mrb[0].mxu0 %v303
      %v437 = vpop.f32.mrb[0].mxu0
      %v438 = vadd.f32 0.0, %v437
      %v439 = vpop.f32.mrb[0].mxu0
      %v440 = vpop.f32.mrb[0].mxu0
      %v441 = vadd.f32 0.0, %v440
      %v442 = vpop.f32.mrb[0].mxu0
      %443 = vdwg.mxu0
      %v444 = vadd.f32 %v257, %v438
      %v445 = vadd.f32 %v258, %v441
      %vm446 = vcmask 523264
      %447 = vst.msk [vmem:[%s238] sm:$0xff] %vm446, %v444
      %448 = vst.msk [vmem:[%s238 + $0x8] sm:$0xff] %vm446, %v445
      // Predicated region
      $region33: #{vae_forward.19} parent=27 // pred_check
        %p449 = pneg %p249
      $region34: #{vae_forward.19} parent=27 // pred_check_branch
        %451 = sbr.rel (%p449) target = $region36
      $region35: #{vae_forward.19} parent=27 // pred_region
        %v452 = vld [vmem:[%s238] sm:$0xff]
        %v453 = vld [vmem:[%s238 + $0x8] sm:$0xff]
        %v454 = vsel %vm446, %v452, 0.0
        %455 = vadd.xlane.f32.xlu0 %v454
        %v456 = vpop.xlane.xlu0 %455
        %v457 = vsel %vm446, %v453, 0.0
        %458 = vadd.xlane.f32.xlu0 %v457
        %v459 = vpop.xlane.xlu0 %458
        %vm460 = vcmask 7168
        %461 = vst.msk [vmem:[%s247] sm:$0xff] %vm460, %v456
        %462 = vst.msk [vmem:[%s247 + $0x8] sm:$0xff] %vm460, %v459
        %v463 = vmul.f32 %v452, %v452
        %v464 = vmul.f32 %v453, %v453
        %v465 = vsel %vm446, %v463, 0.0
        %466 = vadd.xlane.f32.xlu0 %v465
        %v467 = vpop.xlane.xlu0 %466
        %v468 = vsel %vm446, %v464, 0.0
        %469 = vadd.xlane.f32.xlu0 %v468
        %v470 = vpop.xlane.xlu0 %469
        %vm471 = vcmask 15368
        %472 = vst.msk [vmem:[%s247] sm:$0xff] %vm471, %v467
        %473 = vst.msk [vmem:[%s247 + $0x8] sm:$0xff] %vm471, %v470
      $region36: #{vae_forward.19} parent=27 // pred_fallthru
        _
      %p474 = scmp.lt.s32.totalorder %s20, 1
      %s475 = scalar_select %p474, %s20, 1
      %p476 = scmp.lt.s32.totalorder %s21, 0
      %s477 = scalar_select %p476, %s21, 0
      %s478 = smul.addr %s475, 2
      %s479 = sadd.s32 %s477, %s478
      %s480 = smul.addr %s479, 8
      %s481 = scalar_lea.vmem %s2, %s480
      %p482 = scmp.lt.s32.totalorder %s20, 1
      %s483 = scalar_select %p482, %s20, 1
      %p484 = scmp.lt.s32.totalorder %s21, 0
      %s485 = scalar_select %p484, %s21, 0
      %s486 = smul.addr %s485, 2
      %s487 = smul.addr %s483, 2
      %s488 = sadd.s32 %s486, %s487
      %s489 = smul.addr %s488, 8
      %s490 = scalar_lea.vmem %s3, %s489
      // Predicated region
      $region37: #{vae_forward.19} parent=27 // pred_check
        %p491 = pneg %p105
      $region38: #{vae_forward.19} parent=27 // pred_check_branch
        %493 = sbr.rel (%p491) target = $region40
      $region39: #{vae_forward.19} parent=27 // pred_region
        _
      $region40: #{vae_forward.19} parent=27 // pred_fallthru
        _
      // Predicated region
      $region41: #{vae_forward.19} parent=27 // pred_check
        %p494 = pneg %p133
      $region42: #{vae_forward.19} parent=27 // pred_check_branch
        %496 = sbr.rel (%p494) target = $region44
      $region43: #{vae_forward.19} parent=27 // pred_region
        _
      $region44: #{vae_forward.19} parent=27 // pred_fallthru
        _
    $region28: #{vae_forward.19} parent=5 // pred_fallthru
      _
    %p497 = scmp.le.s32.totalorder 2, %s10
    // Predicated region
    $region45: #{vae_forward.19} parent=5 // pred_check
      %p498 = pneg %p497
    $region46: #{vae_forward.19} parent=5 // pred_check_branch
      %500 = sbr.rel (%p498) target = $region48
    $region47: #{vae_forward.19} parent=5 // pred_region
      %s501 = ssub.s32 %s10, 2
      // Predicated region
      $region49: #{vae_forward.19} parent=47 // pred_check
        %p502 = pneg %p111
      $region50: #{vae_forward.19} parent=47 // pred_check_branch
        %504 = sbr.rel (%p502) target = $region52
      $region51: #{vae_forward.19} parent=47 // pred_region
        %p505 = scmp.lt.s32.totalorder %s23, 1
        %s506 = scalar_select %p505, %s23, 1
        %p507 = scmp.lt.s32.totalorder %s24, 0
        %s508 = scalar_select %p507, %s24, 0
        %s509 = smul.addr %s506, 2
        %s510 = sadd.s32 %s508, %s509
        %s511 = smul.addr %s510, 8
        %s512 = scalar_lea.vmem %s2, %s511
      $region52: #{vae_forward.19} parent=47 // pred_fallthru
        _
      // Predicated region
      $region53: #{vae_forward.19} parent=47 // pred_check
        %p513 = pneg %p139
      $region54: #{vae_forward.19} parent=47 // pred_check_branch
        %515 = sbr.rel (%p513) target = $region56
      $region55: #{vae_forward.19} parent=47 // pred_region
        %p516 = scmp.lt.s32.totalorder %s23, 1
        %s517 = scalar_select %p516, %s23, 1
        %p518 = scmp.lt.s32.totalorder %s24, 0
        %s519 = scalar_select %p518, %s24, 0
        %s520 = smul.addr %s519, 2
        %s521 = smul.addr %s517, 2
        %s522 = sadd.s32 %s520, %s521
        %s523 = smul.addr %s522, 8
        %s524 = scalar_lea.vmem %s3, %s523
      $region56: #{vae_forward.19} parent=47 // pred_fallthru
        _
    $region48: #{vae_forward.19} parent=5 // pred_fallthru
      _
  $region6: #{vae_forward.19} parent=0 // loop_footer
    %s14 = sadd.s32 1, %s10
  $region7: #{vae_forward.19} parent=0 // loop_footer_branch
    %9 = sbr.rel target = $region3
  $region8: #{vae_forward.19} parent=0 // loop_exit
    _

// kernel: vae_forward.26
$region0: #{vae_forward.26}
  #allocation0 [shape = 'u32[]', space=smem, size = 0x4, offset = 0x4, fixed_abs, tag = 'smem constant byte address 0x4 - core index']
  #allocation1 [shape = 'u32[144,128]{1,0:T(1,128)}', space=vmem, size = 0x12000, scoped, tag = 'internal scratch']
  %s0 = inlined_call_operand.vmem [shape: f32[2,16,64], index: 0, kind: input, shape index: {}]
  %s1 = inlined_call_operand.vmem [shape: f32[2,16,2], index: 1, kind: input, shape index: {}]
  %s2 = inlined_call_operand.vmem [shape: bf16[2,16,64], index: 2, kind: input, shape index: {}]
  %s3 = inlined_call_operand.vmem [shape: bf16[2,16,64], index: 3, kind: output, shape index: {}]
  %s4 = sld [smem:[#allocation0]]
  $region45: #{vae_forward.26} parent=0
    _
  %s6 = ssub.s32 1, %s4
  %s7 = scalar_select 0, %s6, %s4
  loop: start=0, step=1, limit=4
  $region2: #{vae_forward.26} parent=0 // loop_pre_header
    _
  $region3: #{vae_forward.26} parent=0 // loop_header
    %s9 = sphi 0, %s13
    %p10 = scmp.ge.s32.totalorder %s9, 4
    %s16 = sphi 0, %s28
    %s17 = sphi 0, %s24
    %s18 = sphi 0, %s16
    %s19 = sphi 0, %s17
    %s20 = sphi 0, %s18
    %s21 = sphi 0, %s19
    %s33 = sphi 0, %s35
    %s36 = sphi 0, %s33
    %s37 = sphi 0, %s36
    %s53 = sphi 0, %s37
    %s59 = sphi 0, %s61
    %s62 = sphi 0, %s59
    %s63 = sphi 0, %s62
    %s79 = sphi 0, %s63
    %s87 = sphi 0, %s89
    %s90 = sphi 0, %s87
    %s91 = sphi 0, %s90
    %s107 = sphi 0, %s91
    %s115 = sphi 0, %s117
    %s118 = sphi 0, %s115
    %s119 = sphi 0, %s118
    %s135 = sphi 0, %s119
  $region4: #{vae_forward.26} parent=0 // loop_header_branch
    %12 = sbr.rel (%p10) target = $region8
  $region5: #{vae_forward.26} parent=0 // loop_body
    %s14 = ssub.s32 %s9, 1
    %s15 = ssub.s32 %s9, 2
    %s22 = sadd.s32 1, %s17
    %p23 = scmp.ge.s32.totalorder %s22, 1
    %s24 = scalar_select %p23, 0, %s22
    %s25 = sadd.s32 1, %s16
    %s26 = scalar_select %p23, %s25, %s16
    %p27 = scmp.ge.s32.totalorder %s26, 2
    %s28 = scalar_select %p27, 0, %s26
    %s29 = ssub.s32 %s16, %s28
    %s30 = ssub.s32 %s17, %s24
    %s31 = sor.u32 %s29, %s30
    %p32 = scmp.eq.s32.totalorder %s31, 0
    %s34 = sadd.s32 %s33, 1
    %s35 = scalar_select %p32, %s33, %s34
    %p38 = pneg %p32
    %p39 = scmp.eq.s32.totalorder %s9, 1
    %p40 = por %p38, %p39
    %p41 = scmp.ne.s32.totalorder %s33, %s36
    %p42 = scmp.eq.s32.totalorder %s9, 0
    %p43 = por %p41, %p42
    %p44 = scmp.ne.s32.totalorder %s33, %s36
    %p45 = scmp.eq.s32.totalorder %s14, 1
    %p46 = por %p44, %p45
    %p47 = scmp.ne.s32.totalorder %s36, %s37
    %p48 = scmp.eq.s32.totalorder %s14, 0
    %p49 = por %p47, %p48
    %p50 = scmp.ne.s32.totalorder %s36, %s37
    %p51 = scmp.eq.s32.totalorder %s15, 1
    %p52 = por %p50, %p51
    %p54 = scmp.ne.s32.totalorder %s37, %s53
    %p55 = scmp.eq.s32.totalorder %s15, 0
    %p56 = por %p54, %p55
    %s57 = ssub.s32 %s16, %s28
    %p58 = scmp.eq.s32.totalorder %s57, 0
    %s60 = sadd.s32 %s59, 1
    %s61 = scalar_select %p58, %s59, %s60
    %p64 = pneg %p58
    %p65 = scmp.eq.s32.totalorder %s9, 1
    %p66 = por %p64, %p65
    %p67 = scmp.ne.s32.totalorder %s59, %s62
    %p68 = scmp.eq.s32.totalorder %s9, 0
    %p69 = por %p67, %p68
    %p70 = scmp.ne.s32.totalorder %s59, %s62
    %p71 = scmp.eq.s32.totalorder %s14, 1
    %p72 = por %p70, %p71
    %p73 = scmp.ne.s32.totalorder %s62, %s63
    %p74 = scmp.eq.s32.totalorder %s14, 0
    %p75 = por %p73, %p74
    %p76 = scmp.ne.s32.totalorder %s62, %s63
    %p77 = scmp.eq.s32.totalorder %s15, 1
    %p78 = por %p76, %p77
    %p80 = scmp.ne.s32.totalorder %s63, %s79
    %p81 = scmp.eq.s32.totalorder %s15, 0
    %p82 = por %p80, %p81
    %s83 = ssub.s32 %s16, %s28
    %s84 = ssub.s32 %s17, %s24
    %s85 = sor.u32 %s83, %s84
    %p86 = scmp.eq.s32.totalorder %s85, 0
    %s88 = sadd.s32 %s87, 1
    %s89 = scalar_select %p86, %s87, %s88
    %p92 = pneg %p86
    %p93 = scmp.eq.s32.totalorder %s9, 1
    %p94 = por %p92, %p93
    %p95 = scmp.ne.s32.totalorder %s87, %s90
    %p96 = scmp.eq.s32.totalorder %s9, 0
    %p97 = por %p95, %p96
    %p98 = scmp.ne.s32.totalorder %s87, %s90
    %p99 = scmp.eq.s32.totalorder %s14, 1
    %p100 = por %p98, %p99
    %p101 = scmp.ne.s32.totalorder %s90, %s91
    %p102 = scmp.eq.s32.totalorder %s14, 0
    %p103 = por %p101, %p102
    %p104 = scmp.ne.s32.totalorder %s90, %s91
    %p105 = scmp.eq.s32.totalorder %s15, 1
    %p106 = por %p104, %p105
    %p108 = scmp.ne.s32.totalorder %s91, %s107
    %p109 = scmp.eq.s32.totalorder %s15, 0
    %p110 = por %p108, %p109
    %s111 = ssub.s32 %s16, %s28
    %s112 = ssub.s32 %s17, %s24
    %s113 = sor.u32 %s111, %s112
    %p114 = scmp.eq.s32.totalorder %s113, 0
    %s116 = sadd.s32 %s115, 1
    %s117 = scalar_select %p114, %s115, %s116
    %p120 = pneg %p114
    %p121 = scmp.eq.s32.totalorder %s9, 1
    %p122 = por %p120, %p121
    %p123 = scmp.ne.s32.totalorder %s115, %s118
    %p124 = scmp.eq.s32.totalorder %s9, 0
    %p125 = por %p123, %p124
    %p126 = scmp.ne.s32.totalorder %s115, %s118
    %p127 = scmp.eq.s32.totalorder %s14, 1
    %p128 = por %p126, %p127
    %p129 = scmp.ne.s32.totalorder %s118, %s119
    %p130 = scmp.eq.s32.totalorder %s14, 0
    %p131 = por %p129, %p130
    %p132 = scmp.ne.s32.totalorder %s118, %s119
    %p133 = scmp.eq.s32.totalorder %s15, 1
    %p134 = por %p132, %p133
    %p136 = scmp.ne.s32.totalorder %s119, %s135
    %p137 = scmp.eq.s32.totalorder %s15, 0
    %p138 = por %p136, %p137
    %p139 = scmp.le.s32.totalorder 1, %s9
    %p140 = scmp.lt.s32.totalorder %s9, 3
    %p141 = pnand %p139, %p140
    %p142 = pneg %p141
    // Predicated region
    $region9: #{vae_forward.26} parent=5 // pred_check
      _
    $region10: #{vae_forward.26} parent=5 // pred_check_branch
      %144 = sbr.rel (%p141) target = $region12
    $region11: #{vae_forward.26} parent=5 // pred_region
      %s145 = ssub.s32 %s9, 1
    $region12: #{vae_forward.26} parent=5 // pred_fallthru
      _
    %p146 = scmp.lt.s32.totalorder %s9, 2
    // Predicated region
    $region13: #{vae_forward.26} parent=5 // pred_check
      %p147 = pneg %p146
    $region14: #{vae_forward.26} parent=5 // pred_check_branch
      %149 = sbr.rel (%p147) target = $region16
    $region15: #{vae_forward.26} parent=5 // pred_region
      // Predicated region
      $region17: #{vae_forward.26} parent=15 // pred_check
        %p150 = pneg %p43
      $region18: #{vae_forward.26} parent=15 // pred_check_branch
        %152 = sbr.rel (%p150) target = $region20
      $region19: #{vae_forward.26} parent=15 // pred_region
        %p153 = scmp.lt.s32.totalorder %s16, 1
        %s154 = scalar_select %p153, %s16, 1
        %p155 = scmp.lt.s32.totalorder %s17, 0
        %s156 = scalar_select %p155, %s17, 0
        %s157 = smul.addr %s154, 2
        %s158 = sadd.s32 %s156, %s157
        %s159 = smul.addr %s158, 8
        %s160 = scalar_lea.vmem %s0, %s159
      $region20: #{vae_forward.26} parent=15 // pred_fallthru
        _
      // Predicated region
      $region21: #{vae_forward.26} parent=15 // pred_check
        %p161 = pneg %p69
      $region22: #{vae_forward.26} parent=15 // pred_check_branch
        %163 = sbr.rel (%p161) target = $region24
      $region23: #{vae_forward.26} parent=15 // pred_region
        %p164 = scmp.lt.s32.totalorder %s16, 1
        %s165 = scalar_select %p164, %s16, 1
        %s166 = smul.addr %s165, 2
        %s167 = smul.addr %s166, 8
        %s168 = scalar_lea.vmem %s1, %s167
      $region24: #{vae_forward.26} parent=15 // pred_fallthru
        _
      // Predicated region
      $region25: #{vae_forward.26} parent=15 // pred_check
        %p169 = pneg %p97
      $region26: #{vae_forward.26} parent=15 // pred_check_branch
        %171 = sbr.rel (%p169) target = $region28
      $region27: #{vae_forward.26} parent=15 // pred_region
        %p172 = scmp.lt.s32.totalorder %s16, 1
        %s173 = scalar_select %p172, %s16, 1
        %p174 = scmp.lt.s32.totalorder %s17, 0
        %s175 = scalar_select %p174, %s17, 0
        %s176 = smul.addr %s173, 2
        %s177 = sadd.s32 %s175, %s176
        %s178 = smul.addr %s177, 4
        %s179 = scalar_lea.vmem %s2, %s178
      $region28: #{vae_forward.26} parent=15 // pred_fallthru
        _
    $region16: #{vae_forward.26} parent=5 // pred_fallthru
      _
    %p180 = scmp.le.s32.totalorder 1, %s9
    %p181 = scmp.lt.s32.totalorder %s9, 3
    %p182 = pnand %p180, %p181
    %p183 = pneg %p182
    // Predicated region
    $region29: #{vae_forward.26} parent=5 // pred_check
      _
    $region30: #{vae_forward.26} parent=5 // pred_check_branch
      %185 = sbr.rel (%p182) target = $region32
    $region31: #{vae_forward.26} parent=5 // pred_region
      %s186 = ssub.s32 %s9, 1
      %p187 = scmp.lt.s32.totalorder %s18, 1
      %s188 = scalar_select %p187, %s18, 1
      %p189 = scmp.lt.s32.totalorder %s19, 0
      %s190 = scalar_select %p189, %s19, 0
      %s191 = smul.addr %s188, 2
      %s192 = sadd.s32 %s190, %s191
      %s193 = smul.addr %s192, 8
      %s194 = scalar_lea.vmem %s0, %s193
      %p195 = pneg %p49
      %p196 = pneg %p46
      %p197 = scmp.lt.s32.totalorder %s18, 1
      %s198 = scalar_select %p197, %s18, 1
      %s199 = smul.addr %s198, 2
      %s200 = smul.addr %s199, 8
      %s201 = scalar_lea.vmem %s1, %s200
      %p202 = pneg %p75
      %p203 = pneg %p72
      %p204 = scmp.lt.s32.totalorder %s18, 1
      %s205 = scalar_select %p204, %s18, 1
      %p206 = scmp.lt.s32.totalorder %s19, 0
      %s207 = scalar_select %p206, %s19, 0
      %s208 = smul.addr %s205, 2
      %s209 = sadd.s32 %s207, %s208
      %s210 = smul.addr %s209, 4
      %s211 = scalar_lea.vmem %s2, %s210
      %p212 = pneg %p103
      %p213 = pneg %p100
      %p214 = pneg %p131
      %p215 = pneg %p128
      %p216 = scmp.lt.s32.totalorder %s18, 1
      %s217 = scalar_select %p216, %s18, 1
      %p218 = scmp.lt.s32.totalorder %s19, 0
      %s219 = scalar_select %p218, %s19, 0
      %s220 = smul.addr %s217, 2
      %s221 = sadd.s32 %s219, %s220
      %s222 = smul.addr %s221, 4
      %s223 = scalar_lea.vmem %s3, %s222
      %p224 = scmp.lt.s32.totalorder %s18, 1
      %s225 = scalar_select %p224, %s18, 1
      %p226 = scmp.lt.s32.totalorder %s19, 0
      %s227 = scalar_select %p226, %s19, 0
      %s228 = smul.addr %s225, 2
      %s229 = sadd.s32 %s227, %s228
      %s230 = smul.addr %s229, 8
      %s231 = scalar_lea.vmem %s0, %s230
      %p232 = scmp.lt.s32.totalorder %s18, 1
      %s233 = scalar_select %p232, %s18, 1
      %s234 = smul.addr %s233, 2
      %s235 = smul.addr %s234, 8
      %s236 = scalar_lea.vmem %s1, %s235
      %p237 = scmp.lt.s32.totalorder %s18, 1
      %s238 = scalar_select %p237, %s18, 1
      %p239 = scmp.lt.s32.totalorder %s19, 0
      %s240 = scalar_select %p239, %s19, 0
      %s241 = smul.addr %s238, 2
      %s242 = sadd.s32 %s240, %s241
      %s243 = smul.addr %s242, 4
      %s244 = scalar_lea.vmem %s2, %s243
      %p245 = scmp.lt.s32.totalorder %s18, 1
      %s246 = scalar_select %p245, %s18, 1
      %p247 = scmp.lt.s32.totalorder %s19, 0
      %s248 = scalar_select %p247, %s19, 0
      %s249 = smul.addr %s246, 2
      %s250 = sadd.s32 %s248, %s249
      %s251 = smul.addr %s250, 4
      %s252 = scalar_lea.vmem %s3, %s251
      %v253 = vld [vmem:[%s236] sm:$0xff]
      %v254 = vld [vmem:[%s236 + $0x8] sm:$0xff]
      %v255 = vmul.f32 %v253, 0.015625
      %v256 = vmul.f32 %v254, 0.015625
      %v257 = vmul.f32 %v255, %v255
      %v258 = vmul.f32 %v256, %v256
      %261 = vrot.lane.b32.xlu0 %v257, 1
      %v262 = vpop.permute.xlu0 %261
      %263 = vrot.lane.b32.xlu0 %v258, 1
      %v264 = vpop.permute.xlu0 %263
      %v267 = vsub.f32 %v255, %v262
      %v268 = vsub.f32 %v256, %v264
      %v269 = vmax.f32 %v267, 0.0
      %v270 = vmax.f32 %v268, 0.0
      %v271 = vld [vmem:[%s231] sm:$0xff]
      %v272 = vld [vmem:[%s231 + $0x8] sm:$0xff]
      %274 = vset.pattern.permute.xlu0 0
      %275 = vperm.xlu0 %274, %v255
      %v276 = vpop.permute.xlu0 %275
      %279 = vset.pattern.permute.xlu0 0
      %280 = vperm.xlu0 %279, %v256
      %v281 = vpop.permute.xlu0 %280
      %v283 = vsub.f32 %v271, %v276
      %v284 = vsub.f32 %v272, %v281
      %v285 = vadd.f32 %v269, 1e-05
      %v286 = vadd.f32 %v270, 1e-05
      %v287 = vrsqrt.pop %v285
      %v288 = vrsqrt.pop %v286
      %290 = vset.pattern.permute.xlu0 1
      %291 = vperm.xlu0 %290, %v287
      %v292 = vpop.permute.xlu0 %291
      %295 = vset.pattern.permute.xlu0 1
      %296 = vperm.xlu0 %295, %v288
      %v297 = vpop.permute.xlu0 %296
      %v299 = vmul.f32 %v283, %v292
      %v300 = vmul.f32 %v284, %v297
      %v301 = vld [vmem:[%s244] sm:$0xf]
      %v302 = vld [vmem:[%s244 + $0x4] sm:$0xf]
      %v303 = vunpack.c.l.bf16 %v301
      %v304 = vunpack.c.l.bf16 %v302
      %v305 = vadd.f32 %v299, %v303
      %v306 = vadd.f32 %v300, %v304
      %v307 = vpack.c.bf16 %v306, %v305
      %v309 = vunpack.c.l.b16 %v307
      %v310 = vunpack.c.h.b16 %v307
      %v311 = vpack.c.b16 %v309, %v309
      %v312 = vpack.c.b16 %v310, %v310
      %vm315 = vcmask 519168
      %316 = vst.msk [vmem:[%s252] sm:$0xf] %vm315, %v311
      %317 = vst.msk [vmem:[%s252 + $0x4] sm:$0xf] %vm315, %v312
      %p318 = scmp.lt.s32.totalorder %s18, 1
      %s319 = scalar_select %p318, %s18, 1
      %p320 = scmp.lt.s32.totalorder %s19, 0
      %s321 = scalar_select %p320, %s19, 0
      %s322 = smul.addr %s319, 2
      %s323 = sadd.s32 %s321, %s322
      %s324 = smul.addr %s323, 4
      %s325 = scalar_lea.vmem %s3, %s324
      // Predicated region
      $region33: #{vae_forward.26} parent=31 // pred_check
        %p326 = pneg %p128
      $region34: #{vae_forward.26} parent=31 // pred_check_branch
        %328 = sbr.rel (%p326) target = $region36
      $region35: #{vae_forward.26} parent=31 // pred_region
        _
      $region36: #{vae_forward.26} parent=31 // pred_fallthru
        _
    $region32: #{vae_forward.26} parent=5 // pred_fallthru
      _
    %p329 = scmp.le.s32.totalorder 2, %s9
    // Predicated region
    $region37: #{vae_forward.26} parent=5 // pred_check
      %p330 = pneg %p329
    $region38: #{vae_forward.26} parent=5 // pred_check_branch
      %332 = sbr.rel (%p330) target = $region40
    $region39: #{vae_forward.26} parent=5 // pred_region
      %s333 = ssub.s32 %s9, 2
      // Predicated region
      $region41: #{vae_forward.26} parent=39 // pred_check
        %p334 = pneg %p134
      $region42: #{vae_forward.26} parent=39 // pred_check_branch
        %336 = sbr.rel (%p334) target = $region44
      $region43: #{vae_forward.26} parent=39 // pred_region
        %p337 = scmp.lt.s32.totalorder %s20, 1
        %s338 = scalar_select %p337, %s20, 1
        %p339 = scmp.lt.s32.totalorder %s21, 0
        %s340 = scalar_select %p339, %s21, 0
        %s341 = smul.addr %s338, 2
        %s342 = sadd.s32 %s340, %s341
        %s343 = smul.addr %s342, 4
        %s344 = scalar_lea.vmem %s3, %s343
      $region44: #{vae_forward.26} parent=39 // pred_fallthru
        _
    $region40: #{vae_forward.26} parent=5 // pred_fallthru
      _
  $region6: #{vae_forward.26} parent=0 // loop_footer
    %s13 = sadd.s32 1, %s9
  $region7: #{vae_forward.26} parent=0 // loop_footer_branch
    %8 = sbr.rel target = $region3
  $region8: #{vae_forward.26} parent=0 // loop_exit
    _

// kernel: vae_forward.22
$region0: #{vae_forward.22}
  #allocation0 [shape = 'u32[]', space=smem, size = 0x4, offset = 0x4, fixed_abs, tag = 'smem constant byte address 0x4 - core index']
  #allocation1 [shape = 'u32[144,128]{1,0:T(1,128)}', space=vmem, size = 0x12000, scoped, tag = 'internal scratch']
  %s0 = inlined_call_operand.vmem [shape: f32[2,16,64], index: 0, kind: input, shape index: {}]
  %s1 = inlined_call_operand.vmem [shape: f32[2,16,2], index: 1, kind: input, shape index: {}]
  %s2 = inlined_call_operand.vmem [shape: bf16[2,16,64], index: 2, kind: input, shape index: {}]
  %s3 = inlined_call_operand.vmem [shape: f32[2,16,64], index: 3, kind: input, shape index: {}]
  %s4 = inlined_call_operand.vmem [shape: bf16[2,16,64], index: 4, kind: output, shape index: {}]
  %s5 = sld [smem:[#allocation0]]
  $region49: #{vae_forward.22} parent=0
    _
  %s7 = ssub.s32 1, %s5
  %s8 = scalar_select 0, %s7, %s5
  loop: start=0, step=1, limit=4
  $region2: #{vae_forward.22} parent=0 // loop_pre_header
    _
  $region3: #{vae_forward.22} parent=0 // loop_header
    %s10 = sphi 0, %s14
    %p11 = scmp.ge.s32.totalorder %s10, 4
    %s17 = sphi 0, %s29
    %s18 = sphi 0, %s25
    %s19 = sphi 0, %s17
    %s20 = sphi 0, %s18
    %s21 = sphi 0, %s19
    %s22 = sphi 0, %s20
    %s34 = sphi 0, %s36
    %s37 = sphi 0, %s34
    %s38 = sphi 0, %s37
    %s54 = sphi 0, %s38
    %s60 = sphi 0, %s62
    %s63 = sphi 0, %s60
    %s64 = sphi 0, %s63
    %s80 = sphi 0, %s64
    %s88 = sphi 0, %s90
    %s91 = sphi 0, %s88
    %s92 = sphi 0, %s91
    %s108 = sphi 0, %s92
    %s116 = sphi 0, %s118
    %s119 = sphi 0, %s116
    %s120 = sphi 0, %s119
    %s136 = sphi 0, %s120
    %s144 = sphi 0, %s146
    %s147 = sphi 0, %s144
    %s148 = sphi 0, %s147
    %s164 = sphi 0, %s148
  $region4: #{vae_forward.22} parent=0 // loop_header_branch
    %13 = sbr.rel (%p11) target = $region8
  $region5: #{vae_forward.22} parent=0 // loop_body
    %s15 = ssub.s32 %s10, 1
    %s16 = ssub.s32 %s10, 2
    %s23 = sadd.s32 1, %s18
    %p24 = scmp.ge.s32.totalorder %s23, 1
    %s25 = scalar_select %p24, 0, %s23
    %s26 = sadd.s32 1, %s17
    %s27 = scalar_select %p24, %s26, %s17
    %p28 = scmp.ge.s32.totalorder %s27, 2
    %s29 = scalar_select %p28, 0, %s27
    %s30 = ssub.s32 %s17, %s29
    %s31 = ssub.s32 %s18, %s25
    %s32 = sor.u32 %s30, %s31
    %p33 = scmp.eq.s32.totalorder %s32, 0
    %s35 = sadd.s32 %s34, 1
    %s36 = scalar_select %p33, %s34, %s35
    %p39 = pneg %p33
    %p40 = scmp.eq.s32.totalorder %s10, 1
    %p41 = por %p39, %p40
    %p42 = scmp.ne.s32.totalorder %s34, %s37
    %p43 = scmp.eq.s32.totalorder %s10, 0
    %p44 = por %p42, %p43
    %p45 = scmp.ne.s32.totalorder %s34, %s37
    %p46 = scmp.eq.s32.totalorder %s15, 1
    %p47 = por %p45, %p46
    %p48 = scmp.ne.s32.totalorder %s37, %s38
    %p49 = scmp.eq.s32.totalorder %s15, 0
    %p50 = por %p48, %p49
    %p51 = scmp.ne.s32.totalorder %s37, %s38
    %p52 = scmp.eq.s32.totalorder %s16, 1
    %p53 = por %p51, %p52
    %p55 = scmp.ne.s32.totalorder %s38, %s54
    %p56 = scmp.eq.s32.totalorder %s16, 0
    %p57 = por %p55, %p56
    %s58 = ssub.s32 %s17, %s29
    %p59 = scmp.eq.s32.totalorder %s58, 0
    %s61 = sadd.s32 %s60, 1
    %s62 = scalar_select %p59, %s60, %s61
    %p65 = pneg %p59
    %p66 = scmp.eq.s32.totalorder %s10, 1
    %p67 = por %p65, %p66
    %p68 = scmp.ne.s32.totalorder %s60, %s63
    %p69 = scmp.eq.s32.totalorder %s10, 0
    %p70 = por %p68, %p69
    %p71 = scmp.ne.s32.totalorder %s60, %s63
    %p72 = scmp.eq.s32.totalorder %s15, 1
    %p73 = por %p71, %p72
    %p74 = scmp.ne.s32.totalorder %s63, %s64
    %p75 = scmp.eq.s32.totalorder %s15, 0
    %p76 = por %p74, %p75
    %p77 = scmp.ne.s32.totalorder %s63, %s64
    %p78 = scmp.eq.s32.totalorder %s16, 1
    %p79 = por %p77, %p78
    %p81 = scmp.ne.s32.totalorder %s64, %s80
    %p82 = scmp.eq.s32.totalorder %s16, 0
    %p83 = por %p81, %p82
    %s84 = ssub.s32 %s17, %s29
    %s85 = ssub.s32 %s18, %s25
    %s86 = sor.u32 %s84, %s85
    %p87 = scmp.eq.s32.totalorder %s86, 0
    %s89 = sadd.s32 %s88, 1
    %s90 = scalar_select %p87, %s88, %s89
    %p93 = pneg %p87
    %p94 = scmp.eq.s32.totalorder %s10, 1
    %p95 = por %p93, %p94
    %p96 = scmp.ne.s32.totalorder %s88, %s91
    %p97 = scmp.eq.s32.totalorder %s10, 0
    %p98 = por %p96, %p97
    %p99 = scmp.ne.s32.totalorder %s88, %s91
    %p100 = scmp.eq.s32.totalorder %s15, 1
    %p101 = por %p99, %p100
    %p102 = scmp.ne.s32.totalorder %s91, %s92
    %p103 = scmp.eq.s32.totalorder %s15, 0
    %p104 = por %p102, %p103
    %p105 = scmp.ne.s32.totalorder %s91, %s92
    %p106 = scmp.eq.s32.totalorder %s16, 1
    %p107 = por %p105, %p106
    %p109 = scmp.ne.s32.totalorder %s92, %s108
    %p110 = scmp.eq.s32.totalorder %s16, 0
    %p111 = por %p109, %p110
    %s112 = ssub.s32 %s17, %s29
    %s113 = ssub.s32 %s18, %s25
    %s114 = sor.u32 %s112, %s113
    %p115 = scmp.eq.s32.totalorder %s114, 0
    %s117 = sadd.s32 %s116, 1
    %s118 = scalar_select %p115, %s116, %s117
    %p121 = pneg %p115
    %p122 = scmp.eq.s32.totalorder %s10, 1
    %p123 = por %p121, %p122
    %p124 = scmp.ne.s32.totalorder %s116, %s119
    %p125 = scmp.eq.s32.totalorder %s10, 0
    %p126 = por %p124, %p125
    %p127 = scmp.ne.s32.totalorder %s116, %s119
    %p128 = scmp.eq.s32.totalorder %s15, 1
    %p129 = por %p127, %p128
    %p130 = scmp.ne.s32.totalorder %s119, %s120
    %p131 = scmp.eq.s32.totalorder %s15, 0
    %p132 = por %p130, %p131
    %p133 = scmp.ne.s32.totalorder %s119, %s120
    %p134 = scmp.eq.s32.totalorder %s16, 1
    %p135 = por %p133, %p134
    %p137 = scmp.ne.s32.totalorder %s120, %s136
    %p138 = scmp.eq.s32.totalorder %s16, 0
    %p139 = por %p137, %p138
    %s140 = ssub.s32 %s17, %s29
    %s141 = ssub.s32 %s18, %s25
    %s142 = sor.u32 %s140, %s141
    %p143 = scmp.eq.s32.totalorder %s142, 0
    %s145 = sadd.s32 %s144, 1
    %s146 = scalar_select %p143, %s144, %s145
    %p149 = pneg %p143
    %p150 = scmp.eq.s32.totalorder %s10, 1
    %p151 = por %p149, %p150
    %p152 = scmp.ne.s32.totalorder %s144, %s147
    %p153 = scmp.eq.s32.totalorder %s10, 0
    %p154 = por %p152, %p153
    %p155 = scmp.ne.s32.totalorder %s144, %s147
    %p156 = scmp.eq.s32.totalorder %s15, 1
    %p157 = por %p155, %p156
    %p158 = scmp.ne.s32.totalorder %s147, %s148
    %p159 = scmp.eq.s32.totalorder %s15, 0
    %p160 = por %p158, %p159
    %p161 = scmp.ne.s32.totalorder %s147, %s148
    %p162 = scmp.eq.s32.totalorder %s16, 1
    %p163 = por %p161, %p162
    %p165 = scmp.ne.s32.totalorder %s148, %s164
    %p166 = scmp.eq.s32.totalorder %s16, 0
    %p167 = por %p165, %p166
    %p168 = scmp.le.s32.totalorder 1, %s10
    %p169 = scmp.lt.s32.totalorder %s10, 3
    %p170 = pnand %p168, %p169
    %p171 = pneg %p170
    // Predicated region
    $region9: #{vae_forward.22} parent=5 // pred_check
      _
    $region10: #{vae_forward.22} parent=5 // pred_check_branch
      %173 = sbr.rel (%p170) target = $region12
    $region11: #{vae_forward.22} parent=5 // pred_region
      %s174 = ssub.s32 %s10, 1
    $region12: #{vae_forward.22} parent=5 // pred_fallthru
      _
    %p175 = scmp.lt.s32.totalorder %s10, 2
    // Predicated region
    $region13: #{vae_forward.22} parent=5 // pred_check
      %p176 = pneg %p175
    $region14: #{vae_forward.22} parent=5 // pred_check_branch
      %178 = sbr.rel (%p176) target = $region16
    $region15: #{vae_forward.22} parent=5 // pred_region
      // Predicated region
      $region17: #{vae_forward.22} parent=15 // pred_check
        %p179 = pneg %p44
      $region18: #{vae_forward.22} parent=15 // pred_check_branch
        %181 = sbr.rel (%p179) target = $region20
      $region19: #{vae_forward.22} parent=15 // pred_region
        %p182 = scmp.lt.s32.totalorder %s17, 1
        %s183 = scalar_select %p182, %s17, 1
        %p184 = scmp.lt.s32.totalorder %s18, 0
        %s185 = scalar_select %p184, %s18, 0
        %s186 = smul.addr %s183, 2
        %s187 = sadd.s32 %s185, %s186
        %s188 = smul.addr %s187, 8
        %s189 = scalar_lea.vmem %s0, %s188
      $region20: #{vae_forward.22} parent=15 // pred_fallthru
        _
      // Predicated region
      $region21: #{vae_forward.22} parent=15 // pred_check
        %p190 = pneg %p70
      $region22: #{vae_forward.22} parent=15 // pred_check_branch
        %192 = sbr.rel (%p190) target = $region24
      $region23: #{vae_forward.22} parent=15 // pred_region
        %p193 = scmp.lt.s32.totalorder %s17, 1
        %s194 = scalar_select %p193, %s17, 1
        %s195 = smul.addr %s194, 2
        %s196 = smul.addr %s195, 8
        %s197 = scalar_lea.vmem %s1, %s196
      $region24: #{vae_forward.22} parent=15 // pred_fallthru
        _
      // Predicated region
      $region25: #{vae_forward.22} parent=15 // pred_check
        %p198 = pneg %p98
      $region26: #{vae_forward.22} parent=15 // pred_check_branch
        %200 = sbr.rel (%p198) target = $region28
      $region27: #{vae_forward.22} parent=15 // pred_region
        %p201 = scmp.lt.s32.totalorder %s17, 1
        %s202 = scalar_select %p201, %s17, 1
        %p203 = scmp.lt.s32.totalorder %s18, 0
        %s204 = scalar_select %p203, %s18, 0
        %s205 = smul.addr %s202, 2
        %s206 = sadd.s32 %s204, %s205
        %s207 = smul.addr %s206, 4
        %s208 = scalar_lea.vmem %s2, %s207
      $region28: #{vae_forward.22} parent=15 // pred_fallthru
        _
      // Predicated region
      $region29: #{vae_forward.22} parent=15 // pred_check
        %p209 = pneg %p126
      $region30: #{vae_forward.22} parent=15 // pred_check_branch
        %211 = sbr.rel (%p209) target = $region32
      $region31: #{vae_forward.22} parent=15 // pred_region
        %p212 = scmp.lt.s32.totalorder %s17, 1
        %s213 = scalar_select %p212, %s17, 1
        %p214 = scmp.lt.s32.totalorder %s18, 0
        %s215 = scalar_select %p214, %s18, 0
        %s216 = smul.addr %s213, 2
        %s217 = sadd.s32 %s215, %s216
        %s218 = smul.addr %s217, 8
        %s219 = scalar_lea.vmem %s3, %s218
      $region32: #{vae_forward.22} parent=15 // pred_fallthru
        _
    $region16: #{vae_forward.22} parent=5 // pred_fallthru
      _
    %p220 = scmp.le.s32.totalorder 1, %s10
    %p221 = scmp.lt.s32.totalorder %s10, 3
    %p222 = pnand %p220, %p221
    %p223 = pneg %p222
    // Predicated region
    $region33: #{vae_forward.22} parent=5 // pred_check
      _
    $region34: #{vae_forward.22} parent=5 // pred_check_branch
      %225 = sbr.rel (%p222) target = $region36
    $region35: #{vae_forward.22} parent=5 // pred_region
      %s226 = ssub.s32 %s10, 1
      %p227 = scmp.lt.s32.totalorder %s19, 1
      %s228 = scalar_select %p227, %s19, 1
      %p229 = scmp.lt.s32.totalorder %s20, 0
      %s230 = scalar_select %p229, %s20, 0
      %s231 = smul.addr %s228, 2
      %s232 = sadd.s32 %s230, %s231
      %s233 = smul.addr %s232, 8
      %s234 = scalar_lea.vmem %s0, %s233
      %p235 = pneg %p50
      %p236 = pneg %p47
      %p237 = scmp.lt.s32.totalorder %s19, 1
      %s238 = scalar_select %p237, %s19, 1
      %s239 = smul.addr %s238, 2
      %s240 = smul.addr %s239, 8
      %s241 = scalar_lea.vmem %s1, %s240
      %p242 = pneg %p76
      %p243 = pneg %p73
      %p244 = scmp.lt.s32.totalorder %s19, 1
      %s245 = scalar_select %p244, %s19, 1
      %p246 = scmp.lt.s32.totalorder %s20, 0
      %s247 = scalar_select %p246, %s20, 0
      %s248 = smul.addr %s245, 2
      %s249 = sadd.s32 %s247, %s248
      %s250 = smul.addr %s249, 4
      %s251 = scalar_lea.vmem %s2, %s250
      %p252 = pneg %p104
      %p253 = pneg %p101
      %p254 = scmp.lt.s32.totalorder %s19, 1
      %s255 = scalar_select %p254, %s19, 1
      %p256 = scmp.lt.s32.totalorder %s20, 0
      %s257 = scalar_select %p256, %s20, 0
      %s258 = smul.addr %s255, 2
      %s259 = sadd.s32 %s257, %s258
      %s260 = smul.addr %s259, 8
      %s261 = scalar_lea.vmem %s3, %s260
      %p262 = pneg %p132
      %p263 = pneg %p129
      %p264 = pneg %p160
      %p265 = pneg %p157
      %p266 = scmp.lt.s32.totalorder %s19, 1
      %s267 = scalar_select %p266, %s19, 1
      %p268 = scmp.lt.s32.totalorder %s20, 0
      %s269 = scalar_select %p268, %s20, 0
      %s270 = smul.addr %s267, 2
      %s271 = sadd.s32 %s269, %s270
      %s272 = smul.addr %s271, 4
      %s273 = scalar_lea.vmem %s4, %s272
      %p274 = scmp.lt.s32.totalorder %s19, 1
      %s275 = scalar_select %p274, %s19, 1
      %p276 = scmp.lt.s32.totalorder %s20, 0
      %s277 = scalar_select %p276, %s20, 0
      %s278 = smul.addr %s275, 2
      %s279 = sadd.s32 %s277, %s278
      %s280 = smul.addr %s279, 8
      %s281 = scalar_lea.vmem %s0, %s280
      %p282 = scmp.lt.s32.totalorder %s19, 1
      %s283 = scalar_select %p282, %s19, 1
      %s284 = smul.addr %s283, 2
      %s285 = smul.addr %s284, 8
      %s286 = scalar_lea.vmem %s1, %s285
      %p287 = scmp.lt.s32.totalorder %s19, 1
      %s288 = scalar_select %p287, %s19, 1
      %p289 = scmp.lt.s32.totalorder %s20, 0
      %s290 = scalar_select %p289, %s20, 0
      %s291 = smul.addr %s288, 2
      %s292 = sadd.s32 %s290, %s291
      %s293 = smul.addr %s292, 4
      %s294 = scalar_lea.vmem %s2, %s293
      %p295 = scmp.lt.s32.totalorder %s19, 1
      %s296 = scalar_select %p295, %s19, 1
      %p297 = scmp.lt.s32.totalorder %s20, 0
      %s298 = scalar_select %p297, %s20, 0
      %s299 = smul.addr %s296, 2
      %s300 = sadd.s32 %s298, %s299
      %s301 = smul.addr %s300, 8
      %s302 = scalar_lea.vmem %s3, %s301
      %p303 = scmp.lt.s32.totalorder %s19, 1
      %s304 = scalar_select %p303, %s19, 1
      %p305 = scmp.lt.s32.totalorder %s20, 0
      %s306 = scalar_select %p305, %s20, 0
      %s307 = smul.addr %s304, 2
      %s308 = sadd.s32 %s306, %s307
      %s309 = smul.addr %s308, 4
      %s310 = scalar_lea.vmem %s4, %s309
      %v311 = vld [vmem:[%s286] sm:$0xff]
      %v312 = vld [vmem:[%s286 + $0x8] sm:$0xff]
      %v313 = vmul.f32 %v311, 0.015625
      %v314 = vmul.f32 %v312, 0.015625
      %v315 = vmul.f32 %v313, %v313
      %v316 = vmul.f32 %v314, %v314
      %319 = vrot.lane.b32.xlu0 %v315, 1
      %v320 = vpop.permute.xlu0 %319
      %321 = vrot.lane.b32.xlu0 %v316, 1
      %v322 = vpop.permute.xlu0 %321
      %v325 = vsub.f32 %v313, %v320
      %v326 = vsub.f32 %v314, %v322
      %v327 = vmax.f32 %v325, 0.0
      %v328 = vmax.f32 %v326, 0.0
      %v329 = vld [vmem:[%s281] sm:$0xff]
      %v330 = vld [vmem:[%s281 + $0x8] sm:$0xff]
      %332 = vset.pattern.permute.xlu0 0
      %333 = vperm.xlu0 %332, %v313
      %v334 = vpop.permute.xlu0 %333
      %337 = vset.pattern.permute.xlu0 0
      %338 = vperm.xlu0 %337, %v314
      %v339 = vpop.permute.xlu0 %338
      %v341 = vsub.f32 %v329, %v334
      %v342 = vsub.f32 %v330, %v339
      %v343 = vadd.f32 %v327, 1e-05
      %v344 = vadd.f32 %v328, 1e-05
      %v345 = vrsqrt.pop %v343
      %v346 = vrsqrt.pop %v344
      %348 = vset.pattern.permute.xlu0 1
      %349 = vperm.xlu0 %348, %v345
      %v350 = vpop.permute.xlu0 %349
      %353 = vset.pattern.permute.xlu0 1
      %354 = vperm.xlu0 %353, %v346
      %v355 = vpop.permute.xlu0 %354
      %v357 = vmul.f32 %v341, %v350
      %v358 = vmul.f32 %v342, %v355
      %v359 = vld [vmem:[%s294] sm:$0xf]
      %v360 = vld [vmem:[%s294 + $0x4] sm:$0xf]
      %v361 = vunpack.c.l.bf16 %v359
      %v362 = vunpack.c.l.bf16 %v360
      %v363 = vadd.f32 %v357, %v361
      %v364 = vadd.f32 %v358, %v362
      %v365 = vld [vmem:[%s302] sm:$0xff]
      %v366 = vld [vmem:[%s302 + $0x8] sm:$0xff]
      %v367 = vadd.f32 %v363, %v365
      %v368 = vadd.f32 %v364, %v366
      %v369 = vpack.c.bf16 %v368, %v367
      %v371 = vunpack.c.l.b16 %v369
      %v372 = vunpack.c.h.b16 %v369
      %v373 = vpack.c.b16 %v371, %v371
      %v374 = vpack.c.b16 %v372, %v372
      %vm377 = vcmask 519168
      %378 = vst.msk [vmem:[%s310] sm:$0xf] %vm377, %v373
      %379 = vst.msk [vmem:[%s310 + $0x4] sm:$0xf] %vm377, %v374
      %p380 = scmp.lt.s32.totalorder %s19, 1
      %s381 = scalar_select %p380, %s19, 1
      %p382 = scmp.lt.s32.totalorder %s20, 0
      %s383 = scalar_select %p382, %s20, 0
      %s384 = smul.addr %s381, 2
      %s385 = sadd.s32 %s383, %s384
      %s386 = smul.addr %s385, 4
      %s387 = scalar_lea.vmem %s4, %s386
      // Predicated region
      $region37: #{vae_forward.22} parent=35 // pred_check
        %p388 = pneg %p157
      $region38: #{vae_forward.22} parent=35 // pred_check_branch
        %390 = sbr.rel (%p388) target = $region40
      $region39: #{vae_forward.22} parent=35 // pred_region
        _
      $region40: #{vae_forward.22} parent=35 // pred_fallthru
        _
    $region36: #{vae_forward.22} parent=5 // pred_fallthru
      _
    %p391 = scmp.le.s32.totalorder 2, %s10
    // Predicated region
    $region41: #{vae_forward.22} parent=5 // pred_check
      %p392 = pneg %p391
    $region42: #{vae_forward.22} parent=5 // pred_check_branch
      %394 = sbr.rel (%p392) target = $region44
    $region43: #{vae_forward.22} parent=5 // pred_region
      %s395 = ssub.s32 %s10, 2
      // Predicated region
      $region45: #{vae_forward.22} parent=43 // pred_check
        %p396 = pneg %p163
      $region46: #{vae_forward.22} parent=43 // pred_check_branch
        %398 = sbr.rel (%p396) target = $region48
      $region47: #{vae_forward.22} parent=43 // pred_region
        %p399 = scmp.lt.s32.totalorder %s21, 1
        %s400 = scalar_select %p399, %s21, 1
        %p401 = scmp.lt.s32.totalorder %s22, 0
        %s402 = scalar_select %p401, %s22, 0
        %s403 = smul.addr %s400, 2
        %s404 = sadd.s32 %s402, %s403
        %s405 = smul.addr %s404, 4
        %s406 = scalar_lea.vmem %s4, %s405
      $region48: #{vae_forward.22} parent=43 // pred_fallthru
        _
    $region44: #{vae_forward.22} parent=5 // pred_fallthru
      _
  $region6: #{vae_forward.22} parent=0 // loop_footer
    %s14 = sadd.s32 1, %s10
  $region7: #{vae_forward.22} parent=0 // loop_footer_branch
    %9 = sbr.rel target = $region3
  $region8: #{vae_forward.22} parent=0 // loop_exit
    _

// kernel: vae_forward.27
$region0: #{vae_forward.27}
  #allocation0 [shape = 'u32[]', space=smem, size = 0x4, offset = 0x4, fixed_abs, tag = 'smem constant byte address 0x4 - core index']
  #allocation1 [shape = 'u32[144,128]{1,0:T(1,128)}', space=vmem, size = 0x12000, scoped, tag = 'internal scratch']
  %s0 = inlined_call_operand.vmem [shape: bf16[8,512], index: 0, kind: input, shape index: {}]
  %s1 = inlined_call_operand.vmem [shape: bf16[2,512,256], index: 1, kind: input, shape index: {}]
  %s2 = inlined_call_operand.vmem [shape: f32[2,8,256], index: 2, kind: output, shape index: {0}]
  %s3 = inlined_call_operand.vmem [shape: f32[2,1,8,2], index: 3, kind: output, shape index: {1}]
  %4 = xla_tuple %s2, %s3
  %s5 = sld [smem:[#allocation0]]
  $region57: #{vae_forward.27} parent=0
    _
  %s7 = ssub.s32 1, %s5
  %s8 = scalar_select 0, %s7, %s5
  loop: start=0, step=1, limit=4
  $region2: #{vae_forward.27} parent=0 // loop_pre_header
    _
  $region3: #{vae_forward.27} parent=0 // loop_header
    %s10 = sphi 0, %s14
    %p11 = scmp.ge.s32.totalorder %s10, 4
    %s17 = sphi 0, %s36
    %s18 = sphi 0, %s32
    %s19 = sphi 0, %s28
    %s20 = sphi 0, %s17
    %s21 = sphi 0, %s18
    %s22 = sphi 0, %s19
    %s23 = sphi 0, %s20
    %s24 = sphi 0, %s21
    %s25 = sphi 0, %s22
    %s37 = sphi 0, %s37
    %s39 = sphi 0, %s37
    %s40 = sphi 0, %s39
    %s54 = sphi 0, %s40
    %s64 = sphi 0, %s66
    %s67 = sphi 0, %s64
    %s68 = sphi 0, %s67
    %s84 = sphi 0, %s68
    %s92 = sphi 0, %s94
    %s95 = sphi 0, %s92
    %s96 = sphi 0, %s95
    %s112 = sphi 0, %s96
    %s120 = sphi 0, %s122
    %s123 = sphi 0, %s120
    %s124 = sphi 0, %s123
    %s140 = sphi 0, %s124
  $region4: #{vae_forward.27} parent=0 // loop_header_branch
    %13 = sbr.rel (%p11) target = $region8
  $region5: #{vae_forward.27} parent=0 // loop_body
    %s15 = ssub.s32 %s10, 1
    %s16 = ssub.s32 %s10, 2
    %s26 = sadd.s32 1, %s19
    %p27 = scmp.ge.s32.totalorder %s26, 1
    %s28 = scalar_select %p27, 0, %s26
    %s29 = sadd.s32 1, %s18
    %s30 = scalar_select %p27, %s29, %s18
    %p31 = scmp.ge.s32.totalorder %s30, 1
    %s32 = scalar_select %p31, 0, %s30
    %s33 = sadd.s32 1, %s17
    %s34 = scalar_select %p31, %s33, %s17
    %p35 = scmp.ge.s32.totalorder %s34, 2
    %s36 = scalar_select %p35, 0, %s34
    %s38 = sadd.s32 %s37, 1
    %p41 = scmp.eq.s32.totalorder %s10, 1
    %p42 = scmp.ne.s32.totalorder %s37, %s39
    %p43 = scmp.eq.s32.totalorder %s10, 0
    %p44 = por %p42, %p43
    %p45 = scmp.ne.s32.totalorder %s37, %s39
    %p46 = scmp.eq.s32.totalorder %s15, 1
    %p47 = por %p45, %p46
    %p48 = scmp.ne.s32.totalorder %s39, %s40
    %p49 = scmp.eq.s32.totalorder %s15, 0
    %p50 = por %p48, %p49
    %p51 = scmp.ne.s32.totalorder %s39, %s40
    %p52 = scmp.eq.s32.totalorder %s16, 1
    %p53 = por %p51, %p52
    %p55 = scmp.ne.s32.totalorder %s40, %s54
    %p56 = scmp.eq.s32.totalorder %s16, 0
    %p57 = por %p55, %p56
    %s58 = ssub.s32 %s17, %s36
    %s59 = ssub.s32 %s19, %s28
    %s60 = sor.u32 %s58, %s59
    %s61 = ssub.s32 %s18, %s32
    %s62 = sor.u32 %s60, %s61
    %p63 = scmp.eq.s32.totalorder %s62, 0
    %s65 = sadd.s32 %s64, 1
    %s66 = scalar_select %p63, %s64, %s65
    %p69 = pneg %p63
    %p70 = scmp.eq.s32.totalorder %s10, 1
    %p71 = por %p69, %p70
    %p72 = scmp.ne.s32.totalorder %s64, %s67
    %p73 = scmp.eq.s32.totalorder %s10, 0
    %p74 = por %p72, %p73
    %p75 = scmp.ne.s32.totalorder %s64, %s67
    %p76 = scmp.eq.s32.totalorder %s15, 1
    %p77 = por %p75, %p76
    %p78 = scmp.ne.s32.totalorder %s67, %s68
    %p79 = scmp.eq.s32.totalorder %s15, 0
    %p80 = por %p78, %p79
    %p81 = scmp.ne.s32.totalorder %s67, %s68
    %p82 = scmp.eq.s32.totalorder %s16, 1
    %p83 = por %p81, %p82
    %p85 = scmp.ne.s32.totalorder %s68, %s84
    %p86 = scmp.eq.s32.totalorder %s16, 0
    %p87 = por %p85, %p86
    %s88 = ssub.s32 %s17, %s36
    %s89 = ssub.s32 %s18, %s32
    %s90 = sor.u32 %s88, %s89
    %p91 = scmp.eq.s32.totalorder %s90, 0
    %s93 = sadd.s32 %s92, 1
    %s94 = scalar_select %p91, %s92, %s93
    %p97 = pneg %p91
    %p98 = scmp.eq.s32.totalorder %s10, 1
    %p99 = por %p97, %p98
    %p100 = scmp.ne.s32.totalorder %s92, %s95
    %p101 = scmp.eq.s32.totalorder %s10, 0
    %p102 = por %p100, %p101
    %p103 = scmp.ne.s32.totalorder %s92, %s95
    %p104 = scmp.eq.s32.totalorder %s15, 1
    %p105 = por %p103, %p104
    %p106 = scmp.ne.s32.totalorder %s95, %s96
    %p107 = scmp.eq.s32.totalorder %s15, 0
    %p108 = por %p106, %p107
    %p109 = scmp.ne.s32.totalorder %s95, %s96
    %p110 = scmp.eq.s32.totalorder %s16, 1
    %p111 = por %p109, %p110
    %p113 = scmp.ne.s32.totalorder %s96, %s112
    %p114 = scmp.eq.s32.totalorder %s16, 0
    %p115 = por %p113, %p114
    %s116 = ssub.s32 %s17, %s36
    %s117 = ssub.s32 %s18, %s32
    %s118 = sor.u32 %s116, %s117
    %p119 = scmp.eq.s32.totalorder %s118, 0
    %s121 = sadd.s32 %s120, 1
    %s122 = scalar_select %p119, %s120, %s121
    %p125 = pneg %p119
    %p126 = scmp.eq.s32.totalorder %s10, 1
    %p127 = por %p125, %p126
    %p128 = scmp.ne.s32.totalorder %s120, %s123
    %p129 = scmp.eq.s32.totalorder %s10, 0
    %p130 = por %p128, %p129
    %p131 = scmp.ne.s32.totalorder %s120, %s123
    %p132 = scmp.eq.s32.totalorder %s15, 1
    %p133 = por %p131, %p132
    %p134 = scmp.ne.s32.totalorder %s123, %s124
    %p135 = scmp.eq.s32.totalorder %s15, 0
    %p136 = por %p134, %p135
    %p137 = scmp.ne.s32.totalorder %s123, %s124
    %p138 = scmp.eq.s32.totalorder %s16, 1
    %p139 = por %p137, %p138
    %p141 = scmp.ne.s32.totalorder %s124, %s140
    %p142 = scmp.eq.s32.totalorder %s16, 0
    %p143 = por %p141, %p142
    %p144 = scmp.le.s32.totalorder 1, %s10
    %p145 = scmp.lt.s32.totalorder %s10, 3
    %p146 = pnand %p144, %p145
    %p147 = pneg %p146
    // Predicated region
    $region9: #{vae_forward.27} parent=5 // pred_check
      _
    $region10: #{vae_forward.27} parent=5 // pred_check_branch
      %149 = sbr.rel (%p146) target = $region12
    $region11: #{vae_forward.27} parent=5 // pred_region
      %s150 = ssub.s32 %s10, 1
      // Predicated region
      $region13: #{vae_forward.27} parent=11 // pred_check
        %p151 = pneg %p50
      $region14: #{vae_forward.27} parent=11 // pred_check_branch
        %153 = sbr.rel (%p151) target = $region16
      $region15: #{vae_forward.27} parent=11 // pred_region
        _
      $region16: #{vae_forward.27} parent=11 // pred_fallthru
        _
    $region12: #{vae_forward.27} parent=5 // pred_fallthru
      _
    %p154 = scmp.lt.s32.totalorder %s10, 2
    // Predicated region
    $region17: #{vae_forward.27} parent=5 // pred_check
      %p155 = pneg %p154
    $region18: #{vae_forward.27} parent=5 // pred_check_branch
      %157 = sbr.rel (%p155) target = $region20
    $region19: #{vae_forward.27} parent=5 // pred_region
      // Predicated region
      $region21: #{vae_forward.27} parent=19 // pred_check
        %p158 = pneg %p74
      $region22: #{vae_forward.27} parent=19 // pred_check_branch
        %160 = sbr.rel (%p158) target = $region24
      $region23: #{vae_forward.27} parent=19 // pred_region
        %s161 = smul.u32 64, %s19
        %s162 = smul.u32 2, %s18
        %p163 = scmp.lt.s32.totalorder %s17, 1
        %s164 = scalar_select %p163, %s17, 1
        %p165 = scmp.lt.s32.totalorder %s161, 63
        %s166 = scalar_select %p165, %s161, 63
        %p167 = scmp.lt.s32.totalorder %s162, 1
        %s168 = scalar_select %p167, %s162, 1
        %s169 = smul.addr %s166, 2
        %s170 = sadd.s32 %s168, %s169
        %s171 = smul.addr %s164, 128
        %s172 = sadd.s32 %s170, %s171
        %s173 = smul.addr %s172, 4
        %s174 = scalar_lea.vmem %s1, %s173
        %s175 = smul.u32 64, %s19
        %s176 = smul.u32 2, %s18
      $region24: #{vae_forward.27} parent=19 // pred_fallthru
        _
    $region20: #{vae_forward.27} parent=5 // pred_fallthru
      _
    %p177 = scmp.le.s32.totalorder 1, %s10
    %p178 = scmp.lt.s32.totalorder %s10, 3
    %p179 = pnand %p177, %p178
    %p180 = pneg %p179
    // Predicated region
    $region25: #{vae_forward.27} parent=5 // pred_check
      _
    $region26: #{vae_forward.27} parent=5 // pred_check_branch
      %182 = sbr.rel (%p179) target = $region28
    $region27: #{vae_forward.27} parent=5 // pred_region
      %s183 = ssub.s32 %s10, 1
      %p184 = pneg %p50
      %p185 = pneg %p47
      %s186 = smul.u32 64, %s22
      %s187 = smul.u32 2, %s21
      %p188 = scmp.lt.s32.totalorder %s20, 1
      %s189 = scalar_select %p188, %s20, 1
      %p190 = scmp.lt.s32.totalorder %s186, 63
      %s191 = scalar_select %p190, %s186, 63
      %p192 = scmp.lt.s32.totalorder %s187, 1
      %s193 = scalar_select %p192, %s187, 1
      %s194 = smul.addr %s191, 2
      %s195 = sadd.s32 %s193, %s194
      %s196 = smul.addr %s189, 128
      %s197 = sadd.s32 %s195, %s196
      %s198 = smul.addr %s197, 4
      %s199 = scalar_lea.vmem %s1, %s198
      %p200 = pneg %p80
      %p201 = pneg %p77
      %p202 = pneg %p108
      %p203 = pneg %p105
      %s204 = smul.u32 2, %s21
      %p205 = scmp.lt.s32.totalorder %s20, 1
      %s206 = scalar_select %p205, %s20, 1
      %p207 = scmp.lt.s32.totalorder %s204, 1
      %s208 = scalar_select %p207, %s204, 1
      %s209 = smul.addr %s206, 2
      %s210 = sadd.s32 %s208, %s209
      %s211 = smul.addr %s210, 8
      %s212 = scalar_lea.vmem %s2, %s211
      %p213 = pneg %p136
      %p214 = pneg %p133
      %p215 = scmp.lt.s32.totalorder %s20, 1
      %s216 = scalar_select %p215, %s20, 1
      %p217 = scmp.lt.s32.totalorder %s21, 0
      %s218 = scalar_select %p217, %s21, 0
      %s219 = sadd.s32 %s218, %s216
      %s220 = smul.addr %s219, 8
      %s221 = scalar_lea.vmem %s3, %s220
      %s222 = smul.u32 64, %s22
      %s223 = smul.u32 2, %s21
      %p224 = scmp.lt.s32.totalorder %s20, 1
      %s225 = scalar_select %p224, %s20, 1
      %p226 = scmp.lt.s32.totalorder %s222, 63
      %s227 = scalar_select %p226, %s222, 63
      %p228 = scmp.lt.s32.totalorder %s223, 1
      %s229 = scalar_select %p228, %s223, 1
      %s230 = smul.addr %s227, 2
      %s231 = sadd.s32 %s229, %s230
      %s232 = smul.addr %s225, 128
      %s233 = sadd.s32 %s231, %s232
      %s234 = smul.addr %s233, 4
      %s235 = scalar_lea.vmem %s1, %s234
      %s236 = smul.u32 64, %s22
      %s237 = smul.u32 2, %s21
      %s238 = smul.u32 2, %s21
      %p239 = scmp.lt.s32.totalorder %s20, 1
      %s240 = scalar_select %p239, %s20, 1
      %p241 = scmp.lt.s32.totalorder %s238, 1
      %s242 = scalar_select %p241, %s238, 1
      %s243 = smul.addr %s240, 2
      %s244 = sadd.s32 %s242, %s243
      %s245 = smul.addr %s244, 8
      %s246 = scalar_lea.vmem %s2, %s245
      %s247 = smul.u32 2, %s21
      %p248 = scmp.lt.s32.totalorder %s20, 1
      %s249 = scalar_select %p248, %s20, 1
      %p250 = scmp.lt.s32.totalorder %s21, 0
      %s251 = scalar_select %p250, %s21, 0
      %s252 = sadd.s32 %s251, %s249
      %s253 = smul.addr %s252, 8
      %s254 = scalar_lea.vmem %s3, %s253
      %p255 = scmp.eq.s32.totalorder %s22, 0
      // Predicated region
      $region29: #{vae_forward.27} parent=27 // pred_check
        %p256 = pneg %p255
      $region30: #{vae_forward.27} parent=27 // pred_check_branch
        %258 = sbr.rel (%p256) target = $region32
      $region31: #{vae_forward.27} parent=27 // pred_region
        %259 = vst [vmem:[%s246] sm:$0xff] 0.0
        %260 = vst [vmem:[%s246 + $0x8] sm:$0xff] 0.0
      $region32: #{vae_forward.27} parent=27 // pred_fallthru
        _
      %s261 = smul.u32 %s22, 512
      %v262 = vld [vmem:[%s246] sm:$0xff]
      %v263 = vld [vmem:[%s246 + $0x8] sm:$0xff]
      %s264 = sshra.s32 %s261, 7
      %s265 = sand.u32 %s261, 127
      %s266 = smul.addr %s264, 4
      %s267 = scalar_lea.vmem %s0, %s266
      %v268 = vld [vmem:[%s267] sm:$0xff]
      %v269 = vld [vmem:[%s267 + $0x8] sm:$0xff]
      %v270 = vld [vmem:[%s235] sm:$0xff]
      %v271 = vld [vmem:[%s235 + $0x8] sm:$0xff]
      %v272 = vld [vmem:[%s235 + $0x10] sm:$0xff]
      %v273 = vld [vmem:[%s235 + $0x18] sm:$0xff]
      %v274 = vld [vmem:[%s235 + $0x20] sm:$0xff]
      %v275 = vld [vmem:[%s235 + $0x28] sm:$0xff]
      %v276 = vld [vmem:[%s235 + $0x30] sm:$0xff]
      %v277 = vld [vmem:[%s235 + $0x38] sm:$0xff]
      %v278 = vld [vmem:[%s235 + $0x40] sm:$0xff]
      %v279 = vld [vmem:[%s235 + $0x48] sm:$0xff]
      %v280 = vld [vmem:[%s235 + $0x50] sm:$0xff]
      %v281 = vld [vmem:[%s235 + $0x58] sm:$0xff]
      %v282 = vld [vmem:[%s235 + $0x60] sm:$0xff]
      %v283 = vld [vmem:[%s235 + $0x68] sm:$0xff]
      %v284 = vld [vmem:[%s235 + $0x70] sm:$0xff]
      %v285 = vld [vmem:[%s235 + $0x78] sm:$0xff]
      %v286 = vld [vmem:[%s235 + $0x80] sm:$0xff]
      %v287 = vld [vmem:[%s235 + $0x88] sm:$0xff]
      %v288 = vld [vmem:[%s235 + $0x90] sm:$0xff]
      %v289 = vld [vmem:[%s235 + $0x98] sm:$0xff]
      %v290 = vld [vmem:[%s235 + $0xa0] sm:$0xff]
      %v291 = vld [vmem:[%s235 + $0xa8] sm:$0xff]
      %v292 = vld [vmem:[%s235 + $0xb0] sm:$0xff]
      %v293 = vld [vmem:[%s235 + $0xb8] sm:$0xff]
      %v294 = vld [vmem:[%s235 + $0xc0] sm:$0xff]
      %v295 = vld [vmem:[%s235 + $0xc8] sm:$0xff]
      %v296 = vld [vmem:[%s235 + $0xd0] sm:$0xff]
      %v297 = vld [vmem:[%s235 + $0xd8] sm:$0xff]
      %v298 = vld [vmem:[%s235 + $0xe0] sm:$0xff]
      %v299 = vld [vmem:[%s235 + $0xe8] sm:$0xff]
      %v300 = vld [vmem:[%s235 + $0xf0] sm:$0xff]
      %v301 = vld [vmem:[%s235 + $0xf8] sm:$0xff]
      %v302 = vld [vmem:[%s235 + $0x100] sm:$0xff]
      %v303 = vld [vmem:[%s235 + $0x108] sm:$0xff]
      %v304 = vld [vmem:[%s235 + $0x110] sm:$0xff]
      %v305 = vld [vmem:[%s235 + $0x118] sm:$0xff]
      %v306 = vld [vmem:[%s235 + $0x120] sm:$0xff]
      %v307 = vld [vmem:[%s235 + $0x128] sm:$0xff]
      %v308 = vld [vmem:[%s235 + $0x130] sm:$0xff]
      %v309 = vld [vmem:[%s235 + $0x138] sm:$0xff]
      %v310 = vld [vmem:[%s235 + $0x140] sm:$0xff]
      %v311 = vld [vmem:[%s235 + $0x148] sm:$0xff]
      %v312 = vld [vmem:[%s235 + $0x150] sm:$0xff]
      %v313 = vld [vmem:[%s235 + $0x158] sm:$0xff]
      %v314 = vld [vmem:[%s235 + $0x160] sm:$0xff]
      %v315 = vld [vmem:[%s235 + $0x168] sm:$0xff]
      %v316 = vld [vmem:[%s235 + $0x170] sm:$0xff]
      %v317 = vld [vmem:[%s235 + $0x178] sm:$0xff]
      %v318 = vld [vmem:[%s235 + $0x180] sm:$0xff]
      %v319 = vld [vmem:[%s235 + $0x188] sm:$0xff]
      %v320 = vld [vmem:[%s235 + $0x190] sm:$0xff]
      %v321 = vld [vmem:[%s235 + $0x198] sm:$0xff]
      %v322 = vld [vmem:[%s235 + $0x1a0] sm:$0xff]
      %v323 = vld [vmem:[%s235 + $0x1a8] sm:$0xff]
      %v324 = vld [vmem:[%s235 + $0x1b0] sm:$0xff]
      %v325 = vld [vmem:[%s235 + $0x1b8] sm:$0xff]
      %v326 = vld [vmem:[%s235 + $0x1c0] sm:$0xff]
      %v327 = vld [vmem:[%s235 + $0x1c8] sm:$0xff]
      %v328 = vld [vmem:[%s235 + $0x1d0] sm:$0xff]
      %v329 = vld [vmem:[%s235 + $0x1d8] sm:$0xff]
      %v330 = vld [vmem:[%s235 + $0x1e0] sm:$0xff]
      %v331 = vld [vmem:[%s235 + $0x1e8] sm:$0xff]
      %v332 = vld [vmem:[%s235 + $0x1f0] sm:$0xff]
      %v333 = vld [vmem:[%s235 + $0x1f8] sm:$0xff]
      %v336 = vunpack.c.l.b16 %v268
      %v337 = vunpack.c.h.b16 %v268
      %v338 = vunpack.c.l.b16 %v269
      %v339 = vunpack.c.h.b16 %v269
      %v340 = vpack.c.b16 %v336, %v336
      %v341 = vpack.c.b16 %v337, %v337
      %v342 = vpack.c.b16 %v338, %v338
      %v343 = vpack.c.b16 %v339, %v339
      %v412 = vunpack.c.l.b16 %v270
      %v413 = vunpack.c.h.b16 %v270
      %v414 = vunpack.c.l.b16 %v271
      %v415 = vunpack.c.h.b16 %v271
      %v416 = vunpack.c.l.b16 %v272
      %v417 = vunpack.c.h.b16 %v272
      %v418 = vunpack.c.l.b16 %v273
      %v419 = vunpack.c.h.b16 %v273
      %v420 = vunpack.c.l.b16 %v274
      %v421 = vunpack.c.h.b16 %v274
      %v422 = vunpack.c.l.b16 %v275
      %v423 = vunpack.c.h.b16 %v275
      %v424 = vunpack.c.l.b16 %v276
      %v425 = vunpack.c.h.b16 %v276
      %v426 = vunpack.c.l.b16 %v277
      %v427 = vunpack.c.h.b16 %v277
      %v428 = vunpack.c.l.b16 %v278
      %v429 = vunpack.c.h.b16 %v278
      %v430 = vunpack.c.l.b16 %v279
      %v431 = vunpack.c.h.b16 %v279
      %v432 = vunpack.c.l.b16 %v280
      %v433 = vunpack.c.h.b16 %v280
      %v434 = vunpack.c.l.b16 %v281
      %v435 = vunpack.c.h.b16 %v281
      %v436 = vunpack.c.l.b16 %v282
      %v437 = vunpack.c.h.b16 %v282
      %v438 = vunpack.c.l.b16 %v283
      %v439 = vunpack.c.h.b16 %v283
      %v440 = vunpack.c.l.b16 %v284
      %v441 = vunpack.c.h.b16 %v284
      %v442 = vunpack.c.l.b16 %v285
      %v443 = vunpack.c.h.b16 %v285
      %v444 = vunpack.c.l.b16 %v286
      %v445 = vunpack.c.h.b16 %v286
      %v446 = vunpack.c.l.b16 %v287
      %v447 = vunpack.c.h.b16 %v287
      %v448 = vunpack.c.l.b16 %v288
      %v449 = vunpack.c.h.b16 %v288
      %v450 = vunpack.c.l.b16 %v289
      %v451 = vunpack.c.h.b16 %v289
      %v452 = vunpack.c.l.b16 %v290
      %v453 = vunpack.c.h.b16 %v290
      %v454 = vunpack.c.l.b16 %v291
      %v455 = vunpack.c.h.b16 %v291
      %v456 = vunpack.c.l.b16 %v292
      %v457 = vunpack.c.h.b16 %v292
      %v458 = vunpack.c.l.b16 %v293
      %v459 = vunpack.c.h.b16 %v293
      %v460 = vunpack.c.l.b16 %v294
      %v461 = vunpack.c.h.b16 %v294
      %v462 = vunpack.c.l.b16 %v295
      %v463 = vunpack.c.h.b16 %v295
      %v464 = vunpack.c.l.b16 %v296
      %v465 = vunpack.c.h.b16 %v296
      %v466 = vunpack.c.l.b16 %v297
      %v467 = vunpack.c.h.b16 %v297
      %v468 = vunpack.c.l.b16 %v298
      %v469 = vunpack.c.h.b16 %v298
      %v470 = vunpack.c.l.b16 %v299
      %v471 = vunpack.c.h.b16 %v299
      %v472 = vunpack.c.l.b16 %v300
      %v473 = vunpack.c.h.b16 %v300
      %v474 = vunpack.c.l.b16 %v301
      %v475 = vunpack.c.h.b16 %v301
      %v476 = vunpack.c.l.b16 %v302
      %v477 = vunpack.c.h.b16 %v302
      %v478 = vunpack.c.l.b16 %v303
      %v479 = vunpack.c.h.b16 %v303
      %v480 = vunpack.c.l.b16 %v304
      %v481 = vunpack.c.h.b16 %v304
      %v482 = vunpack.c.l.b16 %v305
      %v483 = vunpack.c.h.b16 %v305
      %v484 = vunpack.c.l.b16 %v306
      %v485 = vunpack.c.h.b16 %v306
      %v486 = vunpack.c.l.b16 %v307
      %v487 = vunpack.c.h.b16 %v307
      %v488 = vunpack.c.l.b16 %v308
      %v489 = vunpack.c.h.b16 %v308
      %v490 = vunpack.c.l.b16 %v309
      %v491 = vunpack.c.h.b16 %v309
      %v492 = vunpack.c.l.b16 %v310
      %v493 = vunpack.c.h.b16 %v310
      %v494 = vunpack.c.l.b16 %v311
      %v495 = vunpack.c.h.b16 %v311
      %v496 = vunpack.c.l.b16 %v312
      %v497 = vunpack.c.h.b16 %v312
      %v498 = vunpack.c.l.b16 %v313
      %v499 = vunpack.c.h.b16 %v313
      %v500 = vunpack.c.l.b16 %v314
      %v501 = vunpack.c.h.b16 %v314
      %v502 = vunpack.c.l.b16 %v315
      %v503 = vunpack.c.h.b16 %v315
      %v504 = vunpack.c.l.b16 %v316
      %v505 = vunpack.c.h.b16 %v316
      %v506 = vunpack.c.l.b16 %v317
      %v507 = vunpack.c.h.b16 %v317
      %v508 = vunpack.c.l.b16 %v318
      %v509 = vunpack.c.h.b16 %v318
      %v510 = vunpack.c.l.b16 %v319
      %v511 = vunpack.c.h.b16 %v319
      %v512 = vunpack.c.l.b16 %v320
      %v513 = vunpack.c.h.b16 %v320
      %v514 = vunpack.c.l.b16 %v321
      %v515 = vunpack.c.h.b16 %v321
      %v516 = vunpack.c.l.b16 %v322
      %v517 = vunpack.c.h.b16 %v322
      %v518 = vunpack.c.l.b16 %v323
      %v519 = vunpack.c.h.b16 %v323
      %v520 = vunpack.c.l.b16 %v324
      %v521 = vunpack.c.h.b16 %v324
      %v522 = vunpack.c.l.b16 %v325
      %v523 = vunpack.c.h.b16 %v325
      %v524 = vunpack.c.l.b16 %v326
      %v525 = vunpack.c.h.b16 %v326
      %v526 = vunpack.c.l.b16 %v327
      %v527 = vunpack.c.h.b16 %v327
      %v528 = vunpack.c.l.b16 %v328
      %v529 = vunpack.c.h.b16 %v328
      %v530 = vunpack.c.l.b16 %v329
      %v531 = vunpack.c.h.b16 %v329
      %v532 = vunpack.c.l.b16 %v330
      %v533 = vunpack.c.h.b16 %v330
      %v534 = vunpack.c.l.b16 %v331
      %v535 = vunpack.c.h.b16 %v331
      %v536 = vunpack.c.l.b16 %v332
      %v537 = vunpack.c.h.b16 %v332
      %v538 = vunpack.c.l.b16 %v333
      %v539 = vunpack.c.h.b16 %v333
      %v540 = vpack.c.b16 %v414, %v412
      %v541 = vpack.c.b16 %v415, %v413
      %v542 = vpack.c.b16 %v418, %v416
      %v543 = vpack.c.b16 %v419, %v417
      %v544 = vpack.c.b16 %v422, %v420
      %v545 = vpack.c.b16 %v423, %v421
      %v546 = vpack.c.b16 %v426, %v424
      %v547 = vpack.c.b16 %v427, %v425
      %v548 = vpack.c.b16 %v430, %v428
      %v549 = vpack.c.b16 %v431, %v429
      %v550 = vpack.c.b16 %v434, %v432
      %v551 = vpack.c.b16 %v435, %v433
      %v552 = vpack.c.b16 %v438, %v436
      %v553 = vpack.c.b16 %v439, %v437
      %v554 = vpack.c.b16 %v442, %v440
      %v555 = vpack.c.b16 %v443, %v441
      %v556 = vpack.c.b16 %v446, %v444
      %v557 = vpack.c.b16 %v447, %v445
      %v558 = vpack.c.b16 %v450, %v448
      %v559 = vpack.c.b16 %v451, %v449
      %v560 = vpack.c.b16 %v454, %v452
      %v561 = vpack.c.b16 %v455, %v453
      %v562 = vpack.c.b16 %v458, %v456
      %v563 = vpack.c.b16 %v459, %v457
      %v564 = vpack.c.b16 %v462, %v460
      %v565 = vpack.c.b16 %v463, %v461
      %v566 = vpack.c.b16 %v466, %v464
      %v567 = vpack.c.b16 %v467, %v465
      %v568 = vpack.c.b16 %v470, %v468
      %v569 = vpack.c.b16 %v471, %v469
      %v570 = vpack.c.b16 %v474, %v472
      %v571 = vpack.c.b16 %v475, %v473
      %v572 = vpack.c.b16 %v478, %v476
      %v573 = vpack.c.b16 %v479, %v477
      %v574 = vpack.c.b16 %v482, %v480
      %v575 = vpack.c.b16 %v483, %v481
      %v576 = vpack.c.b16 %v486, %v484
      %v577 = vpack.c.b16 %v487, %v485
      %v578 = vpack.c.b16 %v490, %v488
      %v579 = vpack.c.b16 %v491, %v489
      %v580 = vpack.c.b16 %v494, %v492
      %v581 = vpack.c.b16 %v495, %v493
      %v582 = vpack.c.b16 %v498, %v496
      %v583 = vpack.c.b16 %v499, %v497
      %v584 = vpack.c.b16 %v502, %v500
      %v585 = vpack.c.b16 %v503, %v501
      %v586 = vpack.c.b16 %v506, %v504
      %v587 = vpack.c.b16 %v507, %v505
      %v588 = vpack.c.b16 %v510, %v508
      %v589 = vpack.c.b16 %v511, %v509
      %v590 = vpack.c.b16 %v514, %v512
      %v591 = vpack.c.b16 %v515, %v513
      %v592 = vpack.c.b16 %v518, %v516
      %v593 = vpack.c.b16 %v519, %v517
      %v594 = vpack.c.b16 %v522, %v520
      %v595 = vpack.c.b16 %v523, %v521
      %v596 = vpack.c.b16 %v526, %v524
      %v597 = vpack.c.b16 %v527, %v525
      %v598 = vpack.c.b16 %v530, %v528
      %v599 = vpack.c.b16 %v531, %v529
      %v600 = vpack.c.b16 %v534, %v532
      %v601 = vpack.c.b16 %v535, %v533
      %v602 = vpack.c.b16 %v538, %v536
      %v603 = vpack.c.b16 %v539, %v537
      %668 = vmatprep.subr.bf16.mxu0 %v541
      %669 = vmatpush1.bf16.msra.mxu0 %v540
      %670 = vmatprep.subr.bf16.mxu0 %v543
      %671 = vmatpush1.bf16.msra.mxu0 %v542
      %672 = vmatprep.subr.bf16.mxu0 %v545
      %673 = vmatpush1.bf16.msra.mxu0 %v544
      %674 = vmatprep.subr.bf16.mxu0 %v547
      %675 = vmatpush1.bf16.msra.mxu0 %v546
      %676 = vmatprep.subr.bf16.mxu0 %v549
      %677 = vmatpush1.bf16.msra.mxu0 %v548
      %678 = vmatprep.subr.bf16.mxu0 %v551
      %679 = vmatpush1.bf16.msra.mxu0 %v550
      %680 = vmatprep.subr.bf16.mxu0 %v553
      %681 = vmatpush1.bf16.msra.mxu0 %v552
      %682 = vmatprep.subr.bf16.mxu0 %v555
      %683 = vmatpush1.bf16.msra.mxu0 %v554
      %684 = vmatprep.subr.bf16.mxu0 %v557
      %685 = vmatpush1.bf16.msra.mxu0 %v556
      %686 = vmatprep.subr.bf16.mxu0 %v559
      %687 = vmatpush1.bf16.msra.mxu0 %v558
      %688 = vmatprep.subr.bf16.mxu0 %v561
      %689 = vmatpush1.bf16.msra.mxu0 %v560
      %690 = vmatprep.subr.bf16.mxu0 %v563
      %691 = vmatpush1.bf16.msra.mxu0 %v562
      %692 = vmatprep.subr.bf16.mxu0 %v565
      %693 = vmatpush1.bf16.msra.mxu0 %v564
      %694 = vmatprep.subr.bf16.mxu0 %v567
      %695 = vmatpush1.bf16.msra.mxu0 %v566
      %696 = vmatprep.subr.bf16.mxu0 %v569
      %697 = vmatpush1.bf16.msra.mxu0 %v568
      %698 = vmatprep.subr.bf16.mxu0 %v571
      %699 = vmatpush1.bf16.msra.mxu0 %v570
      %700 = vmatprep.mubr.bf16.mxu0 %v341
      %701 = vmatmul.mubr.bf16.gmra.mrb[0].mxu0 %v340
      %v702 = vpop.f32.mrb[0].mxu0
      %v703 = vadd.f32 0.0, %v702
      %v704 = vpop.f32.mrb[0].mxu0
      %v705 = vadd.f32 0.0, %v704
      %v706 = vpop.f32.mrb[0].mxu0
      %v707 = vpop.f32.mrb[0].mxu0
      %708 = vdwg.mxu0
      %709 = vmatprep.subr.bf16.mxu0 %v573
      %710 = vmatpush1.bf16.msra.mxu0 %v572
      %711 = vmatprep.subr.bf16.mxu0 %v575
      %712 = vmatpush1.bf16.msra.mxu0 %v574
      %713 = vmatprep.subr.bf16.mxu0 %v577
      %714 = vmatpush1.bf16.msra.mxu0 %v576
      %715 = vmatprep.subr.bf16.mxu0 %v579
      %716 = vmatpush1.bf16.msra.mxu0 %v578
      %717 = vmatprep.subr.bf16.mxu0 %v581
      %718 = vmatpush1.bf16.msra.mxu0 %v580
      %719 = vmatprep.subr.bf16.mxu0 %v583
      %720 = vmatpush1.bf16.msra.mxu0 %v582
      %721 = vmatprep.subr.bf16.mxu0 %v585
      %722 = vmatpush1.bf16.msra.mxu0 %v584
      %723 = vmatprep.subr.bf16.mxu0 %v587
      %724 = vmatpush1.bf16.msra.mxu0 %v586
      %725 = vmatprep.subr.bf16.mxu0 %v589
      %726 = vmatpush1.bf16.msra.mxu0 %v588
      %727 = vmatprep.subr.bf16.mxu0 %v591
      %728 = vmatpush1.bf16.msra.mxu0 %v590
      %729 = vmatprep.subr.bf16.mxu0 %v593
      %730 = vmatpush1.bf16.msra.mxu0 %v592
      %731 = vmatprep.subr.bf16.mxu0 %v595
      %732 = vmatpush1.bf16.msra.mxu0 %v594
      %733 = vmatprep.subr.bf16.mxu0 %v597
      %734 = vmatpush1.bf16.msra.mxu0 %v596
      %735 = vmatprep.subr.bf16.mxu0 %v599
      %736 = vmatpush1.bf16.msra.mxu0 %v598
      %737 = vmatprep.subr.bf16.mxu0 %v601
      %738 = vmatpush1.bf16.msra.mxu0 %v600
      %739 = vmatprep.subr.bf16.mxu0 %v603
      %740 = vmatpush1.bf16.msra.mxu0 %v602
      %741 = vmatprep.mubr.bf16.mxu0 %v343
      %742 = vmatmul.mubr.bf16.gmra.mrb[0].mxu0 %v342
      %v743 = vpop.f32.mrb[0].mxu0
      %v744 = vadd.f32 %v703, %v743
      %v745 = vpop.f32.mrb[0].mxu0
      %v746 = vadd.f32 %v705, %v745
      %v747 = vpop.f32.mrb[0].mxu0
      %v748 = vpop.f32.mrb[0].mxu0
      %749 = vdwg.mxu0
      %v750 = vadd.f32 %v262, %v744
      %v751 = vadd.f32 %v263, %v746
      %752 = vst [vmem:[%s246] sm:$0xff] %v750
      %753 = vst [vmem:[%s246 + $0x8] sm:$0xff] %v751
      // Predicated region
      $region33: #{vae_forward.27} parent=27 // pred_check
        %p754 = pneg %p255
      $region34: #{vae_forward.27} parent=27 // pred_check_branch
        %756 = sbr.rel (%p754) target = $region36
      $region35: #{vae_forward.27} parent=27 // pred_region
        %v757 = vld [vmem:[%s246] sm:$0xff]
        %v758 = vld [vmem:[%s246 + $0x8] sm:$0xff]
        %v759 = vadd.f32 %v757, %v758
        %760 = vadd.xlane.f32.xlu0 %v759
        %v761 = vpop.xlane.xlu0 %760
        %vm762 = vcmask 7168
        %763 = vst.msk [vmem:[%s254] sm:$0xff] %vm762, %v761
        %v764 = vmul.f32 %v757, %v757
        %v765 = vmul.f32 %v758, %v758
        %v766 = vadd.f32 %v764, %v765
        %767 = vadd.xlane.f32.xlu0 %v766
        %v768 = vpop.xlane.xlu0 %767
        %vm769 = vcmask 15368
        %770 = vst.msk [vmem:[%s254] sm:$0xff] %vm769, %v768
      $region36: #{vae_forward.27} parent=27 // pred_fallthru
        _
      %s771 = smul.u32 2, %s21
      %p772 = scmp.lt.s32.totalorder %s20, 1
      %s773 = scalar_select %p772, %s20, 1
      %p774 = scmp.lt.s32.totalorder %s771, 1
      %s775 = scalar_select %p774, %s771, 1
      %s776 = smul.addr %s773, 2
      %s777 = sadd.s32 %s775, %s776
      %s778 = smul.addr %s777, 8
      %s779 = scalar_lea.vmem %s2, %s778
      %p780 = scmp.lt.s32.totalorder %s20, 1
      %s781 = scalar_select %p780, %s20, 1
      %p782 = scmp.lt.s32.totalorder %s21, 0
      %s783 = scalar_select %p782, %s21, 0
      %s784 = sadd.s32 %s783, %s781
      %s785 = smul.addr %s784, 8
      %s786 = scalar_lea.vmem %s3, %s785
      // Predicated region
      $region37: #{vae_forward.27} parent=27 // pred_check
        %p787 = pneg %p105
      $region38: #{vae_forward.27} parent=27 // pred_check_branch
        %789 = sbr.rel (%p787) target = $region40
      $region39: #{vae_forward.27} parent=27 // pred_region
        %s790 = smul.u32 2, %s21
      $region40: #{vae_forward.27} parent=27 // pred_fallthru
        _
      // Predicated region
      $region41: #{vae_forward.27} parent=27 // pred_check
        %p791 = pneg %p133
      $region42: #{vae_forward.27} parent=27 // pred_check_branch
        %793 = sbr.rel (%p791) target = $region44
      $region43: #{vae_forward.27} parent=27 // pred_region
        _
      $region44: #{vae_forward.27} parent=27 // pred_fallthru
        _
    $region28: #{vae_forward.27} parent=5 // pred_fallthru
      _
    %p794 = scmp.le.s32.totalorder 2, %s10
    // Predicated region
    $region45: #{vae_forward.27} parent=5 // pred_check
      %p795 = pneg %p794
    $region46: #{vae_forward.27} parent=5 // pred_check_branch
      %797 = sbr.rel (%p795) target = $region48
    $region47: #{vae_forward.27} parent=5 // pred_region
      %s798 = ssub.s32 %s10, 2
      // Predicated region
      $region49: #{vae_forward.27} parent=47 // pred_check
        %p799 = pneg %p111
      $region50: #{vae_forward.27} parent=47 // pred_check_branch
        %801 = sbr.rel (%p799) target = $region52
      $region51: #{vae_forward.27} parent=47 // pred_region
        %s802 = smul.u32 2, %s24
        %p803 = scmp.lt.s32.totalorder %s23, 1
        %s804 = scalar_select %p803, %s23, 1
        %p805 = scmp.lt.s32.totalorder %s802, 1
        %s806 = scalar_select %p805, %s802, 1
        %s807 = smul.addr %s804, 2
        %s808 = sadd.s32 %s806, %s807
        %s809 = smul.addr %s808, 8
        %s810 = scalar_lea.vmem %s2, %s809
      $region52: #{vae_forward.27} parent=47 // pred_fallthru
        _
      // Predicated region
      $region53: #{vae_forward.27} parent=47 // pred_check
        %p811 = pneg %p139
      $region54: #{vae_forward.27} parent=47 // pred_check_branch
        %813 = sbr.rel (%p811) target = $region56
      $region55: #{vae_forward.27} parent=47 // pred_region
        %p814 = scmp.lt.s32.totalorder %s23, 1
        %s815 = scalar_select %p814, %s23, 1
        %p816 = scmp.lt.s32.totalorder %s24, 0
        %s817 = scalar_select %p816, %s24, 0
        %s818 = sadd.s32 %s817, %s815
        %s819 = smul.addr %s818, 8
        %s820 = scalar_lea.vmem %s3, %s819
      $region56: #{vae_forward.27} parent=47 // pred_fallthru
        _
    $region48: #{vae_forward.27} parent=5 // pred_fallthru
      _
  $region6: #{vae_forward.27} parent=0 // loop_footer
    %s14 = sadd.s32 1, %s10
  $region7: #{vae_forward.27} parent=0 // loop_footer_branch
    %9 = sbr.rel target = $region3
  $region8: #{vae_forward.27} parent=0 // loop_exit
    _

// kernel: vae_forward.29
$region0: #{vae_forward.29}
  #allocation0 [shape = 'u32[]', space=smem, size = 0x4, offset = 0x4, fixed_abs, tag = 'smem constant byte address 0x4 - core index']
  #allocation1 [shape = 'u32[144,128]{1,0:T(1,128)}', space=vmem, size = 0x12000, scoped, tag = 'internal scratch']
  %s0 = inlined_call_operand.vmem [shape: bf16[3,512], index: 0, kind: input, shape index: {}]
  %s1 = inlined_call_operand.vmem [shape: f32[3,1], index: 1, kind: input, shape index: {}]
  %s2 = inlined_call_operand.vmem [shape: bf16[2,512,256], index: 2, kind: input, shape index: {}]
  %s3 = inlined_call_operand.vmem [shape: f32[2,3,256], index: 3, kind: output, shape index: {}]
  %s4 = sld [smem:[#allocation0]]
  $region53: #{vae_forward.29} parent=0
    _
  %s6 = ssub.s32 1, %s4
  %s7 = scalar_select 0, %s6, %s4
  loop: start=0, step=1, limit=4
  $region2: #{vae_forward.29} parent=0 // loop_pre_header
    _
  $region3: #{vae_forward.29} parent=0 // loop_header
    %s9 = sphi 0, %s13
    %p10 = scmp.ge.s32.totalorder %s9, 4
    %s16 = sphi 0, %s35
    %s17 = sphi 0, %s31
    %s18 = sphi 0, %s27
    %s19 = sphi 0, %s16
    %s20 = sphi 0, %s17
    %s21 = sphi 0, %s18
    %s22 = sphi 0, %s19
    %s23 = sphi 0, %s20
    %s24 = sphi 0, %s21
    %s36 = sphi 0, %s36
    %s38 = sphi 0, %s36
    %s39 = sphi 0, %s38
    %s53 = sphi 0, %s39
    %s57 = sphi 0, %s57
    %s59 = sphi 0, %s57
    %s60 = sphi 0, %s59
    %s74 = sphi 0, %s60
    %s84 = sphi 0, %s86
    %s87 = sphi 0, %s84
    %s88 = sphi 0, %s87
    %s104 = sphi 0, %s88
    %s112 = sphi 0, %s114
    %s115 = sphi 0, %s112
    %s116 = sphi 0, %s115
    %s132 = sphi 0, %s116
  $region4: #{vae_forward.29} parent=0 // loop_header_branch
    %12 = sbr.rel (%p10) target = $region8
  $region5: #{vae_forward.29} parent=0 // loop_body
    %s14 = ssub.s32 %s9, 1
    %s15 = ssub.s32 %s9, 2
    %s25 = sadd.s32 1, %s18
    %p26 = scmp.ge.s32.totalorder %s25, 1
    %s27 = scalar_select %p26, 0, %s25
    %s28 = sadd.s32 1, %s17
    %s29 = scalar_select %p26, %s28, %s17
    %p30 = scmp.ge.s32.totalorder %s29, 1
    %s31 = scalar_select %p30, 0, %s29
    %s32 = sadd.s32 1, %s16
    %s33 = scalar_select %p30, %s32, %s16
    %p34 = scmp.ge.s32.totalorder %s33, 2
    %s35 = scalar_select %p34, 0, %s33
    %s37 = sadd.s32 %s36, 1
    %p40 = scmp.eq.s32.totalorder %s9, 1
    %p41 = scmp.ne.s32.totalorder %s36, %s38
    %p42 = scmp.eq.s32.totalorder %s9, 0
    %p43 = por %p41, %p42
    %p44 = scmp.ne.s32.totalorder %s36, %s38
    %p45 = scmp.eq.s32.totalorder %s14, 1
    %p46 = por %p44, %p45
    %p47 = scmp.ne.s32.totalorder %s38, %s39
    %p48 = scmp.eq.s32.totalorder %s14, 0
    %p49 = por %p47, %p48
    %p50 = scmp.ne.s32.totalorder %s38, %s39
    %p51 = scmp.eq.s32.totalorder %s15, 1
    %p52 = por %p50, %p51
    %p54 = scmp.ne.s32.totalorder %s39, %s53
    %p55 = scmp.eq.s32.totalorder %s15, 0
    %p56 = por %p54, %p55
    %s58 = sadd.s32 %s57, 1
    %p61 = scmp.eq.s32.totalorder %s9, 1
    %p62 = scmp.ne.s32.totalorder %s57, %s59
    %p63 = scmp.eq.s32.totalorder %s9, 0
    %p64 = por %p62, %p63
    %p65 = scmp.ne.s32.totalorder %s57, %s59
    %p66 = scmp.eq.s32.totalorder %s14, 1
    %p67 = por %p65, %p66
    %p68 = scmp.ne.s32.totalorder %s59, %s60
    %p69 = scmp.eq.s32.totalorder %s14, 0
    %p70 = por %p68, %p69
    %p71 = scmp.ne.s32.totalorder %s59, %s60
    %p72 = scmp.eq.s32.totalorder %s15, 1
    %p73 = por %p71, %p72
    %p75 = scmp.ne.s32.totalorder %s60, %s74
    %p76 = scmp.eq.s32.totalorder %s15, 0
    %p77 = por %p75, %p76
    %s78 = ssub.s32 %s16, %s35
    %s79 = ssub.s32 %s18, %s27
    %s80 = sor.u32 %s78, %s79
    %s81 = ssub.s32 %s17, %s31
    %s82 = sor.u32 %s80, %s81
    %p83 = scmp.eq.s32.totalorder %s82, 0
    %s85 = sadd.s32 %s84, 1
    %s86 = scalar_select %p83, %s84, %s85
    %p89 = pneg %p83
    %p90 = scmp.eq.s32.totalorder %s9, 1
    %p91 = por %p89, %p90
    %p92 = scmp.ne.s32.totalorder %s84, %s87
    %p93 = scmp.eq.s32.totalorder %s9, 0
    %p94 = por %p92, %p93
    %p95 = scmp.ne.s32.totalorder %s84, %s87
    %p96 = scmp.eq.s32.totalorder %s14, 1
    %p97 = por %p95, %p96
    %p98 = scmp.ne.s32.totalorder %s87, %s88
    %p99 = scmp.eq.s32.totalorder %s14, 0
    %p100 = por %p98, %p99
    %p101 = scmp.ne.s32.totalorder %s87, %s88
    %p102 = scmp.eq.s32.totalorder %s15, 1
    %p103 = por %p101, %p102
    %p105 = scmp.ne.s32.totalorder %s88, %s104
    %p106 = scmp.eq.s32.totalorder %s15, 0
    %p107 = por %p105, %p106
    %s108 = ssub.s32 %s16, %s35
    %s109 = ssub.s32 %s17, %s31
    %s110 = sor.u32 %s108, %s109
    %p111 = scmp.eq.s32.totalorder %s110, 0
    %s113 = sadd.s32 %s112, 1
    %s114 = scalar_select %p111, %s112, %s113
    %p117 = pneg %p111
    %p118 = scmp.eq.s32.totalorder %s9, 1
    %p119 = por %p117, %p118
    %p120 = scmp.ne.s32.totalorder %s112, %s115
    %p121 = scmp.eq.s32.totalorder %s9, 0
    %p122 = por %p120, %p121
    %p123 = scmp.ne.s32.totalorder %s112, %s115
    %p124 = scmp.eq.s32.totalorder %s14, 1
    %p125 = por %p123, %p124
    %p126 = scmp.ne.s32.totalorder %s115, %s116
    %p127 = scmp.eq.s32.totalorder %s14, 0
    %p128 = por %p126, %p127
    %p129 = scmp.ne.s32.totalorder %s115, %s116
    %p130 = scmp.eq.s32.totalorder %s15, 1
    %p131 = por %p129, %p130
    %p133 = scmp.ne.s32.totalorder %s116, %s132
    %p134 = scmp.eq.s32.totalorder %s15, 0
    %p135 = por %p133, %p134
    %p136 = scmp.le.s32.totalorder 1, %s9
    %p137 = scmp.lt.s32.totalorder %s9, 3
    %p138 = pnand %p136, %p137
    %p139 = pneg %p138
    // Predicated region
    $region9: #{vae_forward.29} parent=5 // pred_check
      _
    $region10: #{vae_forward.29} parent=5 // pred_check_branch
      %141 = sbr.rel (%p138) target = $region12
    $region11: #{vae_forward.29} parent=5 // pred_region
      %s142 = ssub.s32 %s9, 1
      // Predicated region
      $region13: #{vae_forward.29} parent=11 // pred_check
        %p143 = pneg %p49
      $region14: #{vae_forward.29} parent=11 // pred_check_branch
        %145 = sbr.rel (%p143) target = $region16
      $region15: #{vae_forward.29} parent=11 // pred_region
        _
      $region16: #{vae_forward.29} parent=11 // pred_fallthru
        _
      // Predicated region
      $region17: #{vae_forward.29} parent=11 // pred_check
        %p146 = pneg %p70
      $region18: #{vae_forward.29} parent=11 // pred_check_branch
        %148 = sbr.rel (%p146) target = $region20
      $region19: #{vae_forward.29} parent=11 // pred_region
        _
      $region20: #{vae_forward.29} parent=11 // pred_fallthru
        _
    $region12: #{vae_forward.29} parent=5 // pred_fallthru
      _
    %p149 = scmp.lt.s32.totalorder %s9, 2
    // Predicated region
    $region21: #{vae_forward.29} parent=5 // pred_check
      %p150 = pneg %p149
    $region22: #{vae_forward.29} parent=5 // pred_check_branch
      %152 = sbr.rel (%p150) target = $region24
    $region23: #{vae_forward.29} parent=5 // pred_region
      // Predicated region
      $region25: #{vae_forward.29} parent=23 // pred_check
        %p153 = pneg %p94
      $region26: #{vae_forward.29} parent=23 // pred_check_branch
        %155 = sbr.rel (%p153) target = $region28
      $region27: #{vae_forward.29} parent=23 // pred_region
        %s156 = smul.u32 64, %s18
        %s157 = smul.u32 2, %s17
        %p158 = scmp.lt.s32.totalorder %s16, 1
        %s159 = scalar_select %p158, %s16, 1
        %p160 = scmp.lt.s32.totalorder %s156, 63
        %s161 = scalar_select %p160, %s156, 63
        %p162 = scmp.lt.s32.totalorder %s157, 1
        %s163 = scalar_select %p162, %s157, 1
        %s164 = smul.addr %s161, 2
        %s165 = sadd.s32 %s163, %s164
        %s166 = smul.addr %s159, 128
        %s167 = sadd.s32 %s165, %s166
        %s168 = smul.addr %s167, 4
        %s169 = scalar_lea.vmem %s2, %s168
        %s170 = smul.u32 64, %s18
        %s171 = smul.u32 2, %s17
      $region28: #{vae_forward.29} parent=23 // pred_fallthru
        _
    $region24: #{vae_forward.29} parent=5 // pred_fallthru
      _
    %p172 = scmp.le.s32.totalorder 1, %s9
    %p173 = scmp.lt.s32.totalorder %s9, 3
    %p174 = pnand %p172, %p173
    %p175 = pneg %p174
    // Predicated region
    $region29: #{vae_forward.29} parent=5 // pred_check
      _
    $region30: #{vae_forward.29} parent=5 // pred_check_branch
      %177 = sbr.rel (%p174) target = $region32
    $region31: #{vae_forward.29} parent=5 // pred_region
      %s178 = ssub.s32 %s9, 1
      %p179 = pneg %p49
      %p180 = pneg %p46
      %p181 = pneg %p70
      %p182 = pneg %p67
      %s183 = smul.u32 64, %s21
      %s184 = smul.u32 2, %s20
      %p185 = scmp.lt.s32.totalorder %s19, 1
      %s186 = scalar_select %p185, %s19, 1
      %p187 = scmp.lt.s32.totalorder %s183, 63
      %s188 = scalar_select %p187, %s183, 63
      %p189 = scmp.lt.s32.totalorder %s184, 1
      %s190 = scalar_select %p189, %s184, 1
      %s191 = smul.addr %s188, 2
      %s192 = sadd.s32 %s190, %s191
      %s193 = smul.addr %s186, 128
      %s194 = sadd.s32 %s192, %s193
      %s195 = smul.addr %s194, 4
      %s196 = scalar_lea.vmem %s2, %s195
      %p197 = pneg %p100
      %p198 = pneg %p97
      %p199 = pneg %p128
      %p200 = pneg %p125
      %s201 = smul.u32 2, %s20
      %p202 = scmp.lt.s32.totalorder %s19, 1
      %s203 = scalar_select %p202, %s19, 1
      %p204 = scmp.lt.s32.totalorder %s201, 1
      %s205 = scalar_select %p204, %s201, 1
      %s206 = smul.addr %s203, 2
      %s207 = sadd.s32 %s205, %s206
      %s208 = smul.addr %s207, 4
      %s209 = scalar_lea.vmem %s3, %s208
      %s210 = smul.u32 64, %s21
      %s211 = smul.u32 2, %s20
      %p212 = scmp.lt.s32.totalorder %s19, 1
      %s213 = scalar_select %p212, %s19, 1
      %p214 = scmp.lt.s32.totalorder %s210, 63
      %s215 = scalar_select %p214, %s210, 63
      %p216 = scmp.lt.s32.totalorder %s211, 1
      %s217 = scalar_select %p216, %s211, 1
      %s218 = smul.addr %s215, 2
      %s219 = sadd.s32 %s217, %s218
      %s220 = smul.addr %s213, 128
      %s221 = sadd.s32 %s219, %s220
      %s222 = smul.addr %s221, 4
      %s223 = scalar_lea.vmem %s2, %s222
      %s224 = smul.u32 64, %s21
      %s225 = smul.u32 2, %s20
      %s226 = smul.u32 2, %s20
      %p227 = scmp.lt.s32.totalorder %s19, 1
      %s228 = scalar_select %p227, %s19, 1
      %p229 = scmp.lt.s32.totalorder %s226, 1
      %s230 = scalar_select %p229, %s226, 1
      %s231 = smul.addr %s228, 2
      %s232 = sadd.s32 %s230, %s231
      %s233 = smul.addr %s232, 4
      %s234 = scalar_lea.vmem %s3, %s233
      %s235 = smul.u32 2, %s20
      %p236 = scmp.eq.s32.totalorder %s21, 0
      // Predicated region
      $region33: #{vae_forward.29} parent=31 // pred_check
        %p237 = pneg %p236
      $region34: #{vae_forward.29} parent=31 // pred_check_branch
        %239 = sbr.rel (%p237) target = $region36
      $region35: #{vae_forward.29} parent=31 // pred_region
        %240 = vst [vmem:[%s234] sm:$0x77] 0.0
      $region36: #{vae_forward.29} parent=31 // pred_fallthru
        _
      %s241 = smul.u32 %s21, 512
      %v242 = vld [vmem:[%s234] sm:$0x77]
      %s243 = sshra.s32 %s241, 7
      %s244 = sand.u32 %s241, 127
      %s245 = smul.addr %s243, 2
      %s246 = scalar_lea.vmem %s0, %s245
      %v247 = vld [vmem:[%s246] sm:$0xff]
      %v248 = vld [vmem:[%s223] sm:$0xff]
      %v249 = vld [vmem:[%s223 + $0x8] sm:$0xff]
      %v250 = vld [vmem:[%s223 + $0x10] sm:$0xff]
      %v251 = vld [vmem:[%s223 + $0x18] sm:$0xff]
      %v252 = vld [vmem:[%s223 + $0x20] sm:$0xff]
      %v253 = vld [vmem:[%s223 + $0x28] sm:$0xff]
      %v254 = vld [vmem:[%s223 + $0x30] sm:$0xff]
      %v255 = vld [vmem:[%s223 + $0x38] sm:$0xff]
      %v256 = vld [vmem:[%s223 + $0x40] sm:$0xff]
      %v257 = vld [vmem:[%s223 + $0x48] sm:$0xff]
      %v258 = vld [vmem:[%s223 + $0x50] sm:$0xff]
      %v259 = vld [vmem:[%s223 + $0x58] sm:$0xff]
      %v260 = vld [vmem:[%s223 + $0x60] sm:$0xff]
      %v261 = vld [vmem:[%s223 + $0x68] sm:$0xff]
      %v262 = vld [vmem:[%s223 + $0x70] sm:$0xff]
      %v263 = vld [vmem:[%s223 + $0x78] sm:$0xff]
      %v264 = vld [vmem:[%s223 + $0x80] sm:$0xff]
      %v265 = vld [vmem:[%s223 + $0x88] sm:$0xff]
      %v266 = vld [vmem:[%s223 + $0x90] sm:$0xff]
      %v267 = vld [vmem:[%s223 + $0x98] sm:$0xff]
      %v268 = vld [vmem:[%s223 + $0xa0] sm:$0xff]
      %v269 = vld [vmem:[%s223 + $0xa8] sm:$0xff]
      %v270 = vld [vmem:[%s223 + $0xb0] sm:$0xff]
      %v271 = vld [vmem:[%s223 + $0xb8] sm:$0xff]
      %v272 = vld [vmem:[%s223 + $0xc0] sm:$0xff]
      %v273 = vld [vmem:[%s223 + $0xc8] sm:$0xff]
      %v274 = vld [vmem:[%s223 + $0xd0] sm:$0xff]
      %v275 = vld [vmem:[%s223 + $0xd8] sm:$0xff]
      %v276 = vld [vmem:[%s223 + $0xe0] sm:$0xff]
      %v277 = vld [vmem:[%s223 + $0xe8] sm:$0xff]
      %v278 = vld [vmem:[%s223 + $0xf0] sm:$0xff]
      %v279 = vld [vmem:[%s223 + $0xf8] sm:$0xff]
      %v280 = vld [vmem:[%s223 + $0x100] sm:$0xff]
      %v281 = vld [vmem:[%s223 + $0x108] sm:$0xff]
      %v282 = vld [vmem:[%s223 + $0x110] sm:$0xff]
      %v283 = vld [vmem:[%s223 + $0x118] sm:$0xff]
      %v284 = vld [vmem:[%s223 + $0x120] sm:$0xff]
      %v285 = vld [vmem:[%s223 + $0x128] sm:$0xff]
      %v286 = vld [vmem:[%s223 + $0x130] sm:$0xff]
      %v287 = vld [vmem:[%s223 + $0x138] sm:$0xff]
      %v288 = vld [vmem:[%s223 + $0x140] sm:$0xff]
      %v289 = vld [vmem:[%s223 + $0x148] sm:$0xff]
      %v290 = vld [vmem:[%s223 + $0x150] sm:$0xff]
      %v291 = vld [vmem:[%s223 + $0x158] sm:$0xff]
      %v292 = vld [vmem:[%s223 + $0x160] sm:$0xff]
      %v293 = vld [vmem:[%s223 + $0x168] sm:$0xff]
      %v294 = vld [vmem:[%s223 + $0x170] sm:$0xff]
      %v295 = vld [vmem:[%s223 + $0x178] sm:$0xff]
      %v296 = vld [vmem:[%s223 + $0x180] sm:$0xff]
      %v297 = vld [vmem:[%s223 + $0x188] sm:$0xff]
      %v298 = vld [vmem:[%s223 + $0x190] sm:$0xff]
      %v299 = vld [vmem:[%s223 + $0x198] sm:$0xff]
      %v300 = vld [vmem:[%s223 + $0x1a0] sm:$0xff]
      %v301 = vld [vmem:[%s223 + $0x1a8] sm:$0xff]
      %v302 = vld [vmem:[%s223 + $0x1b0] sm:$0xff]
      %v303 = vld [vmem:[%s223 + $0x1b8] sm:$0xff]
      %v304 = vld [vmem:[%s223 + $0x1c0] sm:$0xff]
      %v305 = vld [vmem:[%s223 + $0x1c8] sm:$0xff]
      %v306 = vld [vmem:[%s223 + $0x1d0] sm:$0xff]
      %v307 = vld [vmem:[%s223 + $0x1d8] sm:$0xff]
      %v308 = vld [vmem:[%s223 + $0x1e0] sm:$0xff]
      %v309 = vld [vmem:[%s223 + $0x1e8] sm:$0xff]
      %v310 = vld [vmem:[%s223 + $0x1f0] sm:$0xff]
      %v311 = vld [vmem:[%s223 + $0x1f8] sm:$0xff]
      %v313 = vcombine.high %v247, %v247
      %v315 = vunpack.c.l.s4 1983009808
      %v316 = vunpack.c.0.s8 %v315
      %v317 = vlaneseq
      %v318 = vshrl.u32 %v317, 7
      %v319 = vsub.s32 %v316, %v318
      %v320 = vrot.slane %v247, %v319
      %v322 = vunpack.c.l.s4 1983009808
      %v323 = vunpack.c.0.s8 %v322
      %v324 = vlaneseq
      %v325 = vshrl.u32 %v324, 7
      %v326 = vsub.s32 %v323, %v325
      %v327 = vrot.slane %v313, %v326
      %v328 = vcombine.high %v320, %v320
      %v329 = vcombine.high %v327, %v327
      %v398 = vunpack.c.l.b16 %v248
      %v399 = vunpack.c.h.b16 %v248
      %v400 = vunpack.c.l.b16 %v249
      %v401 = vunpack.c.h.b16 %v249
      %v402 = vunpack.c.l.b16 %v250
      %v403 = vunpack.c.h.b16 %v250
      %v404 = vunpack.c.l.b16 %v251
      %v405 = vunpack.c.h.b16 %v251
      %v406 = vunpack.c.l.b16 %v252
      %v407 = vunpack.c.h.b16 %v252
      %v408 = vunpack.c.l.b16 %v253
      %v409 = vunpack.c.h.b16 %v253
      %v410 = vunpack.c.l.b16 %v254
      %v411 = vunpack.c.h.b16 %v254
      %v412 = vunpack.c.l.b16 %v255
      %v413 = vunpack.c.h.b16 %v255
      %v414 = vunpack.c.l.b16 %v256
      %v415 = vunpack.c.h.b16 %v256
      %v416 = vunpack.c.l.b16 %v257
      %v417 = vunpack.c.h.b16 %v257
      %v418 = vunpack.c.l.b16 %v258
      %v419 = vunpack.c.h.b16 %v258
      %v420 = vunpack.c.l.b16 %v259
      %v421 = vunpack.c.h.b16 %v259
      %v422 = vunpack.c.l.b16 %v260
      %v423 = vunpack.c.h.b16 %v260
      %v424 = vunpack.c.l.b16 %v261
      %v425 = vunpack.c.h.b16 %v261
      %v426 = vunpack.c.l.b16 %v262
      %v427 = vunpack.c.h.b16 %v262
      %v428 = vunpack.c.l.b16 %v263
      %v429 = vunpack.c.h.b16 %v263
      %v430 = vunpack.c.l.b16 %v264
      %v431 = vunpack.c.h.b16 %v264
      %v432 = vunpack.c.l.b16 %v265
      %v433 = vunpack.c.h.b16 %v265
      %v434 = vunpack.c.l.b16 %v266
      %v435 = vunpack.c.h.b16 %v266
      %v436 = vunpack.c.l.b16 %v267
      %v437 = vunpack.c.h.b16 %v267
      %v438 = vunpack.c.l.b16 %v268
      %v439 = vunpack.c.h.b16 %v268
      %v440 = vunpack.c.l.b16 %v269
      %v441 = vunpack.c.h.b16 %v269
      %v442 = vunpack.c.l.b16 %v270
      %v443 = vunpack.c.h.b16 %v270
      %v444 = vunpack.c.l.b16 %v271
      %v445 = vunpack.c.h.b16 %v271
      %v446 = vunpack.c.l.b16 %v272
      %v447 = vunpack.c.h.b16 %v272
      %v448 = vunpack.c.l.b16 %v273
      %v449 = vunpack.c.h.b16 %v273
      %v450 = vunpack.c.l.b16 %v274
      %v451 = vunpack.c.h.b16 %v274
      %v452 = vunpack.c.l.b16 %v275
      %v453 = vunpack.c.h.b16 %v275
      %v454 = vunpack.c.l.b16 %v276
      %v455 = vunpack.c.h.b16 %v276
      %v456 = vunpack.c.l.b16 %v277
      %v457 = vunpack.c.h.b16 %v277
      %v458 = vunpack.c.l.b16 %v278
      %v459 = vunpack.c.h.b16 %v278
      %v460 = vunpack.c.l.b16 %v279
      %v461 = vunpack.c.h.b16 %v279
      %v462 = vunpack.c.l.b16 %v280
      %v463 = vunpack.c.h.b16 %v280
      %v464 = vunpack.c.l.b16 %v281
      %v465 = vunpack.c.h.b16 %v281
      %v466 = vunpack.c.l.b16 %v282
      %v467 = vunpack.c.h.b16 %v282
      %v468 = vunpack.c.l.b16 %v283
      %v469 = vunpack.c.h.b16 %v283
      %v470 = vunpack.c.l.b16 %v284
      %v471 = vunpack.c.h.b16 %v284
      %v472 = vunpack.c.l.b16 %v285
      %v473 = vunpack.c.h.b16 %v285
      %v474 = vunpack.c.l.b16 %v286
      %v475 = vunpack.c.h.b16 %v286
      %v476 = vunpack.c.l.b16 %v287
      %v477 = vunpack.c.h.b16 %v287
      %v478 = vunpack.c.l.b16 %v288
      %v479 = vunpack.c.h.b16 %v288
      %v480 = vunpack.c.l.b16 %v289
      %v481 = vunpack.c.h.b16 %v289
      %v482 = vunpack.c.l.b16 %v290
      %v483 = vunpack.c.h.b16 %v290
      %v484 = vunpack.c.l.b16 %v291
      %v485 = vunpack.c.h.b16 %v291
      %v486 = vunpack.c.l.b16 %v292
      %v487 = vunpack.c.h.b16 %v292
      %v488 = vunpack.c.l.b16 %v293
      %v489 = vunpack.c.h.b16 %v293
      %v490 = vunpack.c.l.b16 %v294
      %v491 = vunpack.c.h.b16 %v294
      %v492 = vunpack.c.l.b16 %v295
      %v493 = vunpack.c.h.b16 %v295
      %v494 = vunpack.c.l.b16 %v296
      %v495 = vunpack.c.h.b16 %v296
      %v496 = vunpack.c.l.b16 %v297
      %v497 = vunpack.c.h.b16 %v297
      %v498 = vunpack.c.l.b16 %v298
      %v499 = vunpack.c.h.b16 %v298
      %v500 = vunpack.c.l.b16 %v299
      %v501 = vunpack.c.h.b16 %v299
      %v502 = vunpack.c.l.b16 %v300
      %v503 = vunpack.c.h.b16 %v300
      %v504 = vunpack.c.l.b16 %v301
      %v505 = vunpack.c.h.b16 %v301
      %v506 = vunpack.c.l.b16 %v302
      %v507 = vunpack.c.h.b16 %v302
      %v508 = vunpack.c.l.b16 %v303
      %v509 = vunpack.c.h.b16 %v303
      %v510 = vunpack.c.l.b16 %v304
      %v511 = vunpack.c.h.b16 %v304
      %v512 = vunpack.c.l.b16 %v305
      %v513 = vunpack.c.h.b16 %v305
      %v514 = vunpack.c.l.b16 %v306
      %v515 = vunpack.c.h.b16 %v306
      %v516 = vunpack.c.l.b16 %v307
      %v517 = vunpack.c.h.b16 %v307
      %v518 = vunpack.c.l.b16 %v308
      %v519 = vunpack.c.h.b16 %v308
      %v520 = vunpack.c.l.b16 %v309
      %v521 = vunpack.c.h.b16 %v309
      %v522 = vunpack.c.l.b16 %v310
      %v523 = vunpack.c.h.b16 %v310
      %v524 = vunpack.c.l.b16 %v311
      %v525 = vunpack.c.h.b16 %v311
      %v526 = vpack.c.b16 %v400, %v398
      %v527 = vpack.c.b16 %v401, %v399
      %v528 = vpack.c.b16 %v404, %v402
      %v529 = vpack.c.b16 %v405, %v403
      %v530 = vpack.c.b16 %v408, %v406
      %v531 = vpack.c.b16 %v409, %v407
      %v532 = vpack.c.b16 %v412, %v410
      %v533 = vpack.c.b16 %v413, %v411
      %v534 = vpack.c.b16 %v416, %v414
      %v535 = vpack.c.b16 %v417, %v415
      %v536 = vpack.c.b16 %v420, %v418
      %v537 = vpack.c.b16 %v421, %v419
      %v538 = vpack.c.b16 %v424, %v422
      %v539 = vpack.c.b16 %v425, %v423
      %v540 = vpack.c.b16 %v428, %v426
      %v541 = vpack.c.b16 %v429, %v427
      %v542 = vpack.c.b16 %v432, %v430
      %v543 = vpack.c.b16 %v433, %v431
      %v544 = vpack.c.b16 %v436, %v434
      %v545 = vpack.c.b16 %v437, %v435
      %v546 = vpack.c.b16 %v440, %v438
      %v547 = vpack.c.b16 %v441, %v439
      %v548 = vpack.c.b16 %v444, %v442
      %v549 = vpack.c.b16 %v445, %v443
      %v550 = vpack.c.b16 %v448, %v446
      %v551 = vpack.c.b16 %v449, %v447
      %v552 = vpack.c.b16 %v452, %v450
      %v553 = vpack.c.b16 %v453, %v451
      %v554 = vpack.c.b16 %v456, %v454
      %v555 = vpack.c.b16 %v457, %v455
      %v556 = vpack.c.b16 %v460, %v458
      %v557 = vpack.c.b16 %v461, %v459
      %v558 = vpack.c.b16 %v464, %v462
      %v559 = vpack.c.b16 %v465, %v463
      %v560 = vpack.c.b16 %v468, %v466
      %v561 = vpack.c.b16 %v469, %v467
      %v562 = vpack.c.b16 %v472, %v470
      %v563 = vpack.c.b16 %v473, %v471
      %v564 = vpack.c.b16 %v476, %v474
      %v565 = vpack.c.b16 %v477, %v475
      %v566 = vpack.c.b16 %v480, %v478
      %v567 = vpack.c.b16 %v481, %v479
      %v568 = vpack.c.b16 %v484, %v482
      %v569 = vpack.c.b16 %v485, %v483
      %v570 = vpack.c.b16 %v488, %v486
      %v571 = vpack.c.b16 %v489, %v487
      %v572 = vpack.c.b16 %v492, %v490
      %v573 = vpack.c.b16 %v493, %v491
      %v574 = vpack.c.b16 %v496, %v494
      %v575 = vpack.c.b16 %v497, %v495
      %v576 = vpack.c.b16 %v500, %v498
      %v577 = vpack.c.b16 %v501, %v499
      %v578 = vpack.c.b16 %v504, %v502
      %v579 = vpack.c.b16 %v505, %v503
      %v580 = vpack.c.b16 %v508, %v506
      %v581 = vpack.c.b16 %v509, %v507
      %v582 = vpack.c.b16 %v512, %v510
      %v583 = vpack.c.b16 %v513, %v511
      %v584 = vpack.c.b16 %v516, %v514
      %v585 = vpack.c.b16 %v517, %v515
      %v586 = vpack.c.b16 %v520, %v518
      %v587 = vpack.c.b16 %v521, %v519
      %v588 = vpack.c.b16 %v524, %v522
      %v589 = vpack.c.b16 %v525, %v523
      %654 = vmatprep.subr.bf16.mxu0 %v527
      %655 = vmatpush1.bf16.msra.mxu0 %v526
      %656 = vmatprep.subr.bf16.mxu0 %v529
      %657 = vmatpush1.bf16.msra.mxu0 %v528
      %658 = vmatprep.subr.bf16.mxu0 %v531
      %659 = vmatpush1.bf16.msra.mxu0 %v530
      %660 = vmatprep.subr.bf16.mxu0 %v533
      %661 = vmatpush1.bf16.msra.mxu0 %v532
      %662 = vmatprep.subr.bf16.mxu0 %v535
      %663 = vmatpush1.bf16.msra.mxu0 %v534
      %664 = vmatprep.subr.bf16.mxu0 %v537
      %665 = vmatpush1.bf16.msra.mxu0 %v536
      %666 = vmatprep.subr.bf16.mxu0 %v539
      %667 = vmatpush1.bf16.msra.mxu0 %v538
      %668 = vmatprep.subr.bf16.mxu0 %v541
      %669 = vmatpush1.bf16.msra.mxu0 %v540
      %670 = vmatprep.subr.bf16.mxu0 %v543
      %671 = vmatpush1.bf16.msra.mxu0 %v542
      %672 = vmatprep.subr.bf16.mxu0 %v545
      %673 = vmatpush1.bf16.msra.mxu0 %v544
      %674 = vmatprep.subr.bf16.mxu0 %v547
      %675 = vmatpush1.bf16.msra.mxu0 %v546
      %676 = vmatprep.subr.bf16.mxu0 %v549
      %677 = vmatpush1.bf16.msra.mxu0 %v548
      %678 = vmatprep.subr.bf16.mxu0 %v551
      %679 = vmatpush1.bf16.msra.mxu0 %v550
      %680 = vmatprep.subr.bf16.mxu0 %v553
      %681 = vmatpush1.bf16.msra.mxu0 %v552
      %682 = vmatprep.subr.bf16.mxu0 %v555
      %683 = vmatpush1.bf16.msra.mxu0 %v554
      %684 = vmatprep.subr.bf16.mxu0 %v557
      %685 = vmatpush1.bf16.msra.mxu0 %v556
      %686 = vmatprep.mubr.bf16.mxu0 %v328
      %687 = vmatmul.mubr.bf16.gmra.mrb[0].mxu0 %v320
      %v688 = vpop.f32.mrb[0].mxu0
      %v689 = vadd.f32 0.0, %v688
      %v690 = vpop.f32.mrb[0].mxu0
      %v691 = vadd.f32 0.0, %v690
      %v692 = vpop.f32.mrb[0].mxu0
      %v693 = vpop.f32.mrb[0].mxu0
      %694 = vdwg.mxu0
      %695 = vmatprep.subr.bf16.mxu0 %v559
      %696 = vmatpush1.bf16.msra.mxu0 %v558
      %697 = vmatprep.subr.bf16.mxu0 %v561
      %698 = vmatpush1.bf16.msra.mxu0 %v560
      %699 = vmatprep.subr.bf16.mxu0 %v563
      %700 = vmatpush1.bf16.msra.mxu0 %v562
      %701 = vmatprep.subr.bf16.mxu0 %v565
      %702 = vmatpush1.bf16.msra.mxu0 %v564
      %703 = vmatprep.subr.bf16.mxu0 %v567
      %704 = vmatpush1.bf16.msra.mxu0 %v566
      %705 = vmatprep.subr.bf16.mxu0 %v569
      %706 = vmatpush1.bf16.msra.mxu0 %v568
      %707 = vmatprep.subr.bf16.mxu0 %v571
      %708 = vmatpush1.bf16.msra.mxu0 %v570
      %709 = vmatprep.subr.bf16.mxu0 %v573
      %710 = vmatpush1.bf16.msra.mxu0 %v572
      %711 = vmatprep.subr.bf16.mxu0 %v575
      %712 = vmatpush1.bf16.msra.mxu0 %v574
      %713 = vmatprep.subr.bf16.mxu0 %v577
      %714 = vmatpush1.bf16.msra.mxu0 %v576
      %715 = vmatprep.subr.bf16.mxu0 %v579
      %716 = vmatpush1.bf16.msra.mxu0 %v578
      %717 = vmatprep.subr.bf16.mxu0 %v581
      %718 = vmatpush1.bf16.msra.mxu0 %v580
      %719 = vmatprep.subr.bf16.mxu0 %v583
      %720 = vmatpush1.bf16.msra.mxu0 %v582
      %721 = vmatprep.subr.bf16.mxu0 %v585
      %722 = vmatpush1.bf16.msra.mxu0 %v584
      %723 = vmatprep.subr.bf16.mxu0 %v587
      %724 = vmatpush1.bf16.msra.mxu0 %v586
      %725 = vmatprep.subr.bf16.mxu0 %v589
      %726 = vmatpush1.bf16.msra.mxu0 %v588
      %727 = vmatprep.mubr.bf16.mxu0 %v329
      %728 = vmatmul.mubr.bf16.gmra.mrb[0].mxu0 %v327
      %v729 = vpop.f32.mrb[0].mxu0
      %v730 = vadd.f32 %v689, %v729
      %v731 = vpop.f32.mrb[0].mxu0
      %v732 = vadd.f32 %v691, %v731
      %v733 = vpop.f32.mrb[0].mxu0
      %v734 = vpop.f32.mrb[0].mxu0
      %735 = vdwg.mxu0
      %v738 = vcombine.low %v730, %v732
      %v740 = vadd.f32 %v242, %v738
      %741 = vst [vmem:[%s234] sm:$0x77] %v740
      // Predicated region
      $region37: #{vae_forward.29} parent=31 // pred_check
        %p742 = pneg %p236
      $region38: #{vae_forward.29} parent=31 // pred_check_branch
        %744 = sbr.rel (%p742) target = $region40
      $region39: #{vae_forward.29} parent=31 // pred_region
        %v745 = vld [vmem:[%s234] sm:$0x77]
        %v746 = vld [vmem:[%s1] sm:$0x7]
        %748 = vset.pattern.permute.xlu0 0
        %749 = vperm.xlu0 %748, %v746
        %v750 = vpop.permute.xlu0 %749
        %v752 = vunpack.c.l.s4 839922192
        %v753 = vunpack.c.0.s8 %v752
        %v754 = vlaneseq
        %v755 = vshrl.u32 %v754, 7
        %v756 = vsub.s32 %v753, %v755
        %v757 = vrot.slane %v750, %v756
        %v759 = vadd.f32 %v745, %v757
        %v760 = vtanh.pop %v759
        %761 = vst [vmem:[%s234] sm:$0x77] %v760
      $region40: #{vae_forward.29} parent=31 // pred_fallthru
        _
      %s762 = smul.u32 2, %s20
      %p763 = scmp.lt.s32.totalorder %s19, 1
      %s764 = scalar_select %p763, %s19, 1
      %p765 = scmp.lt.s32.totalorder %s762, 1
      %s766 = scalar_select %p765, %s762, 1
      %s767 = smul.addr %s764, 2
      %s768 = sadd.s32 %s766, %s767
      %s769 = smul.addr %s768, 4
      %s770 = scalar_lea.vmem %s3, %s769
      // Predicated region
      $region41: #{vae_forward.29} parent=31 // pred_check
        %p771 = pneg %p125
      $region42: #{vae_forward.29} parent=31 // pred_check_branch
        %773 = sbr.rel (%p771) target = $region44
      $region43: #{vae_forward.29} parent=31 // pred_region
        %s774 = smul.u32 2, %s20
      $region44: #{vae_forward.29} parent=31 // pred_fallthru
        _
    $region32: #{vae_forward.29} parent=5 // pred_fallthru
      _
    %p775 = scmp.le.s32.totalorder 2, %s9
    // Predicated region
    $region45: #{vae_forward.29} parent=5 // pred_check
      %p776 = pneg %p775
    $region46: #{vae_forward.29} parent=5 // pred_check_branch
      %778 = sbr.rel (%p776) target = $region48
    $region47: #{vae_forward.29} parent=5 // pred_region
      %s779 = ssub.s32 %s9, 2
      // Predicated region
      $region49: #{vae_forward.29} parent=47 // pred_check
        %p780 = pneg %p131
      $region50: #{vae_forward.29} parent=47 // pred_check_branch
        %782 = sbr.rel (%p780) target = $region52
      $region51: #{vae_forward.29} parent=47 // pred_region
        %s783 = smul.u32 2, %s23
        %p784 = scmp.lt.s32.totalorder %s22, 1
        %s785 = scalar_select %p784, %s22, 1
        %p786 = scmp.lt.s32.totalorder %s783, 1
        %s787 = scalar_select %p786, %s783, 1
        %s788 = smul.addr %s785, 2
        %s789 = sadd.s32 %s787, %s788
        %s790 = smul.addr %s789, 4
        %s791 = scalar_lea.vmem %s3, %s790
      $region52: #{vae_forward.29} parent=47 // pred_fallthru
        _
    $region48: #{vae_forward.29} parent=5 // pred_fallthru
      _
  $region6: #{vae_forward.29} parent=0 // loop_footer
    %s13 = sadd.s32 1, %s9
  $region7: #{vae_forward.29} parent=0 // loop_footer_branch
    %8 = sbr.rel target = $region3
  $region8: #{vae_forward.29} parent=0 // loop_exit
    _

</llo_original>
